<compile_context>
chip_gen: v6e
topology: v6e:2x2x1
jax: 0.10.0
libtpu: 0.0.40
codegen_flags: <defaults>
</compile_context>

<pallas_src>
import math
import functools

import jax
import jax.numpy as jnp
from jax.experimental import pallas as pl
from jax.experimental.pallas import tpu as pltpu


# ----------------------- fused decoder-stack kernel -------------------------

def _decoder_stack_kernel(x_ref, mem_ref, mbias_ref,
                          sa_win_ref, sa_bin_ref, sa_wo_ref,
                          ca_wq_ref, ca_bq_ref, ca_wkv_ref, ca_bkv_ref, ca_wo_ref,
                          ff_w1_ref, ff_b1_ref, ff_w2_ref, vec_ref,
                          fc_w_ref, fc_b_ref,
                          dec_ref, logits_ref,
                          x_s,
                          *, nhead, dh, compute_dtype, approx_recip, use_mem_bias):
    layer = pl.program_id(1)
    n_layers = pl.num_programs(1)
    d = nhead * dh
    scale = 1.0 / math.sqrt(dh)

    # load the embedded target block into the persistent activation scratch once per batch
    @pl.when(layer == 0)
    def _():
        x_s[...] = x_ref[0]

    x = x_s[...]                       # (T, D) f32 running activation
    t = x.shape[0]
    mem = mem_ref[0]                   # (S, D)

    def c(a):                          # MXU-operand cast (bf16 on v6e/v7x perf config)
        return a.astype(compute_dtype)

    def softmax(sc):                   # f32 elementwise math (v5e-friendly)
        sc = sc - jnp.max(sc, axis=-1, keepdims=True)
        p = jnp.exp(sc)
        den = jnp.sum(p, axis=-1, keepdims=True)
        if approx_recip:
            return p * pl.reciprocal(den, approx=True)   # EUP slot, not VPU divide
        return p / den

    def layer_norm(y, g, b):
        mu = jnp.mean(y, axis=-1, keepdims=True)
        cen = y - mu
        var = jnp.mean(cen * cen, axis=-1, keepdims=True)
        return cen * jax.lax.rsqrt(var + 1e-5) * g + b

    # packed per-layer vectors: [sa_bo, ca_bo, ff_b2, ln1_g, ln1_b, ln2_g, ln2_b, ln3_g, ln3_b]
    vec = vec_ref[0]                   # (9, D) f32
    sa_bo, ca_bo, ff_b2 = vec[0:1], vec[1:2], vec[2:3]
    ln1_g, ln1_b = vec[3:4], vec[4:5]
    ln2_g, ln2_b = vec[5:6], vec[6:7]
    ln3_g, ln3_b = vec[7:8], vec[8:9]

    # ---- self-attention: fused QKV proj, in-kernel causal mask, out-proj accumulated per head
    qkv = jnp.dot(c(x), sa_win_ref[0], preferred_element_type=jnp.float32) + sa_bin_ref[0]
    row = jax.lax.broadcasted_iota(jnp.int32, (t, t), 0)
    col = jax.lax.broadcasted_iota(jnp.int32, (t, t), 1)
    causal_bias = jnp.where(col > row, jnp.float32(-1e9), jnp.float32(0.0))
    sa_wo = sa_wo_ref[0]
    acc = jnp.zeros((t, d), jnp.float32)
    for h in range(nhead):
        q_h = qkv[:, h * dh:(h + 1) * dh]
        k_h = qkv[:, d + h * dh:d + (h + 1) * dh]
        v_h = qkv[:, 2 * d + h * dh:2 * d + (h + 1) * dh]
        s_h = jax.lax.dot_general(c(q_h), c(k_h), (((1,), (1,)), ((), ())),
                                  preferred_element_type=jnp.float32) * scale
        p_h = softmax(s_h + causal_bias)
        ctx = jnp.dot(c(p_h), c(v_h), preferred_element_type=jnp.float32)
        acc = acc + jnp.dot(c(ctx), sa_wo[h * dh:(h + 1) * dh, :],
                            preferred_element_type=jnp.float32)
    x = layer_norm(x + acc + sa_bo, ln1_g, ln1_b)

    # ---- cross-attention: fused Q / KV proj, additive key-padding bias (finite -1e9)
    q = jnp.dot(c(x), ca_wq_ref[0], preferred_element_type=jnp.float32) + ca_bq_ref[0]
    kv = jnp.dot(c(mem), ca_wkv_ref[0], preferred_element_type=jnp.float32) + ca_bkv_ref[0]
    ca_wo = ca_wo_ref[0]
    if use_mem_bias:
        mbias = mbias_ref[0]           # (1, S)
    acc = jnp.zeros((t, d), jnp.float32)
    for h in range(nhead):
        q_h = q[:, h * dh:(h + 1) * dh]
        k_h = kv[:, h * dh:(h + 1) * dh]
        v_h = kv[:, d + h * dh:d + (h + 1) * dh]
        s_h = jax.lax.dot_general(c(q_h), c(k_h), (((1,), (1,)), ((), ())),
                                  preferred_element_type=jnp.float32) * scale
        if use_mem_bias:
            s_h = s_h + mbias
        p_h = softmax(s_h)
        ctx = jnp.dot(c(p_h), c(v_h), preferred_element_type=jnp.float32)
        acc = acc + jnp.dot(c(ctx), ca_wo[h * dh:(h + 1) * dh, :],
                            preferred_element_type=jnp.float32)
    x = layer_norm(x + acc + ca_bo, ln2_g, ln2_b)

    # ---- FFN (linear -> relu -> linear) + residual + LayerNorm
    h1 = jnp.maximum(jnp.dot(c(x), ff_w1_ref[0], preferred_element_type=jnp.float32)
                     + ff_b1_ref[0], 0.0)
    x = layer_norm(x + jnp.dot(c(h1), ff_w2_ref[0], preferred_element_type=jnp.float32)
                   + ff_b2, ln3_g, ln3_b)

    x_s[...] = x

    # ---- finalize: decoder output + lane-dense padded logits, written once per batch
    @pl.when(layer == n_layers - 1)
    def _():
        dec_ref[0] = x.astype(dec_ref.dtype)
        logits_ref[0] = (jnp.dot(c(x), fc_w_ref[...], preferred_element_type=jnp.float32)
                         + fc_b_ref[...]).astype(logits_ref.dtype)


# ------------------------------ forward (glue) -------------------------------

def _positional_encoding(t, d):
    assert d % 2 == 0, "d_model must be even for the sinusoidal PE table"
    pos = jnp.arange(t, dtype=jnp.float32)[:, None]
    div = jnp.exp(jnp.arange(0, d, 2, dtype=jnp.float32) * (-math.log(10000.0) / d))
    pe = jnp.zeros((t, d), jnp.float32)
    pe = pe.at[:, 0::2].set(jnp.sin(pos * div))
    pe = pe.at[:, 1::2].set(jnp.cos(pos * div))
    return pe


def phoneme_decoder_forward(params, tgt_tokens, memory, nhead,
                            memory_key_padding_mask=None, approx_recip=True):
    b, t = tgt_tokens.shape
    _, s, d = memory.shape
    vocab = params['emb'].shape[0]
    vpad = params['fc_w'].shape[1]
    n_layers = params['sa_w_in'].shape[0]
    ff = params['ff_w1'].shape[2]
    dh = d // nhead
    cdt = params['sa_w_in'].dtype       # compute dtype baked into the prepared weights

    # TODO(synk): embedding gather + PE table build stay in plain JAX (tiny gather glue);
    # dropout layers are identity in eval / deterministic mode.
    x = (params['emb'][tgt_tokens] * math.sqrt(d)
         + _positional_encoding(t, d)[None]).astype(jnp.float32)

    use_mem_bias = memory_key_padding_mask is not None
    if use_mem_bias:
        mem_bias = jnp.where(memory_key_padding_mask, -1e9, 0.0
                             ).astype(jnp.float32)[:, None, :]
        bias_map = lambda i, l: (i, 0, 0)
    else:
        mem_bias = jnp.zeros((1, 1, s), jnp.float32)     # never read in-kernel (static flag)
        bias_map = lambda i, l: (0, 0, 0)

    kern = functools.partial(_decoder_stack_kernel, nhead=nhead, dh=dh,
                             compute_dtype=cdt, approx_recip=approx_recip,
                             use_mem_bias=use_mem_bias)

    wsz = lambda k: int(params[k].size) * int(params[k].dtype.itemsize)
    layer_flops = (2 * t * d * 3 * d + 2 * t * d * d + 4 * t * t * d          # self-attn
                   + 2 * t * d * d + 2 * s * d * 2 * d + 4 * t * s * d + 2 * t * d * d  # cross
                   + 4 * t * d * ff)                                          # ffn
    cost = pl.CostEstimate(
        flops=int(b * (n_layers * layer_flops + 2 * t * d * vpad)),
        transcendentals=int(b * n_layers * nhead * (t * t + t * s)),
        bytes_accessed=int(4 * (b * t * d * 2 + b * s * d + b * t * vpad)
                           + b * sum(wsz(k) for k in (
                               'sa_w_in', 'sa_b_in', 'sa_wo', 'ca_wq', 'ca_bq', 'ca_wkv',
                               'ca_bkv', 'ca_wo', 'ff_w1', 'ff_b1', 'ff_w2', 'vec',
                               'fc_w', 'fc_b'))))

    lmap = lambda i, l: (l, 0, 0)
    dec_out, logits = pl.pallas_call(
        kern,
        out_shape=(jax.ShapeDtypeStruct((b, t, d), jnp.float32),
                   jax.ShapeDtypeStruct((b, t, vpad), jnp.float32)),
        grid=(b, n_layers),
        in_specs=[
            pl.BlockSpec((1, t, d), lambda i, l: (i, 0, 0)),     # embedded tgt
            pl.BlockSpec((1, s, d), lambda i, l: (i, 0, 0)),     # memory
            pl.BlockSpec((1, 1, s), bias_map),                   # key-padding bias
            pl.BlockSpec((1, d, 3 * d), lmap),                   # sa_w_in
            pl.BlockSpec((1, 1, 3 * d), lmap),                   # sa_b_in
            pl.BlockSpec((1, d, d), lmap),                       # sa_wo
            pl.BlockSpec((1, d, d), lmap),                       # ca_wq
            pl.BlockSpec((1, 1, d), lmap),                       # ca_bq
            pl.BlockSpec((1, d, 2 * d), lmap),                   # ca_wkv
            pl.BlockSpec((1, 1, 2 * d), lmap),                   # ca_bkv
            pl.BlockSpec((1, d, d), lmap),                       # ca_wo
            pl.BlockSpec((1, d, ff), lmap),                      # ff_w1
            pl.BlockSpec((1, 1, ff), lmap),                      # ff_b1
            pl.BlockSpec((1, ff, d), lmap),                      # ff_w2
            pl.BlockSpec((1, 9, d), lmap),                       # packed biases + LN params
            pl.BlockSpec((d, vpad), lambda i, l: (0, 0)),        # fc_out weight (lane-padded)
            pl.BlockSpec((1, vpad), lambda i, l: (0, 0)),        # fc_out bias
        ],
        out_specs=(pl.BlockSpec((1, t, d), lambda i, l: (i, 0, 0)),
                   pl.BlockSpec((1, t, vpad), lambda i, l: (i, 0, 0))),
        scratch_shapes=[pltpu.VMEM((t, d), jnp.float32)],
        compiler_params=pltpu.CompilerParams(
            dimension_semantics=("parallel", "arbitrary")),
        cost_estimate=cost,
    )(x, memory.astype(jnp.float32), mem_bias,
      params['sa_w_in'], params['sa_b_in'], params['sa_wo'],
      params['ca_wq'], params['ca_bq'], params['ca_wkv'], params['ca_bkv'], params['ca_wo'],
      params['ff_w1'], params['ff_b1'], params['ff_w2'], params['vec'],
      params['fc_w'], params['fc_b'])

    return logits[:, :, :vocab], dec_out


# --------------------------- deterministic init ------------------------------

def _xavier_uniform(key, shape):
    fan_out, fan_in = shape
    limit = math.sqrt(6.0 / (fan_in + fan_out))
    return jax.random.uniform(key, shape, jnp.float32, -limit, limit)


def init_raw_params(key, vocab, d_model, nhead, dim_ff, n_layers):
    keys = jax.random.split(key, 2 + n_layers)
    params = {
        'emb': 0.1 * jax.random.normal(keys[0], (vocab, d_model), jnp.float32),
        'fc_out_w': (math.sqrt(2.0 / vocab)
                     * jax.random.normal(keys[1], (vocab, d_model), jnp.float32)),
        'fc_out_b': jnp.zeros((vocab,), jnp.float32),
    }
    layers = []
    for l in range(n_layers):
        lk = jax.random.split(keys[2 + l], 6)
        layers.append(dict(
            sa_in_w=_xavier_uniform(lk[0], (3 * d_model, d_model)),
            sa_in_b=jnp.zeros((3 * d_model,), jnp.float32),
            sa_out_w=_xavier_uniform(lk[1], (d_model, d_model)),
            sa_out_b=jnp.zeros((d_model,), jnp.float32),
            ca_in_w=_xavier_uniform(lk[2], (3 * d_model, d_model)),
            ca_in_b=jnp.zeros((3 * d_model,), jnp.float32),
            ca_out_w=_xavier_uniform(lk[3], (d_model, d_model)),
            ca_out_b=jnp.zeros((d_model,), jnp.float32),
            ff_w1=_xavier_uniform(lk[4], (dim_ff, d_model)),
            ff_b1=jnp.zeros((dim_ff,), jnp.float32),
            ff_w2=_xavier_uniform(lk[5], (d_model, dim_ff)),
            ff_b2=jnp.zeros((d_model,), jnp.float32),
            ln1_g=jnp.ones((d_model,), jnp.float32), ln1_b=jnp.zeros((d_model,), jnp.float32),
            ln2_g=jnp.ones((d_model,), jnp.float32), ln2_b=jnp.zeros((d_model,), jnp.float32),
            ln3_g=jnp.ones((d_model,), jnp.float32), ln3_b=jnp.zeros((d_model,), jnp.float32),
        ))
    params['layers'] = layers
    return params


def prepare_params(raw, d_model, vocab, compute_dtype=jnp.bfloat16):
    """One-time weight prep: transpose to (K, N), stack layers along a leading axis,
    pack small (D,)-vectors, lane-pad fc_out, cast matmul weights to the MXU dtype."""
    d = d_model
    vpad = ((vocab + 127) // 128) * 128
    fc_w = jnp.zeros((d, vpad), jnp.float32).at[:, :vocab].set(raw['fc_out_w'].T)
    fc_b = jnp.zeros((1, vpad), jnp.float32).at[0, :vocab].set(raw['fc_out_b'])

    def stack(fn):
        return jnp.stack([fn(p) for p in raw['layers']], axis=0)

    return {
        'emb': raw['emb'],
        'fc_w': fc_w.astype(compute_dtype),
        'fc_b': fc_b,
        'sa_w_in': stack(lambda p: p['sa_in_w'].T).astype(compute_dtype),      # (L, D, 3D)
        'sa_b_in': stack(lambda p: p['sa_in_b'].reshape(1, -1)),               # (L, 1, 3D)
        'sa_wo':   stack(lambda p: p['sa_out_w'].T).astype(compute_dtype),     # (L, D, D)
        'ca_wq':   stack(lambda p: p['ca_in_w'][:d].T).astype(compute_dtype),  # (L, D, D)
        'ca_bq':   stack(lambda p: p['ca_in_b'][:d].reshape(1, -1)),           # (L, 1, D)
        'ca_wkv':  stack(lambda p: p['ca_in_w'][d:].T).astype(compute_dtype),  # (L, D, 2D)
        'ca_bkv':  stack(lambda p: p['ca_in_b'][d:].reshape(1, -1)),           # (L, 1, 2D)
        'ca_wo':   stack(lambda p: p['ca_out_w'].T).astype(compute_dtype),     # (L, D, D)
        'ff_w1':   stack(lambda p: p['ff_w1'].T).astype(compute_dtype),        # (L, D, FF)
        'ff_b1':   stack(lambda p: p['ff_b1'].reshape(1, -1)),                 # (L, 1, FF)
        'ff_w2':   stack(lambda p: p['ff_w2'].T).astype(compute_dtype),        # (L, FF, D)
        'vec':     stack(lambda p: jnp.stack(
            [p['sa_out_b'], p['ca_out_b'], p['ff_b2'],
             p['ln1_g'], p['ln1_b'], p['ln2_g'], p['ln2_b'],
             p['ln3_g'], p['ln3_b']], axis=0)),                                # (L, 9, D)
    }


# --------------------------- pure-JAX reference -------------------------------

def reference_forward(raw, tgt_tokens, memory, nhead):
    with jax.default_matmul_precision("highest"):
        b, t = tgt_tokens.shape
        d = raw['emb'].shape[1]
        dh = d // nhead
        x = raw['emb'][tgt_tokens] * math.sqrt(d) + _positional_encoding(t, d)[None]
        causal = jnp.where(jnp.triu(jnp.ones((t, t), bool), 1), -jnp.inf, 0.0)

        def mha(xq, xkv, in_w, in_b, out_w, out_b, bias):
            tq, tk = xq.shape[1], xkv.shape[1]
            q = (xq @ in_w[:d].T + in_b[:d]).reshape(b, tq, nhead, dh).transpose(0, 2, 1, 3)
            k = (xkv @ in_w[d:2 * d].T + in_b[d:2 * d]).reshape(b, tk, nhead, dh).transpose(0, 2, 1, 3)
            v = (xkv @ in_w[2 * d:].T + in_b[2 * d:]).reshape(b, tk, nhead, dh).transpose(0, 2, 1, 3)
            sc = jnp.einsum('bhqd,bhkd->bhqk', q, k) / math.sqrt(dh) + bias
            p = jax.nn.softmax(sc, axis=-1)
            o = jnp.einsum('bhqk,bhkd->bhqd', p, v).transpose(0, 2, 1, 3).reshape(b, tq, d)
            return o @ out_w.T + out_b

        def ln(y, g, bb_):
            mean = y.mean(-1, keepdims=True)
            var = ((y - mean) ** 2).mean(-1, keepdims=True)
            return (y - mean) * jax.lax.rsqrt(var + 1e-5) * g + bb_

        for p in raw['layers']:
            sa = mha(x, x, p['sa_in_w'], p['sa_in_b'], p['sa_out_w'], p['sa_out_b'],
                     causal[None, None])
            x = ln(x + sa, p['ln1_g'], p['ln1_b'])
            ca = mha(x, memory, p['ca_in_w'], p['ca_in_b'], p['ca_out_w'], p['ca_out_b'], 0.0)
            x = ln(x + ca, p['ln2_g'], p['ln2_b'])
            h = jnp.maximum(x @ p['ff_w1'].T + p['ff_b1'], 0.0)
            x = ln(x + h @ p['ff_w2'].T + p['ff_b2'], p['ln3_g'], p['ln3_b'])
        logits = x @ raw['fc_out_w'].T + raw['fc_out_b']
        return logits, x


# ----------------------------------- main --------------------------------------

if __name__ == "__main__":
    # small shapes consistent with the module (vocab fixed at 75; reduced d_model)
    B, T, S = 2, 8, 16
    VOCAB, D, NHEAD, FF, NLAYERS = 75, 64, 4, 64, 2

    key = jax.random.PRNGKey(0)
    k_tok, k_mem, k_par = jax.random.split(key, 3)
    tgt_input = jax.random.randint(k_tok, (B, T), 0, VOCAB, dtype=jnp.int32)
    memory = jax.random.normal(k_mem, (B, S, D), jnp.float32)

    raw = init_raw_params(k_par, VOCAB, D, NHEAD, FF, NLAYERS)
    ref_logits, ref_dec = reference_forward(raw, tgt_input, memory, NHEAD)

    # --- validation config: f32 matmul operands + exact reciprocal (tolerance bounded by
    #     the MXU's f32 multi-pass behavior, so kept at 5e-2 rather than 1e-3) ---
    params_f32 = prepare_params(raw, D, VOCAB, compute_dtype=jnp.float32)
    fwd_f32 = jax.jit(functools.partial(phoneme_decoder_forward, nhead=NHEAD,
                                        approx_recip=False))
    logits32, dec32 = fwd_f32(params_f32, tgt_input, memory)
    jax.block_until_ready((logits32, dec32))
    assert logits32.shape == (B, T, VOCAB)
    assert dec32.shape == (B, T, D)
    assert bool(jnp.all(jnp.isfinite(logits32)))
    assert float(jnp.max(jnp.abs(logits32 - ref_logits))) < 5e-2
    assert float(jnp.max(jnp.abs(dec32 - ref_dec))) < 5e-2

    # --- perf config: bf16 MXU operands (v6e/v7x) + EUP approx reciprocal ---
    params_bf16 = prepare_params(raw, D, VOCAB, compute_dtype=jnp.bfloat16)
    fwd = jax.jit(functools.partial(phoneme_decoder_forward, nhead=NHEAD,
                                    approx_recip=True))
    logits, dec_out = fwd(params_bf16, tgt_input, memory)
    jax.block_until_ready((logits, dec_out))
    assert logits.shape == (B, T, VOCAB)
    assert bool(jnp.all(jnp.isfinite(logits)))
    assert float(jnp.max(jnp.abs(logits - ref_logits))) < 5e-1
    assert float(jnp.max(jnp.abs(dec_out - ref_dec))) < 5e-1

    # --- padded-memory path: finite -1e9 additive bias keeps masked softmax rows NaN-free ---
    pad_mask = jnp.zeros((B, S), bool).at[0, S - 4:].set(True)
    logits_m, dec_m = fwd(params_bf16, tgt_input, memory,
                          memory_key_padding_mask=pad_mask)
    jax.block_until_ready((logits_m, dec_m))
    assert bool(jnp.all(jnp.isfinite(logits_m)))

    print("KERNEL_OK")
</pallas_src>

<mosaic_0001>
module attributes {stable_mosaic.version = 11 : i64} {
  func.func @_decoder_stack_kernel(%arg0: i32, %arg1: i32, %arg2: memref<1x8x64xf32, #tpu.memory_space<vmem>>, %arg3: memref<1x16x64xf32, #tpu.memory_space<vmem>>, %arg4: memref<1x1x16xf32, #tpu.memory_space<vmem>>, %arg5: memref<1x64x192xf32, #tpu.memory_space<vmem>>, %arg6: memref<1x1x192xf32, #tpu.memory_space<vmem>>, %arg7: memref<1x64x64xf32, #tpu.memory_space<vmem>>, %arg8: memref<1x64x64xf32, #tpu.memory_space<vmem>>, %arg9: memref<1x1x64xf32, #tpu.memory_space<vmem>>, %arg10: memref<1x64x128xf32, #tpu.memory_space<vmem>>, %arg11: memref<1x1x128xf32, #tpu.memory_space<vmem>>, %arg12: memref<1x64x64xf32, #tpu.memory_space<vmem>>, %arg13: memref<1x64x64xf32, #tpu.memory_space<vmem>>, %arg14: memref<1x1x64xf32, #tpu.memory_space<vmem>>, %arg15: memref<1x64x64xf32, #tpu.memory_space<vmem>>, %arg16: memref<1x9x64xf32, #tpu.memory_space<vmem>>, %arg17: memref<64x128xf32, #tpu.memory_space<vmem>>, %arg18: memref<1x128xf32, #tpu.memory_space<vmem>>, %arg19: memref<1x8x64xf32, #tpu.memory_space<vmem>>, %arg20: memref<1x8x128xf32, #tpu.memory_space<vmem>>, %arg21: memref<8x64xf32, #tpu.memory_space<vmem>>) attributes {dimension_semantics = [#tpu.dimension_semantics<parallel>, #tpu.dimension_semantics<arbitrary>], iteration_bounds = array<i64: 2, 2>, scalar_prefetch = 0 : i64, scratch_operands = 1 : i64, tpu.core_type = #tpu.core_type<tc>, window_params = [{transform_indices = @transform_0, window_bounds = array<i64: 1, 8, 64>}, {transform_indices = @transform_1, window_bounds = array<i64: 1, 16, 64>}, {pipeline_mode = #tpu.pipeline_mode<synchronous>, transform_indices = @transform_2, window_bounds = array<i64: 1, 1, 16>}, {transform_indices = @transform_3, window_bounds = array<i64: 1, 64, 192>}, {transform_indices = @transform_4, window_bounds = array<i64: 1, 1, 192>}, {transform_indices = @transform_5, window_bounds = array<i64: 1, 64, 64>}, {transform_indices = @transform_6, window_bounds = array<i64: 1, 64, 64>}, {transform_indices = @transform_7, window_bounds = array<i64: 1, 1, 64>}, {transform_indices = @transform_8, window_bounds = array<i64: 1, 64, 128>}, {transform_indices = @transform_9, window_bounds = array<i64: 1, 1, 128>}, {transform_indices = @transform_10, window_bounds = array<i64: 1, 64, 64>}, {transform_indices = @transform_11, window_bounds = array<i64: 1, 64, 64>}, {transform_indices = @transform_12, window_bounds = array<i64: 1, 1, 64>}, {transform_indices = @transform_13, window_bounds = array<i64: 1, 64, 64>}, {transform_indices = @transform_14, window_bounds = array<i64: 1, 9, 64>}, {pipeline_mode = #tpu.pipeline_mode<synchronous>, transform_indices = @transform_15, window_bounds = array<i64: 64, 128>}, {pipeline_mode = #tpu.pipeline_mode<synchronous>, transform_indices = @transform_16, window_bounds = array<i64: 1, 128>}, {transform_indices = @transform_17, window_bounds = array<i64: 1, 8, 64>}, {transform_indices = @transform_18, window_bounds = array<i64: 1, 8, 128>}]} {
    %c0_i32 = arith.constant 0 : i32
    %0 = arith.cmpi eq, %arg1, %c0_i32 : i32
    %1 = arith.extui %0 : i1 to i32
    %c0_i32_0 = arith.constant 0 : i32
    %2 = arith.cmpi ne, %1, %c0_i32_0 : i32
    scf.if %2 {
      %c0_116 = arith.constant 0 : index
      %c0_117 = arith.constant 0 : index
      %c0_118 = arith.constant 0 : index
      %291 = vector.load %arg2[%c0_116, %c0_117, %c0_118] : memref<1x8x64xf32, #tpu.memory_space<vmem>>, vector<1x8x64xf32>
      %292 = vector.shape_cast %291 : vector<1x8x64xf32> to vector<8x64xf32>
      %c0_119 = arith.constant 0 : index
      %c0_120 = arith.constant 0 : index
      %293 = vector.load %arg21[%c0_119, %c0_120] : memref<8x64xf32, #tpu.memory_space<vmem>>, vector<8x64xf32>
      tpu.vector_store %arg21[%c0_119, %c0_120], %292 {strides = array<i32>} : memref<8x64xf32, #tpu.memory_space<vmem>>, vector<8x64xf32>,
    } else {
    }
    %c0 = arith.constant 0 : index
    %c0_1 = arith.constant 0 : index
    %3 = vector.load %arg21[%c0, %c0_1] : memref<8x64xf32, #tpu.memory_space<vmem>>, vector<8x64xf32>
    %c0_2 = arith.constant 0 : index
    %c0_3 = arith.constant 0 : index
    %c0_4 = arith.constant 0 : index
    %4 = vector.load %arg3[%c0_2, %c0_3, %c0_4] : memref<1x16x64xf32, #tpu.memory_space<vmem>>, vector<1x16x64xf32>
    %5 = vector.shape_cast %4 : vector<1x16x64xf32> to vector<16x64xf32>
    %c0_5 = arith.constant 0 : index
    %c0_6 = arith.constant 0 : index
    %c0_7 = arith.constant 0 : index
    %6 = vector.load %arg16[%c0_5, %c0_6, %c0_7] : memref<1x9x64xf32, #tpu.memory_space<vmem>>, vector<1x9x64xf32>
    %7 = vector.shape_cast %6 : vector<1x9x64xf32> to vector<9x64xf32>
    %8 = vector.extract_strided_slice %7 {offsets = [0, 0], sizes = [1, 64], strides = [1, 1]} : vector<9x64xf32> to vector<1x64xf32>
    %9 = vector.extract_strided_slice %7 {offsets = [1, 0], sizes = [1, 64], strides = [1, 1]} : vector<9x64xf32> to vector<1x64xf32>
    %10 = vector.extract_strided_slice %7 {offsets = [2, 0], sizes = [1, 64], strides = [1, 1]} : vector<9x64xf32> to vector<1x64xf32>
    %11 = vector.extract_strided_slice %7 {offsets = [3, 0], sizes = [1, 64], strides = [1, 1]} : vector<9x64xf32> to vector<1x64xf32>
    %12 = vector.extract_strided_slice %7 {offsets = [4, 0], sizes = [1, 64], strides = [1, 1]} : vector<9x64xf32> to vector<1x64xf32>
    %13 = vector.extract_strided_slice %7 {offsets = [5, 0], sizes = [1, 64], strides = [1, 1]} : vector<9x64xf32> to vector<1x64xf32>
    %14 = vector.extract_strided_slice %7 {offsets = [6, 0], sizes = [1, 64], strides = [1, 1]} : vector<9x64xf32> to vector<1x64xf32>
    %15 = vector.extract_strided_slice %7 {offsets = [7, 0], sizes = [1, 64], strides = [1, 1]} : vector<9x64xf32> to vector<1x64xf32>
    %16 = vector.extract_strided_slice %7 {offsets = [8, 0], sizes = [1, 64], strides = [1, 1]} : vector<9x64xf32> to vector<1x64xf32>
    %c0_8 = arith.constant 0 : index
    %c0_9 = arith.constant 0 : index
    %c0_10 = arith.constant 0 : index
    %17 = vector.load %arg5[%c0_8, %c0_9, %c0_10] : memref<1x64x192xf32, #tpu.memory_space<vmem>>, vector<1x64x192xf32>
    %18 = vector.shape_cast %17 : vector<1x64x192xf32> to vector<64x192xf32>
    %cst = arith.constant dense<0.000000e+00> : vector<8x192xf32>
    %19 = tpu.matmul %3, %18, %cst {dimension_numbers = #tpu.dot_dimension_numbers<[1], [0], [0], [1], [0, 0, 1, 1], [], []>} : vector<8x64xf32>, vector<64x192xf32>, vector<8x192xf32> -> vector<8x192xf32>
    %c0_11 = arith.constant 0 : index
    %c0_12 = arith.constant 0 : index
    %c0_13 = arith.constant 0 : index
    %20 = vector.load %arg6[%c0_11, %c0_12, %c0_13] : memref<1x1x192xf32, #tpu.memory_space<vmem>>, vector<1x1x192xf32>
    %21 = vector.shape_cast %20 : vector<1x1x192xf32> to vector<1x192xf32>
    %22 = vector.broadcast %21 : vector<1x192xf32> to vector<8x192xf32>
    %23 = arith.addf %19, %22 : vector<8x192xf32>
    %24 = tpu.iota {dimensions = array<i32: 0>} : vector<8x8xi32>
    %25 = tpu.iota {dimensions = array<i32: 1>} : vector<8x8xi32>
    %26 = arith.cmpi sgt, %25, %24 : vector<8x8xi32>
    %cst_14 = arith.constant -1.000000e+09 : f32
    %cst_15 = arith.constant 0.000000e+00 : f32
    %27 = vector.broadcast %cst_14 : f32 to vector<8x8xf32>
    %28 = vector.broadcast %cst_15 : f32 to vector<8x8xf32>
    %29 = arith.select %26, %27, %28 : vector<8x8xi1>, vector<8x8xf32>
    %c0_16 = arith.constant 0 : index
    %c0_17 = arith.constant 0 : index
    %c0_18 = arith.constant 0 : index
    %30 = vector.load %arg7[%c0_16, %c0_17, %c0_18] : memref<1x64x64xf32, #tpu.memory_space<vmem>>, vector<1x64x64xf32>
    %31 = vector.shape_cast %30 : vector<1x64x64xf32> to vector<64x64xf32>
    %cst_19 = arith.constant 0.000000e+00 : f32
    %32 = vector.broadcast %cst_19 : f32 to vector<8x64xf32>
    %33 = vector.extract_strided_slice %23 {offsets = [0, 0], sizes = [8, 16], strides = [1, 1]} : vector<8x192xf32> to vector<8x16xf32>
    %34 = vector.extract_strided_slice %23 {offsets = [0, 64], sizes = [8, 16], strides = [1, 1]} : vector<8x192xf32> to vector<8x16xf32>
    %35 = vector.extract_strided_slice %23 {offsets = [0, 128], sizes = [8, 16], strides = [1, 1]} : vector<8x192xf32> to vector<8x16xf32>
    %cst_20 = arith.constant dense<0.000000e+00> : vector<8x8xf32>
    %36 = tpu.matmul %33, %34, %cst_20 {dimension_numbers = #tpu.dot_dimension_numbers<[1], [1], [0], [0], [0, 0, 1, 0], [], []>} : vector<8x16xf32>, vector<8x16xf32>, vector<8x8xf32> -> vector<8x8xf32>
    %cst_21 = arith.constant 2.500000e-01 : f32
    %37 = vector.broadcast %cst_21 : f32 to vector<8x8xf32>
    %38 = arith.mulf %36, %37 : vector<8x8xf32>
    %39 = arith.addf %38, %29 : vector<8x8xf32>
    %cst_22 = arith.constant dense<0xFF800000> : vector<8xf32>
    %40 = vector.multi_reduction <maximumf>, %39, %cst_22 [1] : vector<8x8xf32> to vector<8xf32>
    %41 = vector.shape_cast %40 : vector<8xf32> to vector<8x1xf32>
    %42 = vector.broadcast %41 : vector<8x1xf32> to vector<8x8xf32>
    %43 = arith.subf %39, %42 : vector<8x8xf32>
    %44 = math.exp %43 : vector<8x8xf32>
    %cst_23 = arith.constant dense<0.000000e+00> : vector<8xf32>
    %45 = vector.multi_reduction <add>, %44, %cst_23 [1] : vector<8x8xf32> to vector<8xf32>
    %46 = vector.shape_cast %45 : vector<8xf32> to vector<8x1xf32>
    %47 = vector.broadcast %46 : vector<8x1xf32> to vector<8x8xf32>
    %48 = arith.divf %44, %47 : vector<8x8xf32>
    %cst_24 = arith.constant dense<0.000000e+00> : vector<8x16xf32>
    %49 = tpu.matmul %48, %35, %cst_24 {dimension_numbers = #tpu.dot_dimension_numbers<[1], [0], [0], [1], [0, 0, 1, 1], [], []>} : vector<8x8xf32>, vector<8x16xf32>, vector<8x16xf32> -> vector<8x16xf32>
    %50 = vector.extract_strided_slice %31 {offsets = [0, 0], sizes = [16, 64], strides = [1, 1]} : vector<64x64xf32> to vector<16x64xf32>
    %cst_25 = arith.constant dense<0.000000e+00> : vector<8x64xf32>
    %51 = tpu.matmul %49, %50, %cst_25 {dimension_numbers = #tpu.dot_dimension_numbers<[1], [0], [0], [1], [0, 0, 1, 1], [], []>} : vector<8x16xf32>, vector<16x64xf32>, vector<8x64xf32> -> vector<8x64xf32>
    %52 = arith.addf %32, %51 : vector<8x64xf32>
    %53 = vector.extract_strided_slice %23 {offsets = [0, 16], sizes = [8, 16], strides = [1, 1]} : vector<8x192xf32> to vector<8x16xf32>
    %54 = vector.extract_strided_slice %23 {offsets = [0, 80], sizes = [8, 16], strides = [1, 1]} : vector<8x192xf32> to vector<8x16xf32>
    %55 = vector.extract_strided_slice %23 {offsets = [0, 144], sizes = [8, 16], strides = [1, 1]} : vector<8x192xf32> to vector<8x16xf32>
    %cst_26 = arith.constant dense<0.000000e+00> : vector<8x8xf32>
    %56 = tpu.matmul %53, %54, %cst_26 {dimension_numbers = #tpu.dot_dimension_numbers<[1], [1], [0], [0], [0, 0, 1, 0], [], []>} : vector<8x16xf32>, vector<8x16xf32>, vector<8x8xf32> -> vector<8x8xf32>
    %cst_27 = arith.constant 2.500000e-01 : f32
    %57 = vector.broadcast %cst_27 : f32 to vector<8x8xf32>
    %58 = arith.mulf %56, %57 : vector<8x8xf32>
    %59 = arith.addf %58, %29 : vector<8x8xf32>
    %cst_28 = arith.constant dense<0xFF800000> : vector<8xf32>
    %60 = vector.multi_reduction <maximumf>, %59, %cst_28 [1] : vector<8x8xf32> to vector<8xf32>
    %61 = vector.shape_cast %60 : vector<8xf32> to vector<8x1xf32>
    %62 = vector.broadcast %61 : vector<8x1xf32> to vector<8x8xf32>
    %63 = arith.subf %59, %62 : vector<8x8xf32>
    %64 = math.exp %63 : vector<8x8xf32>
    %cst_29 = arith.constant dense<0.000000e+00> : vector<8xf32>
    %65 = vector.multi_reduction <add>, %64, %cst_29 [1] : vector<8x8xf32> to vector<8xf32>
    %66 = vector.shape_cast %65 : vector<8xf32> to vector<8x1xf32>
    %67 = vector.broadcast %66 : vector<8x1xf32> to vector<8x8xf32>
    %68 = arith.divf %64, %67 : vector<8x8xf32>
    %cst_30 = arith.constant dense<0.000000e+00> : vector<8x16xf32>
    %69 = tpu.matmul %68, %55, %cst_30 {dimension_numbers = #tpu.dot_dimension_numbers<[1], [0], [0], [1], [0, 0, 1, 1], [], []>} : vector<8x8xf32>, vector<8x16xf32>, vector<8x16xf32> -> vector<8x16xf32>
    %70 = vector.extract_strided_slice %31 {offsets = [16, 0], sizes = [16, 64], strides = [1, 1]} : vector<64x64xf32> to vector<16x64xf32>
    %cst_31 = arith.constant dense<0.000000e+00> : vector<8x64xf32>
    %71 = tpu.matmul %69, %70, %cst_31 {dimension_numbers = #tpu.dot_dimension_numbers<[1], [0], [0], [1], [0, 0, 1, 1], [], []>} : vector<8x16xf32>, vector<16x64xf32>, vector<8x64xf32> -> vector<8x64xf32>
    %72 = arith.addf %52, %71 : vector<8x64xf32>
    %73 = vector.extract_strided_slice %23 {offsets = [0, 32], sizes = [8, 16], strides = [1, 1]} : vector<8x192xf32> to vector<8x16xf32>
    %74 = vector.extract_strided_slice %23 {offsets = [0, 96], sizes = [8, 16], strides = [1, 1]} : vector<8x192xf32> to vector<8x16xf32>
    %75 = vector.extract_strided_slice %23 {offsets = [0, 160], sizes = [8, 16], strides = [1, 1]} : vector<8x192xf32> to vector<8x16xf32>
    %cst_32 = arith.constant dense<0.000000e+00> : vector<8x8xf32>
    %76 = tpu.matmul %73, %74, %cst_32 {dimension_numbers = #tpu.dot_dimension_numbers<[1], [1], [0], [0], [0, 0, 1, 0], [], []>} : vector<8x16xf32>, vector<8x16xf32>, vector<8x8xf32> -> vector<8x8xf32>
    %cst_33 = arith.constant 2.500000e-01 : f32
    %77 = vector.broadcast %cst_33 : f32 to vector<8x8xf32>
    %78 = arith.mulf %76, %77 : vector<8x8xf32>
    %79 = arith.addf %78, %29 : vector<8x8xf32>
    %cst_34 = arith.constant dense<0xFF800000> : vector<8xf32>
    %80 = vector.multi_reduction <maximumf>, %79, %cst_34 [1] : vector<8x8xf32> to vector<8xf32>
    %81 = vector.shape_cast %80 : vector<8xf32> to vector<8x1xf32>
    %82 = vector.broadcast %81 : vector<8x1xf32> to vector<8x8xf32>
    %83 = arith.subf %79, %82 : vector<8x8xf32>
    %84 = math.exp %83 : vector<8x8xf32>
    %cst_35 = arith.constant dense<0.000000e+00> : vector<8xf32>
    %85 = vector.multi_reduction <add>, %84, %cst_35 [1] : vector<8x8xf32> to vector<8xf32>
    %86 = vector.shape_cast %85 : vector<8xf32> to vector<8x1xf32>
    %87 = vector.broadcast %86 : vector<8x1xf32> to vector<8x8xf32>
    %88 = arith.divf %84, %87 : vector<8x8xf32>
    %cst_36 = arith.constant dense<0.000000e+00> : vector<8x16xf32>
    %89 = tpu.matmul %88, %75, %cst_36 {dimension_numbers = #tpu.dot_dimension_numbers<[1], [0], [0], [1], [0, 0, 1, 1], [], []>} : vector<8x8xf32>, vector<8x16xf32>, vector<8x16xf32> -> vector<8x16xf32>
    %90 = vector.extract_strided_slice %31 {offsets = [32, 0], sizes = [16, 64], strides = [1, 1]} : vector<64x64xf32> to vector<16x64xf32>
    %cst_37 = arith.constant dense<0.000000e+00> : vector<8x64xf32>
    %91 = tpu.matmul %89, %90, %cst_37 {dimension_numbers = #tpu.dot_dimension_numbers<[1], [0], [0], [1], [0, 0, 1, 1], [], []>} : vector<8x16xf32>, vector<16x64xf32>, vector<8x64xf32> -> vector<8x64xf32>
    %92 = arith.addf %72, %91 : vector<8x64xf32>
    %93 = vector.extract_strided_slice %23 {offsets = [0, 48], sizes = [8, 16], strides = [1, 1]} : vector<8x192xf32> to vector<8x16xf32>
    %94 = vector.extract_strided_slice %23 {offsets = [0, 112], sizes = [8, 16], strides = [1, 1]} : vector<8x192xf32> to vector<8x16xf32>
    %95 = vector.extract_strided_slice %23 {offsets = [0, 176], sizes = [8, 16], strides = [1, 1]} : vector<8x192xf32> to vector<8x16xf32>
    %cst_38 = arith.constant dense<0.000000e+00> : vector<8x8xf32>
    %96 = tpu.matmul %93, %94, %cst_38 {dimension_numbers = #tpu.dot_dimension_numbers<[1], [1], [0], [0], [0, 0, 1, 0], [], []>} : vector<8x16xf32>, vector<8x16xf32>, vector<8x8xf32> -> vector<8x8xf32>
    %cst_39 = arith.constant 2.500000e-01 : f32
    %97 = vector.broadcast %cst_39 : f32 to vector<8x8xf32>
    %98 = arith.mulf %96, %97 : vector<8x8xf32>
    %99 = arith.addf %98, %29 : vector<8x8xf32>
    %cst_40 = arith.constant dense<0xFF800000> : vector<8xf32>
    %100 = vector.multi_reduction <maximumf>, %99, %cst_40 [1] : vector<8x8xf32> to vector<8xf32>
    %101 = vector.shape_cast %100 : vector<8xf32> to vector<8x1xf32>
    %102 = vector.broadcast %101 : vector<8x1xf32> to vector<8x8xf32>
    %103 = arith.subf %99, %102 : vector<8x8xf32>
    %104 = math.exp %103 : vector<8x8xf32>
    %cst_41 = arith.constant dense<0.000000e+00> : vector<8xf32>
    %105 = vector.multi_reduction <add>, %104, %cst_41 [1] : vector<8x8xf32> to vector<8xf32>
    %106 = vector.shape_cast %105 : vector<8xf32> to vector<8x1xf32>
    %107 = vector.broadcast %106 : vector<8x1xf32> to vector<8x8xf32>
    %108 = arith.divf %104, %107 : vector<8x8xf32>
    %cst_42 = arith.constant dense<0.000000e+00> : vector<8x16xf32>
    %109 = tpu.matmul %108, %95, %cst_42 {dimension_numbers = #tpu.dot_dimension_numbers<[1], [0], [0], [1], [0, 0, 1, 1], [], []>} : vector<8x8xf32>, vector<8x16xf32>, vector<8x16xf32> -> vector<8x16xf32>
    %110 = vector.extract_strided_slice %31 {offsets = [48, 0], sizes = [16, 64], strides = [1, 1]} : vector<64x64xf32> to vector<16x64xf32>
    %cst_43 = arith.constant dense<0.000000e+00> : vector<8x64xf32>
    %111 = tpu.matmul %109, %110, %cst_43 {dimension_numbers = #tpu.dot_dimension_numbers<[1], [0], [0], [1], [0, 0, 1, 1], [], []>} : vector<8x16xf32>, vector<16x64xf32>, vector<8x64xf32> -> vector<8x64xf32>
    %112 = arith.addf %92, %111 : vector<8x64xf32>
    %113 = arith.addf %3, %112 : vector<8x64xf32>
    %114 = vector.broadcast %8 : vector<1x64xf32> to vector<8x64xf32>
    %115 = arith.addf %113, %114 : vector<8x64xf32>
    %cst_44 = arith.constant dense<0.000000e+00> : vector<8xf32>
    %116 = vector.multi_reduction <add>, %115, %cst_44 [1] : vector<8x64xf32> to vector<8xf32>
    %117 = vector.shape_cast %116 : vector<8xf32> to vector<8x1xf32>
    %cst_45 = arith.constant 6.400000e+01 : f32
    %118 = vector.broadcast %cst_45 : f32 to vector<8x1xf32>
    %119 = arith.divf %117, %118 : vector<8x1xf32>
    %120 = vector.broadcast %119 : vector<8x1xf32> to vector<8x64xf32>
    %121 = arith.subf %115, %120 : vector<8x64xf32>
    %122 = arith.mulf %121, %121 : vector<8x64xf32>
    %cst_46 = arith.constant dense<0.000000e+00> : vector<8xf32>
    %123 = vector.multi_reduction <add>, %122, %cst_46 [1] : vector<8x64xf32> to vector<8xf32>
    %124 = vector.shape_cast %123 : vector<8xf32> to vector<8x1xf32>
    %cst_47 = arith.constant 6.400000e+01 : f32
    %125 = vector.broadcast %cst_47 : f32 to vector<8x1xf32>
    %126 = arith.divf %124, %125 : vector<8x1xf32>
    %cst_48 = arith.constant 9.99999974E-6 : f32
    %127 = vector.broadcast %cst_48 : f32 to vector<8x1xf32>
    %128 = arith.addf %126, %127 : vector<8x1xf32>
    %129 = math.rsqrt %128 : vector<8x1xf32>
    %130 = vector.broadcast %129 : vector<8x1xf32> to vector<8x64xf32>
    %131 = arith.mulf %121, %130 : vector<8x64xf32>
    %132 = vector.broadcast %11 : vector<1x64xf32> to vector<8x64xf32>
    %133 = arith.mulf %131, %132 : vector<8x64xf32>
    %134 = vector.broadcast %12 : vector<1x64xf32> to vector<8x64xf32>
    %135 = arith.addf %133, %134 : vector<8x64xf32>
    %c0_49 = arith.constant 0 : index
    %c0_50 = arith.constant 0 : index
    %c0_51 = arith.constant 0 : index
    %136 = vector.load %arg8[%c0_49, %c0_50, %c0_51] : memref<1x64x64xf32, #tpu.memory_space<vmem>>, vector<1x64x64xf32>
    %137 = vector.shape_cast %136 : vector<1x64x64xf32> to vector<64x64xf32>
    %cst_52 = arith.constant dense<0.000000e+00> : vector<8x64xf32>
    %138 = tpu.matmul %135, %137, %cst_52 {dimension_numbers = #tpu.dot_dimension_numbers<[1], [0], [0], [1], [0, 0, 1, 1], [], []>} : vector<8x64xf32>, vector<64x64xf32>, vector<8x64xf32> -> vector<8x64xf32>
    %c0_53 = arith.constant 0 : index
    %c0_54 = arith.constant 0 : index
    %c0_55 = arith.constant 0 : index
    %139 = vector.load %arg9[%c0_53, %c0_54, %c0_55] : memref<1x1x64xf32, #tpu.memory_space<vmem>>, vector<1x1x64xf32>
    %140 = vector.shape_cast %139 : vector<1x1x64xf32> to vector<1x64xf32>
    %141 = vector.broadcast %140 : vector<1x64xf32> to vector<8x64xf32>
    %142 = arith.addf %138, %141 : vector<8x64xf32>
    %c0_56 = arith.constant 0 : index
    %c0_57 = arith.constant 0 : index
    %c0_58 = arith.constant 0 : index
    %143 = vector.load %arg10[%c0_56, %c0_57, %c0_58] : memref<1x64x128xf32, #tpu.memory_space<vmem>>, vector<1x64x128xf32>
    %144 = vector.shape_cast %143 : vector<1x64x128xf32> to vector<64x128xf32>
    %cst_59 = arith.constant dense<0.000000e+00> : vector<16x128xf32>
    %145 = tpu.matmul %5, %144, %cst_59 {dimension_numbers = #tpu.dot_dimension_numbers<[1], [0], [0], [1], [0, 0, 1, 1], [], []>} : vector<16x64xf32>, vector<64x128xf32>, vector<16x128xf32> -> vector<16x128xf32>
    %c0_60 = arith.constant 0 : index
    %c0_61 = arith.constant 0 : index
    %c0_62 = arith.constant 0 : index
    %146 = vector.load %arg11[%c0_60, %c0_61, %c0_62] : memref<1x1x128xf32, #tpu.memory_space<vmem>>, vector<1x1x128xf32>
    %147 = vector.shape_cast %146 : vector<1x1x128xf32> to vector<1x128xf32>
    %148 = vector.broadcast %147 : vector<1x128xf32> to vector<16x128xf32>
    %149 = arith.addf %145, %148 : vector<16x128xf32>
    %c0_63 = arith.constant 0 : index
    %c0_64 = arith.constant 0 : index
    %c0_65 = arith.constant 0 : index
    %150 = vector.load %arg12[%c0_63, %c0_64, %c0_65] : memref<1x64x64xf32, #tpu.memory_space<vmem>>, vector<1x64x64xf32>
    %151 = vector.shape_cast %150 : vector<1x64x64xf32> to vector<64x64xf32>
    %cst_66 = arith.constant 0.000000e+00 : f32
    %152 = vector.broadcast %cst_66 : f32 to vector<8x64xf32>
    %153 = vector.extract_strided_slice %142 {offsets = [0, 0], sizes = [8, 16], strides = [1, 1]} : vector<8x64xf32> to vector<8x16xf32>
    %154 = vector.extract_strided_slice %149 {offsets = [0, 0], sizes = [16, 16], strides = [1, 1]} : vector<16x128xf32> to vector<16x16xf32>
    %155 = vector.extract_strided_slice %149 {offsets = [0, 64], sizes = [16, 16], strides = [1, 1]} : vector<16x128xf32> to vector<16x16xf32>
    %cst_67 = arith.constant dense<0.000000e+00> : vector<8x16xf32>
    %156 = tpu.matmul %153, %154, %cst_67 {dimension_numbers = #tpu.dot_dimension_numbers<[1], [1], [0], [0], [0, 0, 1, 0], [], []>} : vector<8x16xf32>, vector<16x16xf32>, vector<8x16xf32> -> vector<8x16xf32>
    %cst_68 = arith.constant 2.500000e-01 : f32
    %157 = vector.broadcast %cst_68 : f32 to vector<8x16xf32>
    %158 = arith.mulf %156, %157 : vector<8x16xf32>
    %cst_69 = arith.constant dense<0xFF800000> : vector<8xf32>
    %159 = vector.multi_reduction <maximumf>, %158, %cst_69 [1] : vector<8x16xf32> to vector<8xf32>
    %160 = vector.shape_cast %159 : vector<8xf32> to vector<8x1xf32>
    %161 = vector.broadcast %160 : vector<8x1xf32> to vector<8x16xf32>
    %162 = arith.subf %158, %161 : vector<8x16xf32>
    %163 = math.exp %162 : vector<8x16xf32>
    %cst_70 = arith.constant dense<0.000000e+00> : vector<8xf32>
    %164 = vector.multi_reduction <add>, %163, %cst_70 [1] : vector<8x16xf32> to vector<8xf32>
    %165 = vector.shape_cast %164 : vector<8xf32> to vector<8x1xf32>
    %166 = vector.broadcast %165 : vector<8x1xf32> to vector<8x16xf32>
    %167 = arith.divf %163, %166 : vector<8x16xf32>
    %cst_71 = arith.constant dense<0.000000e+00> : vector<8x16xf32>
    %168 = tpu.matmul %167, %155, %cst_71 {dimension_numbers = #tpu.dot_dimension_numbers<[1], [0], [0], [1], [0, 0, 1, 1], [], []>} : vector<8x16xf32>, vector<16x16xf32>, vector<8x16xf32> -> vector<8x16xf32>
    %169 = vector.extract_strided_slice %151 {offsets = [0, 0], sizes = [16, 64], strides = [1, 1]} : vector<64x64xf32> to vector<16x64xf32>
    %cst_72 = arith.constant dense<0.000000e+00> : vector<8x64xf32>
    %170 = tpu.matmul %168, %169, %cst_72 {dimension_numbers = #tpu.dot_dimension_numbers<[1], [0], [0], [1], [0, 0, 1, 1], [], []>} : vector<8x16xf32>, vector<16x64xf32>, vector<8x64xf32> -> vector<8x64xf32>
    %171 = arith.addf %152, %170 : vector<8x64xf32>
    %172 = vector.extract_strided_slice %142 {offsets = [0, 16], sizes = [8, 16], strides = [1, 1]} : vector<8x64xf32> to vector<8x16xf32>
    %173 = vector.extract_strided_slice %149 {offsets = [0, 16], sizes = [16, 16], strides = [1, 1]} : vector<16x128xf32> to vector<16x16xf32>
    %174 = vector.extract_strided_slice %149 {offsets = [0, 80], sizes = [16, 16], strides = [1, 1]} : vector<16x128xf32> to vector<16x16xf32>
    %cst_73 = arith.constant dense<0.000000e+00> : vector<8x16xf32>
    %175 = tpu.matmul %172, %173, %cst_73 {dimension_numbers = #tpu.dot_dimension_numbers<[1], [1], [0], [0], [0, 0, 1, 0], [], []>} : vector<8x16xf32>, vector<16x16xf32>, vector<8x16xf32> -> vector<8x16xf32>
    %cst_74 = arith.constant 2.500000e-01 : f32
    %176 = vector.broadcast %cst_74 : f32 to vector<8x16xf32>
    %177 = arith.mulf %175, %176 : vector<8x16xf32>
    %cst_75 = arith.constant dense<0xFF800000> : vector<8xf32>
    %178 = vector.multi_reduction <maximumf>, %177, %cst_75 [1] : vector<8x16xf32> to vector<8xf32>
    %179 = vector.shape_cast %178 : vector<8xf32> to vector<8x1xf32>
    %180 = vector.broadcast %179 : vector<8x1xf32> to vector<8x16xf32>
    %181 = arith.subf %177, %180 : vector<8x16xf32>
    %182 = math.exp %181 : vector<8x16xf32>
    %cst_76 = arith.constant dense<0.000000e+00> : vector<8xf32>
    %183 = vector.multi_reduction <add>, %182, %cst_76 [1] : vector<8x16xf32> to vector<8xf32>
    %184 = vector.shape_cast %183 : vector<8xf32> to vector<8x1xf32>
    %185 = vector.broadcast %184 : vector<8x1xf32> to vector<8x16xf32>
    %186 = arith.divf %182, %185 : vector<8x16xf32>
    %cst_77 = arith.constant dense<0.000000e+00> : vector<8x16xf32>
    %187 = tpu.matmul %186, %174, %cst_77 {dimension_numbers = #tpu.dot_dimension_numbers<[1], [0], [0], [1], [0, 0, 1, 1], [], []>} : vector<8x16xf32>, vector<16x16xf32>, vector<8x16xf32> -> vector<8x16xf32>
    %188 = vector.extract_strided_slice %151 {offsets = [16, 0], sizes = [16, 64], strides = [1, 1]} : vector<64x64xf32> to vector<16x64xf32>
    %cst_78 = arith.constant dense<0.000000e+00> : vector<8x64xf32>
    %189 = tpu.matmul %187, %188, %cst_78 {dimension_numbers = #tpu.dot_dimension_numbers<[1], [0], [0], [1], [0, 0, 1, 1], [], []>} : vector<8x16xf32>, vector<16x64xf32>, vector<8x64xf32> -> vector<8x64xf32>
    %190 = arith.addf %171, %189 : vector<8x64xf32>
    %191 = vector.extract_strided_slice %142 {offsets = [0, 32], sizes = [8, 16], strides = [1, 1]} : vector<8x64xf32> to vector<8x16xf32>
    %192 = vector.extract_strided_slice %149 {offsets = [0, 32], sizes = [16, 16], strides = [1, 1]} : vector<16x128xf32> to vector<16x16xf32>
    %193 = vector.extract_strided_slice %149 {offsets = [0, 96], sizes = [16, 16], strides = [1, 1]} : vector<16x128xf32> to vector<16x16xf32>
    %cst_79 = arith.constant dense<0.000000e+00> : vector<8x16xf32>
    %194 = tpu.matmul %191, %192, %cst_79 {dimension_numbers = #tpu.dot_dimension_numbers<[1], [1], [0], [0], [0, 0, 1, 0], [], []>} : vector<8x16xf32>, vector<16x16xf32>, vector<8x16xf32> -> vector<8x16xf32>
    %cst_80 = arith.constant 2.500000e-01 : f32
    %195 = vector.broadcast %cst_80 : f32 to vector<8x16xf32>
    %196 = arith.mulf %194, %195 : vector<8x16xf32>
    %cst_81 = arith.constant dense<0xFF800000> : vector<8xf32>
    %197 = vector.multi_reduction <maximumf>, %196, %cst_81 [1] : vector<8x16xf32> to vector<8xf32>
    %198 = vector.shape_cast %197 : vector<8xf32> to vector<8x1xf32>
    %199 = vector.broadcast %198 : vector<8x1xf32> to vector<8x16xf32>
    %200 = arith.subf %196, %199 : vector<8x16xf32>
    %201 = math.exp %200 : vector<8x16xf32>
    %cst_82 = arith.constant dense<0.000000e+00> : vector<8xf32>
    %202 = vector.multi_reduction <add>, %201, %cst_82 [1] : vector<8x16xf32> to vector<8xf32>
    %203 = vector.shape_cast %202 : vector<8xf32> to vector<8x1xf32>
    %204 = vector.broadcast %203 : vector<8x1xf32> to vector<8x16xf32>
    %205 = arith.divf %201, %204 : vector<8x16xf32>
    %cst_83 = arith.constant dense<0.000000e+00> : vector<8x16xf32>
    %206 = tpu.matmul %205, %193, %cst_83 {dimension_numbers = #tpu.dot_dimension_numbers<[1], [0], [0], [1], [0, 0, 1, 1], [], []>} : vector<8x16xf32>, vector<16x16xf32>, vector<8x16xf32> -> vector<8x16xf32>
    %207 = vector.extract_strided_slice %151 {offsets = [32, 0], sizes = [16, 64], strides = [1, 1]} : vector<64x64xf32> to vector<16x64xf32>
    %cst_84 = arith.constant dense<0.000000e+00> : vector<8x64xf32>
    %208 = tpu.matmul %206, %207, %cst_84 {dimension_numbers = #tpu.dot_dimension_numbers<[1], [0], [0], [1], [0, 0, 1, 1], [], []>} : vector<8x16xf32>, vector<16x64xf32>, vector<8x64xf32> -> vector<8x64xf32>
    %209 = arith.addf %190, %208 : vector<8x64xf32>
    %210 = vector.extract_strided_slice %142 {offsets = [0, 48], sizes = [8, 16], strides = [1, 1]} : vector<8x64xf32> to vector<8x16xf32>
    %211 = vector.extract_strided_slice %149 {offsets = [0, 48], sizes = [16, 16], strides = [1, 1]} : vector<16x128xf32> to vector<16x16xf32>
    %212 = vector.extract_strided_slice %149 {offsets = [0, 112], sizes = [16, 16], strides = [1, 1]} : vector<16x128xf32> to vector<16x16xf32>
    %cst_85 = arith.constant dense<0.000000e+00> : vector<8x16xf32>
    %213 = tpu.matmul %210, %211, %cst_85 {dimension_numbers = #tpu.dot_dimension_numbers<[1], [1], [0], [0], [0, 0, 1, 0], [], []>} : vector<8x16xf32>, vector<16x16xf32>, vector<8x16xf32> -> vector<8x16xf32>
    %cst_86 = arith.constant 2.500000e-01 : f32
    %214 = vector.broadcast %cst_86 : f32 to vector<8x16xf32>
    %215 = arith.mulf %213, %214 : vector<8x16xf32>
    %cst_87 = arith.constant dense<0xFF800000> : vector<8xf32>
    %216 = vector.multi_reduction <maximumf>, %215, %cst_87 [1] : vector<8x16xf32> to vector<8xf32>
    %217 = vector.shape_cast %216 : vector<8xf32> to vector<8x1xf32>
    %218 = vector.broadcast %217 : vector<8x1xf32> to vector<8x16xf32>
    %219 = arith.subf %215, %218 : vector<8x16xf32>
    %220 = math.exp %219 : vector<8x16xf32>
    %cst_88 = arith.constant dense<0.000000e+00> : vector<8xf32>
    %221 = vector.multi_reduction <add>, %220, %cst_88 [1] : vector<8x16xf32> to vector<8xf32>
    %222 = vector.shape_cast %221 : vector<8xf32> to vector<8x1xf32>
    %223 = vector.broadcast %222 : vector<8x1xf32> to vector<8x16xf32>
    %224 = arith.divf %220, %223 : vector<8x16xf32>
    %cst_89 = arith.constant dense<0.000000e+00> : vector<8x16xf32>
    %225 = tpu.matmul %224, %212, %cst_89 {dimension_numbers = #tpu.dot_dimension_numbers<[1], [0], [0], [1], [0, 0, 1, 1], [], []>} : vector<8x16xf32>, vector<16x16xf32>, vector<8x16xf32> -> vector<8x16xf32>
    %226 = vector.extract_strided_slice %151 {offsets = [48, 0], sizes = [16, 64], strides = [1, 1]} : vector<64x64xf32> to vector<16x64xf32>
    %cst_90 = arith.constant dense<0.000000e+00> : vector<8x64xf32>
    %227 = tpu.matmul %225, %226, %cst_90 {dimension_numbers = #tpu.dot_dimension_numbers<[1], [0], [0], [1], [0, 0, 1, 1], [], []>} : vector<8x16xf32>, vector<16x64xf32>, vector<8x64xf32> -> vector<8x64xf32>
    %228 = arith.addf %209, %227 : vector<8x64xf32>
    %229 = arith.addf %135, %228 : vector<8x64xf32>
    %230 = vector.broadcast %9 : vector<1x64xf32> to vector<8x64xf32>
    %231 = arith.addf %229, %230 : vector<8x64xf32>
    %cst_91 = arith.constant dense<0.000000e+00> : vector<8xf32>
    %232 = vector.multi_reduction <add>, %231, %cst_91 [1] : vector<8x64xf32> to vector<8xf32>
    %233 = vector.shape_cast %232 : vector<8xf32> to vector<8x1xf32>
    %cst_92 = arith.constant 6.400000e+01 : f32
    %234 = vector.broadcast %cst_92 : f32 to vector<8x1xf32>
    %235 = arith.divf %233, %234 : vector<8x1xf32>
    %236 = vector.broadcast %235 : vector<8x1xf32> to vector<8x64xf32>
    %237 = arith.subf %231, %236 : vector<8x64xf32>
    %238 = arith.mulf %237, %237 : vector<8x64xf32>
    %cst_93 = arith.constant dense<0.000000e+00> : vector<8xf32>
    %239 = vector.multi_reduction <add>, %238, %cst_93 [1] : vector<8x64xf32> to vector<8xf32>
    %240 = vector.shape_cast %239 : vector<8xf32> to vector<8x1xf32>
    %cst_94 = arith.constant 6.400000e+01 : f32
    %241 = vector.broadcast %cst_94 : f32 to vector<8x1xf32>
    %242 = arith.divf %240, %241 : vector<8x1xf32>
    %cst_95 = arith.constant 9.99999974E-6 : f32
    %243 = vector.broadcast %cst_95 : f32 to vector<8x1xf32>
    %244 = arith.addf %242, %243 : vector<8x1xf32>
    %245 = math.rsqrt %244 : vector<8x1xf32>
    %246 = vector.broadcast %245 : vector<8x1xf32> to vector<8x64xf32>
    %247 = arith.mulf %237, %246 : vector<8x64xf32>
    %248 = vector.broadcast %13 : vector<1x64xf32> to vector<8x64xf32>
    %249 = arith.mulf %247, %248 : vector<8x64xf32>
    %250 = vector.broadcast %14 : vector<1x64xf32> to vector<8x64xf32>
    %251 = arith.addf %249, %250 : vector<8x64xf32>
    %c0_96 = arith.constant 0 : index
    %c0_97 = arith.constant 0 : index
    %c0_98 = arith.constant 0 : index
    %252 = vector.load %arg13[%c0_96, %c0_97, %c0_98] : memref<1x64x64xf32, #tpu.memory_space<vmem>>, vector<1x64x64xf32>
    %253 = vector.shape_cast %252 : vector<1x64x64xf32> to vector<64x64xf32>
    %cst_99 = arith.constant dense<0.000000e+00> : vector<8x64xf32>
    %254 = tpu.matmul %251, %253, %cst_99 {dimension_numbers = #tpu.dot_dimension_numbers<[1], [0], [0], [1], [0, 0, 1, 1], [], []>} : vector<8x64xf32>, vector<64x64xf32>, vector<8x64xf32> -> vector<8x64xf32>
    %c0_100 = arith.constant 0 : index
    %c0_101 = arith.constant 0 : index
    %c0_102 = arith.constant 0 : index
    %255 = vector.load %arg14[%c0_100, %c0_101, %c0_102] : memref<1x1x64xf32, #tpu.memory_space<vmem>>, vector<1x1x64xf32>
    %256 = vector.shape_cast %255 : vector<1x1x64xf32> to vector<1x64xf32>
    %257 = vector.broadcast %256 : vector<1x64xf32> to vector<8x64xf32>
    %258 = arith.addf %254, %257 : vector<8x64xf32>
    %cst_103 = arith.constant 0.000000e+00 : f32
    %259 = vector.broadcast %cst_103 : f32 to vector<8x64xf32>
    %260 = arith.maximumf %258, %259 : vector<8x64xf32>
    %c0_104 = arith.constant 0 : index
    %c0_105 = arith.constant 0 : index
    %c0_106 = arith.constant 0 : index
    %261 = vector.load %arg15[%c0_104, %c0_105, %c0_106] : memref<1x64x64xf32, #tpu.memory_space<vmem>>, vector<1x64x64xf32>
    %262 = vector.shape_cast %261 : vector<1x64x64xf32> to vector<64x64xf32>
    %cst_107 = arith.constant dense<0.000000e+00> : vector<8x64xf32>
    %263 = tpu.matmul %260, %262, %cst_107 {dimension_numbers = #tpu.dot_dimension_numbers<[1], [0], [0], [1], [0, 0, 1, 1], [], []>} : vector<8x64xf32>, vector<64x64xf32>, vector<8x64xf32> -> vector<8x64xf32>
    %264 = arith.addf %251, %263 : vector<8x64xf32>
    %265 = vector.broadcast %10 : vector<1x64xf32> to vector<8x64xf32>
    %266 = arith.addf %264, %265 : vector<8x64xf32>
    %cst_108 = arith.constant dense<0.000000e+00> : vector<8xf32>
    %267 = vector.multi_reduction <add>, %266, %cst_108 [1] : vector<8x64xf32> to vector<8xf32>
    %268 = vector.shape_cast %267 : vector<8xf32> to vector<8x1xf32>
    %cst_109 = arith.constant 6.400000e+01 : f32
    %269 = vector.broadcast %cst_109 : f32 to vector<8x1xf32>
    %270 = arith.divf %268, %269 : vector<8x1xf32>
    %271 = vector.broadcast %270 : vector<8x1xf32> to vector<8x64xf32>
    %272 = arith.subf %266, %271 : vector<8x64xf32>
    %273 = arith.mulf %272, %272 : vector<8x64xf32>
    %cst_110 = arith.constant dense<0.000000e+00> : vector<8xf32>
    %274 = vector.multi_reduction <add>, %273, %cst_110 [1] : vector<8x64xf32> to vector<8xf32>
    %275 = vector.shape_cast %274 : vector<8xf32> to vector<8x1xf32>
    %cst_111 = arith.constant 6.400000e+01 : f32
    %276 = vector.broadcast %cst_111 : f32 to vector<8x1xf32>
    %277 = arith.divf %275, %276 : vector<8x1xf32>
    %cst_112 = arith.constant 9.99999974E-6 : f32
    %278 = vector.broadcast %cst_112 : f32 to vector<8x1xf32>
    %279 = arith.addf %277, %278 : vector<8x1xf32>
    %280 = math.rsqrt %279 : vector<8x1xf32>
    %281 = vector.broadcast %280 : vector<8x1xf32> to vector<8x64xf32>
    %282 = arith.mulf %272, %281 : vector<8x64xf32>
    %283 = vector.broadcast %15 : vector<1x64xf32> to vector<8x64xf32>
    %284 = arith.mulf %282, %283 : vector<8x64xf32>
    %285 = vector.broadcast %16 : vector<1x64xf32> to vector<8x64xf32>
    %286 = arith.addf %284, %285 : vector<8x64xf32>
    %c0_113 = arith.constant 0 : index
    %c0_114 = arith.constant 0 : index
    %287 = vector.load %arg21[%c0_113, %c0_114] : memref<8x64xf32, #tpu.memory_space<vmem>>, vector<8x64xf32>
    tpu.vector_store %arg21[%c0_113, %c0_114], %286 {strides = array<i32>} : memref<8x64xf32, #tpu.memory_space<vmem>>, vector<8x64xf32>,
    %c1_i32 = arith.constant 1 : i32
    %288 = arith.cmpi eq, %arg1, %c1_i32 : i32
    %289 = arith.extui %288 : i1 to i32
    %c0_i32_115 = arith.constant 0 : i32
    %290 = arith.cmpi ne, %289, %c0_i32_115 : i32
    scf.if %290 {
      %c0_116 = arith.constant 0 : index
      %c0_117 = arith.constant 0 : index
      %c0_118 = arith.constant 0 : index
      %291 = vector.load %arg19[%c0_116, %c0_117, %c0_118] : memref<1x8x64xf32, #tpu.memory_space<vmem>>, vector<1x8x64xf32>
      %292 = vector.shape_cast %291 : vector<1x8x64xf32> to vector<8x64xf32>
      %293 = vector.shape_cast %286 : vector<8x64xf32> to vector<1x8x64xf32>
      tpu.vector_store %arg19[%c0_116, %c0_117, %c0_118], %293 {strides = array<i32>} : memref<1x8x64xf32, #tpu.memory_space<vmem>>, vector<1x8x64xf32>,
      %c0_119 = arith.constant 0 : index
      %c0_120 = arith.constant 0 : index
      %294 = vector.load %arg17[%c0_119, %c0_120] : memref<64x128xf32, #tpu.memory_space<vmem>>, vector<64x128xf32>
      %cst_121 = arith.constant dense<0.000000e+00> : vector<8x128xf32>
      %295 = tpu.matmul %286, %294, %cst_121 {dimension_numbers = #tpu.dot_dimension_numbers<[1], [0], [0], [1], [0, 0, 1, 1], [], []>} : vector<8x64xf32>, vector<64x128xf32>, vector<8x128xf32> -> vector<8x128xf32>
      %c0_122 = arith.constant 0 : index
      %c0_123 = arith.constant 0 : index
      %296 = vector.load %arg18[%c0_122, %c0_123] : memref<1x128xf32, #tpu.memory_space<vmem>>, vector<1x128xf32>
      %297 = vector.broadcast %296 : vector<1x128xf32> to vector<8x128xf32>
      %298 = arith.addf %295, %297 : vector<8x128xf32>
      %c0_124 = arith.constant 0 : index
      %c0_125 = arith.constant 0 : index
      %c0_126 = arith.constant 0 : index
      %299 = vector.load %arg20[%c0_124, %c0_125, %c0_126] : memref<1x8x128xf32, #tpu.memory_space<vmem>>, vector<1x8x128xf32>
      %300 = vector.shape_cast %299 : vector<1x8x128xf32> to vector<8x128xf32>
      %301 = vector.shape_cast %298 : vector<8x128xf32> to vector<1x8x128xf32>
      tpu.vector_store %arg20[%c0_124, %c0_125, %c0_126], %301 {strides = array<i32>} : memref<1x8x128xf32, #tpu.memory_space<vmem>>, vector<1x8x128xf32>,
    } else {
    }
    return
  }
  func.func @transform_0(%arg0: i32, %arg1: i32) -> (i32, i32, i32) {
    %c0_i32 = arith.constant 0 : i32
    %c0_i32_0 = arith.constant 0 : i32
    %c0_i32_1 = arith.constant 0 : i32
    return %arg0, %c0_i32, %c0_i32_0 : i32, i32, i32
  }
  func.func @transform_1(%arg0: i32, %arg1: i32) -> (i32, i32, i32) {
    %c0_i32 = arith.constant 0 : i32
    %c0_i32_0 = arith.constant 0 : i32
    %c0_i32_1 = arith.constant 0 : i32
    return %arg0, %c0_i32, %c0_i32_0 : i32, i32, i32
  }
  func.func @transform_2(%arg0: i32, %arg1: i32) -> (i32, i32, i32) {
    %c0_i32 = arith.constant 0 : i32
    %c0_i32_0 = arith.constant 0 : i32
    %c0_i32_1 = arith.constant 0 : i32
    %c0_i32_2 = arith.constant 0 : i32
    return %c0_i32, %c0_i32_0, %c0_i32_1 : i32, i32, i32
  }
  func.func @transform_3(%arg0: i32, %arg1: i32) -> (i32, i32, i32) {
    %c0_i32 = arith.constant 0 : i32
    %c0_i32_0 = arith.constant 0 : i32
    %c0_i32_1 = arith.constant 0 : i32
    return %arg1, %c0_i32, %c0_i32_0 : i32, i32, i32
  }
  func.func @transform_4(%arg0: i32, %arg1: i32) -> (i32, i32, i32) {
    %c0_i32 = arith.constant 0 : i32
    %c0_i32_0 = arith.constant 0 : i32
    %c0_i32_1 = arith.constant 0 : i32
    return %arg1, %c0_i32, %c0_i32_0 : i32, i32, i32
  }
  func.func @transform_5(%arg0: i32, %arg1: i32) -> (i32, i32, i32) {
    %c0_i32 = arith.constant 0 : i32
    %c0_i32_0 = arith.constant 0 : i32
    %c0_i32_1 = arith.constant 0 : i32
    return %arg1, %c0_i32, %c0_i32_0 : i32, i32, i32
  }
  func.func @transform_6(%arg0: i32, %arg1: i32) -> (i32, i32, i32) {
    %c0_i32 = arith.constant 0 : i32
    %c0_i32_0 = arith.constant 0 : i32
    %c0_i32_1 = arith.constant 0 : i32
    return %arg1, %c0_i32, %c0_i32_0 : i32, i32, i32
  }
  func.func @transform_7(%arg0: i32, %arg1: i32) -> (i32, i32, i32) {
    %c0_i32 = arith.constant 0 : i32
    %c0_i32_0 = arith.constant 0 : i32
    %c0_i32_1 = arith.constant 0 : i32
    return %arg1, %c0_i32, %c0_i32_0 : i32, i32, i32
  }
  func.func @transform_8(%arg0: i32, %arg1: i32) -> (i32, i32, i32) {
    %c0_i32 = arith.constant 0 : i32
    %c0_i32_0 = arith.constant 0 : i32
    %c0_i32_1 = arith.constant 0 : i32
    return %arg1, %c0_i32, %c0_i32_0 : i32, i32, i32
  }
  func.func @transform_9(%arg0: i32, %arg1: i32) -> (i32, i32, i32) {
    %c0_i32 = arith.constant 0 : i32
    %c0_i32_0 = arith.constant 0 : i32
    %c0_i32_1 = arith.constant 0 : i32
    return %arg1, %c0_i32, %c0_i32_0 : i32, i32, i32
  }
  func.func @transform_10(%arg0: i32, %arg1: i32) -> (i32, i32, i32) {
    %c0_i32 = arith.constant 0 : i32
    %c0_i32_0 = arith.constant 0 : i32
    %c0_i32_1 = arith.constant 0 : i32
    return %arg1, %c0_i32, %c0_i32_0 : i32, i32, i32
  }
  func.func @transform_11(%arg0: i32, %arg1: i32) -> (i32, i32, i32) {
    %c0_i32 = arith.constant 0 : i32
    %c0_i32_0 = arith.constant 0 : i32
    %c0_i32_1 = arith.constant 0 : i32
    return %arg1, %c0_i32, %c0_i32_0 : i32, i32, i32
  }
  func.func @transform_12(%arg0: i32, %arg1: i32) -> (i32, i32, i32) {
    %c0_i32 = arith.constant 0 : i32
    %c0_i32_0 = arith.constant 0 : i32
    %c0_i32_1 = arith.constant 0 : i32
    return %arg1, %c0_i32, %c0_i32_0 : i32, i32, i32
  }
  func.func @transform_13(%arg0: i32, %arg1: i32) -> (i32, i32, i32) {
    %c0_i32 = arith.constant 0 : i32
    %c0_i32_0 = arith.constant 0 : i32
    %c0_i32_1 = arith.constant 0 : i32
    return %arg1, %c0_i32, %c0_i32_0 : i32, i32, i32
  }
  func.func @transform_14(%arg0: i32, %arg1: i32) -> (i32, i32, i32) {
    %c0_i32 = arith.constant 0 : i32
    %c0_i32_0 = arith.constant 0 : i32
    %c0_i32_1 = arith.constant 0 : i32
    return %arg1, %c0_i32, %c0_i32_0 : i32, i32, i32
  }
  func.func @transform_15(%arg0: i32, %arg1: i32) -> (i32, i32) {
    %c0_i32 = arith.constant 0 : i32
    %c0_i32_0 = arith.constant 0 : i32
    %c0_i32_1 = arith.constant 0 : i32
    return %c0_i32, %c0_i32_0 : i32, i32
  }
  func.func @transform_16(%arg0: i32, %arg1: i32) -> (i32, i32) {
    %c0_i32 = arith.constant 0 : i32
    %c0_i32_0 = arith.constant 0 : i32
    %c0_i32_1 = arith.constant 0 : i32
    return %c0_i32, %c0_i32_0 : i32, i32
  }
  func.func @transform_17(%arg0: i32, %arg1: i32) -> (i32, i32, i32) {
    %c0_i32 = arith.constant 0 : i32
    %c0_i32_0 = arith.constant 0 : i32
    %c0_i32_1 = arith.constant 0 : i32
    return %arg0, %c0_i32, %c0_i32_0 : i32, i32, i32
  }
  func.func @transform_18(%arg0: i32, %arg1: i32) -> (i32, i32, i32) {
    %c0_i32 = arith.constant 0 : i32
    %c0_i32_0 = arith.constant 0 : i32
    %c0_i32_1 = arith.constant 0 : i32
    return %arg0, %c0_i32, %c0_i32_0 : i32, i32, i32
  }
}

</mosaic_0001>

<llo_original>
// kernel: phoneme_decoder_forward.1
$region0: #{phoneme_decoder_forward.1}
  #allocation0 [shape = 'u32[]', space=smem, size = 0x4, offset = 0x4, fixed_abs, tag = 'smem constant byte address 0x4 - core index']
  #allocation1 [shape = 'u32[144,128]{1,0:T(1,128)}', space=vmem, size = 0x12000, scoped, tag = 'internal scratch']
  #allocation2 [shape = 'f32[8,64]{1,0:T(8,128)}', space=vmem, size = 0x1000, scoped, tag = 'scratch operand']
  %s0 = inlined_call_operand.vmem [shape: f32[2,8,64], index: 0, kind: input, shape index: {}]
  %s1 = inlined_call_operand.vmem [shape: f32[2,16,64], index: 1, kind: input, shape index: {}]
  %s2 = inlined_call_operand.vmem [shape: f32[1,1,16], index: 2, kind: input, shape index: {}]
  %s3 = inlined_call_operand.vmem [shape: f32[2,64,192], index: 3, kind: input, shape index: {}]
  %s4 = inlined_call_operand.hbm [shape: f32[2,1,192], index: 4, kind: input, shape index: {}]
  %s5 = inlined_call_operand.vmem [shape: f32[2,64,64], index: 5, kind: input, shape index: {}]
  %s6 = inlined_call_operand.vmem [shape: f32[2,64,64], index: 6, kind: input, shape index: {}]
  %s7 = inlined_call_operand.vmem [shape: f32[2,1,64], index: 7, kind: input, shape index: {}]
  %s8 = inlined_call_operand.hbm [shape: f32[2,64,128], index: 8, kind: input, shape index: {}]
  %s9 = inlined_call_operand.vmem [shape: f32[2,1,128], index: 9, kind: input, shape index: {}]
  %s10 = inlined_call_operand.hbm [shape: f32[2,64,64], index: 10, kind: input, shape index: {}]
  %s11 = inlined_call_operand.hbm [shape: f32[2,64,64], index: 11, kind: input, shape index: {}]
  %s12 = inlined_call_operand.hbm [shape: f32[2,1,64], index: 12, kind: input, shape index: {}]
  %s13 = inlined_call_operand.hbm [shape: f32[2,64,64], index: 13, kind: input, shape index: {}]
  %s14 = inlined_call_operand.vmem [shape: f32[2,9,64], index: 14, kind: input, shape index: {}]
  %s15 = inlined_call_operand.vmem [shape: f32[64,128], index: 15, kind: input, shape index: {}]
  %s16 = inlined_call_operand.hbm [shape: f32[1,128], index: 16, kind: input, shape index: {}]
  %s17 = inlined_call_operand.hbm [shape: f32[2,8,64], index: 17, kind: output, shape index: {0}]
  %s18 = inlined_call_operand.hbm [shape: f32[2,8,128], index: 18, kind: output, shape index: {1}]
  %19 = xla_tuple %s17, %s18
  %s20 = sld [smem:[#allocation0]]
  $region145: #{phoneme_decoder_forward.1} parent=0
    _
  %s22 = ssub.s32 1, %s20
  %s23 = scalar_select 0, %s22, %s20
  $region1: #{phoneme_decoder_forward.1} parent=0
    #allocation3 [shape = 'u8[2048]{0}', space=vmem, size = 0x800, scoped, tag = 'input window, operand 4']
    #allocation4 [shape = 's32[2]{0}', space=sflag, size = 0x8, scoped, tag = 'scoped memory for phoneme_decoder_forward.1']
    #allocation5 [shape = 's32[2]{0}', space=sflag, size = 0x8, scoped, tag = 'scoped memory for phoneme_decoder_forward.1']
    #allocation6 [shape = 'u8[65536]{0}', space=vmem, size = 0x10000, scoped, tag = 'input window, operand 8']
    #allocation7 [shape = 's32[2]{0}', space=sflag, size = 0x8, scoped, tag = 'scoped memory for phoneme_decoder_forward.1']
    #allocation8 [shape = 'u8[65536]{0}', space=vmem, size = 0x10000, scoped, tag = 'input window, operand 10']
    #allocation9 [shape = 'u8[65536]{0}', space=vmem, size = 0x10000, scoped, tag = 'input window, operand 11']
    #allocation10 [shape = 's32[2]{0}', space=sflag, size = 0x8, scoped, tag = 'scoped memory for phoneme_decoder_forward.1']
    #allocation11 [shape = 'u8[1024]{0}', space=vmem, size = 0x400, scoped, tag = 'input window, operand 12']
    #allocation12 [shape = 'u8[65536]{0}', space=vmem, size = 0x10000, scoped, tag = 'input window, operand 13']
    #allocation13 [shape = 's32[2]{0}', space=sflag, size = 0x8, scoped, tag = 'scoped memory for phoneme_decoder_forward.1']
    #allocation14 [shape = 'u8[512]{0}', space=vmem, size = 0x400, scoped, tag = 'input window, operand 16, single buffered']
    #allocation15 [shape = 'u8[8192]{0}', space=vmem, size = 0x2000, scoped, tag = 'output window, operand 0']
    #allocation16 [shape = 'u8[8192]{0}', space=vmem, size = 0x2000, scoped, tag = 'output window, operand 1']
    #allocation17 [shape = 's32[2]{0}', space=sflag, size = 0x8, scoped, tag = 'scoped memory for phoneme_decoder_forward.1']
    %24 = vsyncpa [#allocation4], 0
    %s25 = scalar_lea.sflag [#allocation4], 1
    %26 = vsyncpa %s25, 0
    %27 = vsyncpa [#allocation7], 0
    %s28 = scalar_lea.sflag [#allocation7], 1
    %29 = vsyncpa %s28, 0
    %30 = vsyncpa [#allocation10], 0
    %s31 = scalar_lea.sflag [#allocation10], 1
    %32 = vsyncpa %s31, 0
    %33 = vsyncpa [#allocation13], 0
    %s34 = scalar_lea.sflag [#allocation13], 1
    %35 = vsyncpa %s34, 0
    %36 = vsyncpa [#allocation5], 0
    %s37 = scalar_lea.sflag [#allocation5], 1
    %38 = vsyncpa %s37, 0
    %39 = vsyncpa [#allocation17], 0
    %s40 = scalar_lea.sflag [#allocation17], 1
    %41 = vsyncpa %s40, 0
    loop: start=0, step=1, limit=6
    $region2: #{phoneme_decoder_forward.1} parent=1 // loop_pre_header
      _
    $region3: #{phoneme_decoder_forward.1} parent=1 // loop_header
      %s43 = sphi 0, %s47
      %p44 = scmp.ge.s32.totalorder %s43, 6
      %s50 = sphi 0, %s62
      %s51 = sphi 0, %s58
      %s52 = sphi 0, %s50
      %s53 = sphi 0, %s51
      %s54 = sphi 0, %s52
      %s55 = sphi 0, %s53
      %s65 = sphi 0, %s67
      %s68 = sphi 0, %s65
      %s69 = sphi 0, %s68
      %s85 = sphi 0, %s69
      %s91 = sphi 0, %s93
      %s94 = sphi 0, %s91
      %s95 = sphi 0, %s94
      %s111 = sphi 0, %s95
      %s115 = sphi 0, %s115
      %s117 = sphi 0, %s115
      %s118 = sphi 0, %s117
      %s132 = sphi 0, %s118
      %s138 = sphi 0, %s140
      %s141 = sphi 0, %s138
      %s142 = sphi 0, %s141
      %s158 = sphi 0, %s142
      %s164 = sphi 0, %s166
      %s167 = sphi 0, %s164
      %s168 = sphi 0, %s167
      %s184 = sphi 0, %s168
      %s190 = sphi 0, %s192
      %s193 = sphi 0, %s190
      %s194 = sphi 0, %s193
      %s210 = sphi 0, %s194
      %s216 = sphi 0, %s218
      %s219 = sphi 0, %s216
      %s220 = sphi 0, %s219
      %s236 = sphi 0, %s220
      %s242 = sphi 0, %s244
      %s245 = sphi 0, %s242
      %s246 = sphi 0, %s245
      %s262 = sphi 0, %s246
      %s268 = sphi 0, %s270
      %s271 = sphi 0, %s268
      %s272 = sphi 0, %s271
      %s288 = sphi 0, %s272
      %s294 = sphi 0, %s296
      %s297 = sphi 0, %s294
      %s298 = sphi 0, %s297
      %s314 = sphi 0, %s298
      %s320 = sphi 0, %s322
      %s323 = sphi 0, %s320
      %s324 = sphi 0, %s323
      %s340 = sphi 0, %s324
      %s346 = sphi 0, %s348
      %s349 = sphi 0, %s346
      %s350 = sphi 0, %s349
      %s366 = sphi 0, %s350
      %s372 = sphi 0, %s374
      %s375 = sphi 0, %s372
      %s376 = sphi 0, %s375
      %s392 = sphi 0, %s376
      %s398 = sphi 0, %s400
      %s401 = sphi 0, %s398
      %s402 = sphi 0, %s401
      %s418 = sphi 0, %s402
      %s424 = sphi 0, %s426
      %s427 = sphi 0, %s424
      %s428 = sphi 0, %s427
      %s444 = sphi 0, %s428
      %s448 = sphi 0, %s448
      %s450 = sphi 0, %s448
      %s451 = sphi 0, %s450
      %s465 = sphi 0, %s451
      %s469 = sphi 0, %s469
      %s471 = sphi 0, %s469
      %s472 = sphi 0, %s471
      %s486 = sphi 0, %s472
      %s492 = sphi 0, %s494
      %s495 = sphi 0, %s492
      %s496 = sphi 0, %s495
      %s512 = sphi 0, %s496
      %s518 = sphi 0, %s520
      %s521 = sphi 0, %s518
      %s522 = sphi 0, %s521
      %s538 = sphi 0, %s522
    $region4: #{phoneme_decoder_forward.1} parent=1 // loop_header_branch
      %46 = sbr.rel (%p44) target = $region8
    $region5: #{phoneme_decoder_forward.1} parent=1 // loop_body
      %s48 = ssub.s32 %s43, 1
      %s49 = ssub.s32 %s43, 2
      %s56 = sadd.s32 1, %s51
      %p57 = scmp.ge.s32.totalorder %s56, 2
      %s58 = scalar_select %p57, 0, %s56
      %s59 = sadd.s32 1, %s50
      %s60 = scalar_select %p57, %s59, %s50
      %p61 = scmp.ge.s32.totalorder %s60, 2
      %s62 = scalar_select %p61, 0, %s60
      %s63 = ssub.s32 %s50, %s62
      %p64 = scmp.eq.s32.totalorder %s63, 0
      %s66 = sadd.s32 %s65, 1
      %s67 = scalar_select %p64, %s65, %s66
      %p70 = pneg %p64
      %p71 = scmp.eq.s32.totalorder %s43, 3
      %p72 = por %p70, %p71
      %p73 = scmp.ne.s32.totalorder %s65, %s68
      %p74 = scmp.eq.s32.totalorder %s43, 0
      %p75 = por %p73, %p74
      %p76 = scmp.ne.s32.totalorder %s65, %s68
      %p77 = scmp.eq.s32.totalorder %s48, 3
      %p78 = por %p76, %p77
      %p79 = scmp.ne.s32.totalorder %s68, %s69
      %p80 = scmp.eq.s32.totalorder %s48, 0
      %p81 = por %p79, %p80
      %p82 = scmp.ne.s32.totalorder %s68, %s69
      %p83 = scmp.eq.s32.totalorder %s49, 3
      %p84 = por %p82, %p83
      %p86 = scmp.ne.s32.totalorder %s69, %s85
      %p87 = scmp.eq.s32.totalorder %s49, 0
      %p88 = por %p86, %p87
      %s89 = ssub.s32 %s50, %s62
      %p90 = scmp.eq.s32.totalorder %s89, 0
      %s92 = sadd.s32 %s91, 1
      %s93 = scalar_select %p90, %s91, %s92
      %p96 = pneg %p90
      %p97 = scmp.eq.s32.totalorder %s43, 3
      %p98 = por %p96, %p97
      %p99 = scmp.ne.s32.totalorder %s91, %s94
      %p100 = scmp.eq.s32.totalorder %s43, 0
      %p101 = por %p99, %p100
      %p102 = scmp.ne.s32.totalorder %s91, %s94
      %p103 = scmp.eq.s32.totalorder %s48, 3
      %p104 = por %p102, %p103
      %p105 = scmp.ne.s32.totalorder %s94, %s95
      %p106 = scmp.eq.s32.totalorder %s48, 0
      %p107 = por %p105, %p106
      %p108 = scmp.ne.s32.totalorder %s94, %s95
      %p109 = scmp.eq.s32.totalorder %s49, 3
      %p110 = por %p108, %p109
      %p112 = scmp.ne.s32.totalorder %s95, %s111
      %p113 = scmp.eq.s32.totalorder %s49, 0
      %p114 = por %p112, %p113
      %s116 = sadd.s32 %s115, 1
      %p119 = scmp.eq.s32.totalorder %s43, 3
      %p120 = scmp.ne.s32.totalorder %s115, %s117
      %p121 = scmp.eq.s32.totalorder %s43, 0
      %p122 = por %p120, %p121
      %p123 = scmp.ne.s32.totalorder %s115, %s117
      %p124 = scmp.eq.s32.totalorder %s48, 3
      %p125 = por %p123, %p124
      %p126 = scmp.ne.s32.totalorder %s117, %s118
      %p127 = scmp.eq.s32.totalorder %s48, 0
      %p128 = por %p126, %p127
      %p129 = scmp.ne.s32.totalorder %s117, %s118
      %p130 = scmp.eq.s32.totalorder %s49, 3
      %p131 = por %p129, %p130
      %p133 = scmp.ne.s32.totalorder %s118, %s132
      %p134 = scmp.eq.s32.totalorder %s49, 0
      %p135 = por %p133, %p134
      %s136 = ssub.s32 %s51, %s58
      %p137 = scmp.eq.s32.totalorder %s136, 0
      %s139 = sadd.s32 %s138, 1
      %s140 = scalar_select %p137, %s138, %s139
      %p143 = pneg %p137
      %p144 = scmp.eq.s32.totalorder %s43, 3
      %p145 = por %p143, %p144
      %p146 = scmp.ne.s32.totalorder %s138, %s141
      %p147 = scmp.eq.s32.totalorder %s43, 0
      %p148 = por %p146, %p147
      %p149 = scmp.ne.s32.totalorder %s138, %s141
      %p150 = scmp.eq.s32.totalorder %s48, 3
      %p151 = por %p149, %p150
      %p152 = scmp.ne.s32.totalorder %s141, %s142
      %p153 = scmp.eq.s32.totalorder %s48, 0
      %p154 = por %p152, %p153
      %p155 = scmp.ne.s32.totalorder %s141, %s142
      %p156 = scmp.eq.s32.totalorder %s49, 3
      %p157 = por %p155, %p156
      %p159 = scmp.ne.s32.totalorder %s142, %s158
      %p160 = scmp.eq.s32.totalorder %s49, 0
      %p161 = por %p159, %p160
      %s162 = ssub.s32 %s51, %s58
      %p163 = scmp.eq.s32.totalorder %s162, 0
      %s165 = sadd.s32 %s164, 1
      %s166 = scalar_select %p163, %s164, %s165
      %p169 = pneg %p163
      %p170 = scmp.eq.s32.totalorder %s43, 3
      %p171 = por %p169, %p170
      %p172 = scmp.ne.s32.totalorder %s164, %s167
      %p173 = scmp.eq.s32.totalorder %s43, 0
      %p174 = por %p172, %p173
      %p175 = scmp.ne.s32.totalorder %s164, %s167
      %p176 = scmp.eq.s32.totalorder %s48, 3
      %p177 = por %p175, %p176
      %p178 = scmp.ne.s32.totalorder %s167, %s168
      %p179 = scmp.eq.s32.totalorder %s48, 0
      %p180 = por %p178, %p179
      %p181 = scmp.ne.s32.totalorder %s167, %s168
      %p182 = scmp.eq.s32.totalorder %s49, 3
      %p183 = por %p181, %p182
      %p185 = scmp.ne.s32.totalorder %s168, %s184
      %p186 = scmp.eq.s32.totalorder %s49, 0
      %p187 = por %p185, %p186
      %s188 = ssub.s32 %s51, %s58
      %p189 = scmp.eq.s32.totalorder %s188, 0
      %s191 = sadd.s32 %s190, 1
      %s192 = scalar_select %p189, %s190, %s191
      %p195 = pneg %p189
      %p196 = scmp.eq.s32.totalorder %s43, 3
      %p197 = por %p195, %p196
      %p198 = scmp.ne.s32.totalorder %s190, %s193
      %p199 = scmp.eq.s32.totalorder %s43, 0
      %p200 = por %p198, %p199
      %p201 = scmp.ne.s32.totalorder %s190, %s193
      %p202 = scmp.eq.s32.totalorder %s48, 3
      %p203 = por %p201, %p202
      %p204 = scmp.ne.s32.totalorder %s193, %s194
      %p205 = scmp.eq.s32.totalorder %s48, 0
      %p206 = por %p204, %p205
      %p207 = scmp.ne.s32.totalorder %s193, %s194
      %p208 = scmp.eq.s32.totalorder %s49, 3
      %p209 = por %p207, %p208
      %p211 = scmp.ne.s32.totalorder %s194, %s210
      %p212 = scmp.eq.s32.totalorder %s49, 0
      %p213 = por %p211, %p212
      %s214 = ssub.s32 %s51, %s58
      %p215 = scmp.eq.s32.totalorder %s214, 0
      %s217 = sadd.s32 %s216, 1
      %s218 = scalar_select %p215, %s216, %s217
      %p221 = pneg %p215
      %p222 = scmp.eq.s32.totalorder %s43, 3
      %p223 = por %p221, %p222
      %p224 = scmp.ne.s32.totalorder %s216, %s219
      %p225 = scmp.eq.s32.totalorder %s43, 0
      %p226 = por %p224, %p225
      %p227 = scmp.ne.s32.totalorder %s216, %s219
      %p228 = scmp.eq.s32.totalorder %s48, 3
      %p229 = por %p227, %p228
      %p230 = scmp.ne.s32.totalorder %s219, %s220
      %p231 = scmp.eq.s32.totalorder %s48, 0
      %p232 = por %p230, %p231
      %p233 = scmp.ne.s32.totalorder %s219, %s220
      %p234 = scmp.eq.s32.totalorder %s49, 3
      %p235 = por %p233, %p234
      %p237 = scmp.ne.s32.totalorder %s220, %s236
      %p238 = scmp.eq.s32.totalorder %s49, 0
      %p239 = por %p237, %p238
      %s240 = ssub.s32 %s51, %s58
      %p241 = scmp.eq.s32.totalorder %s240, 0
      %s243 = sadd.s32 %s242, 1
      %s244 = scalar_select %p241, %s242, %s243
      %p247 = pneg %p241
      %p248 = scmp.eq.s32.totalorder %s43, 3
      %p249 = por %p247, %p248
      %p250 = scmp.ne.s32.totalorder %s242, %s245
      %p251 = scmp.eq.s32.totalorder %s43, 0
      %p252 = por %p250, %p251
      %p253 = scmp.ne.s32.totalorder %s242, %s245
      %p254 = scmp.eq.s32.totalorder %s48, 3
      %p255 = por %p253, %p254
      %p256 = scmp.ne.s32.totalorder %s245, %s246
      %p257 = scmp.eq.s32.totalorder %s48, 0
      %p258 = por %p256, %p257
      %p259 = scmp.ne.s32.totalorder %s245, %s246
      %p260 = scmp.eq.s32.totalorder %s49, 3
      %p261 = por %p259, %p260
      %p263 = scmp.ne.s32.totalorder %s246, %s262
      %p264 = scmp.eq.s32.totalorder %s49, 0
      %p265 = por %p263, %p264
      %s266 = ssub.s32 %s51, %s58
      %p267 = scmp.eq.s32.totalorder %s266, 0
      %s269 = sadd.s32 %s268, 1
      %s270 = scalar_select %p267, %s268, %s269
      %p273 = pneg %p267
      %p274 = scmp.eq.s32.totalorder %s43, 3
      %p275 = por %p273, %p274
      %p276 = scmp.ne.s32.totalorder %s268, %s271
      %p277 = scmp.eq.s32.totalorder %s43, 0
      %p278 = por %p276, %p277
      %p279 = scmp.ne.s32.totalorder %s268, %s271
      %p280 = scmp.eq.s32.totalorder %s48, 3
      %p281 = por %p279, %p280
      %p282 = scmp.ne.s32.totalorder %s271, %s272
      %p283 = scmp.eq.s32.totalorder %s48, 0
      %p284 = por %p282, %p283
      %p285 = scmp.ne.s32.totalorder %s271, %s272
      %p286 = scmp.eq.s32.totalorder %s49, 3
      %p287 = por %p285, %p286
      %p289 = scmp.ne.s32.totalorder %s272, %s288
      %p290 = scmp.eq.s32.totalorder %s49, 0
      %p291 = por %p289, %p290
      %s292 = ssub.s32 %s51, %s58
      %p293 = scmp.eq.s32.totalorder %s292, 0
      %s295 = sadd.s32 %s294, 1
      %s296 = scalar_select %p293, %s294, %s295
      %p299 = pneg %p293
      %p300 = scmp.eq.s32.totalorder %s43, 3
      %p301 = por %p299, %p300
      %p302 = scmp.ne.s32.totalorder %s294, %s297
      %p303 = scmp.eq.s32.totalorder %s43, 0
      %p304 = por %p302, %p303
      %p305 = scmp.ne.s32.totalorder %s294, %s297
      %p306 = scmp.eq.s32.totalorder %s48, 3
      %p307 = por %p305, %p306
      %p308 = scmp.ne.s32.totalorder %s297, %s298
      %p309 = scmp.eq.s32.totalorder %s48, 0
      %p310 = por %p308, %p309
      %p311 = scmp.ne.s32.totalorder %s297, %s298
      %p312 = scmp.eq.s32.totalorder %s49, 3
      %p313 = por %p311, %p312
      %p315 = scmp.ne.s32.totalorder %s298, %s314
      %p316 = scmp.eq.s32.totalorder %s49, 0
      %p317 = por %p315, %p316
      %s318 = ssub.s32 %s51, %s58
      %p319 = scmp.eq.s32.totalorder %s318, 0
      %s321 = sadd.s32 %s320, 1
      %s322 = scalar_select %p319, %s320, %s321
      %p325 = pneg %p319
      %p326 = scmp.eq.s32.totalorder %s43, 3
      %p327 = por %p325, %p326
      %p328 = scmp.ne.s32.totalorder %s320, %s323
      %p329 = scmp.eq.s32.totalorder %s43, 0
      %p330 = por %p328, %p329
      %p331 = scmp.ne.s32.totalorder %s320, %s323
      %p332 = scmp.eq.s32.totalorder %s48, 3
      %p333 = por %p331, %p332
      %p334 = scmp.ne.s32.totalorder %s323, %s324
      %p335 = scmp.eq.s32.totalorder %s48, 0
      %p336 = por %p334, %p335
      %p337 = scmp.ne.s32.totalorder %s323, %s324
      %p338 = scmp.eq.s32.totalorder %s49, 3
      %p339 = por %p337, %p338
      %p341 = scmp.ne.s32.totalorder %s324, %s340
      %p342 = scmp.eq.s32.totalorder %s49, 0
      %p343 = por %p341, %p342
      %s344 = ssub.s32 %s51, %s58
      %p345 = scmp.eq.s32.totalorder %s344, 0
      %s347 = sadd.s32 %s346, 1
      %s348 = scalar_select %p345, %s346, %s347
      %p351 = pneg %p345
      %p352 = scmp.eq.s32.totalorder %s43, 3
      %p353 = por %p351, %p352
      %p354 = scmp.ne.s32.totalorder %s346, %s349
      %p355 = scmp.eq.s32.totalorder %s43, 0
      %p356 = por %p354, %p355
      %p357 = scmp.ne.s32.totalorder %s346, %s349
      %p358 = scmp.eq.s32.totalorder %s48, 3
      %p359 = por %p357, %p358
      %p360 = scmp.ne.s32.totalorder %s349, %s350
      %p361 = scmp.eq.s32.totalorder %s48, 0
      %p362 = por %p360, %p361
      %p363 = scmp.ne.s32.totalorder %s349, %s350
      %p364 = scmp.eq.s32.totalorder %s49, 3
      %p365 = por %p363, %p364
      %p367 = scmp.ne.s32.totalorder %s350, %s366
      %p368 = scmp.eq.s32.totalorder %s49, 0
      %p369 = por %p367, %p368
      %s370 = ssub.s32 %s51, %s58
      %p371 = scmp.eq.s32.totalorder %s370, 0
      %s373 = sadd.s32 %s372, 1
      %s374 = scalar_select %p371, %s372, %s373
      %p377 = pneg %p371
      %p378 = scmp.eq.s32.totalorder %s43, 3
      %p379 = por %p377, %p378
      %p380 = scmp.ne.s32.totalorder %s372, %s375
      %p381 = scmp.eq.s32.totalorder %s43, 0
      %p382 = por %p380, %p381
      %p383 = scmp.ne.s32.totalorder %s372, %s375
      %p384 = scmp.eq.s32.totalorder %s48, 3
      %p385 = por %p383, %p384
      %p386 = scmp.ne.s32.totalorder %s375, %s376
      %p387 = scmp.eq.s32.totalorder %s48, 0
      %p388 = por %p386, %p387
      %p389 = scmp.ne.s32.totalorder %s375, %s376
      %p390 = scmp.eq.s32.totalorder %s49, 3
      %p391 = por %p389, %p390
      %p393 = scmp.ne.s32.totalorder %s376, %s392
      %p394 = scmp.eq.s32.totalorder %s49, 0
      %p395 = por %p393, %p394
      %s396 = ssub.s32 %s51, %s58
      %p397 = scmp.eq.s32.totalorder %s396, 0
      %s399 = sadd.s32 %s398, 1
      %s400 = scalar_select %p397, %s398, %s399
      %p403 = pneg %p397
      %p404 = scmp.eq.s32.totalorder %s43, 3
      %p405 = por %p403, %p404
      %p406 = scmp.ne.s32.totalorder %s398, %s401
      %p407 = scmp.eq.s32.totalorder %s43, 0
      %p408 = por %p406, %p407
      %p409 = scmp.ne.s32.totalorder %s398, %s401
      %p410 = scmp.eq.s32.totalorder %s48, 3
      %p411 = por %p409, %p410
      %p412 = scmp.ne.s32.totalorder %s401, %s402
      %p413 = scmp.eq.s32.totalorder %s48, 0
      %p414 = por %p412, %p413
      %p415 = scmp.ne.s32.totalorder %s401, %s402
      %p416 = scmp.eq.s32.totalorder %s49, 3
      %p417 = por %p415, %p416
      %p419 = scmp.ne.s32.totalorder %s402, %s418
      %p420 = scmp.eq.s32.totalorder %s49, 0
      %p421 = por %p419, %p420
      %s422 = ssub.s32 %s51, %s58
      %p423 = scmp.eq.s32.totalorder %s422, 0
      %s425 = sadd.s32 %s424, 1
      %s426 = scalar_select %p423, %s424, %s425
      %p429 = pneg %p423
      %p430 = scmp.eq.s32.totalorder %s43, 3
      %p431 = por %p429, %p430
      %p432 = scmp.ne.s32.totalorder %s424, %s427
      %p433 = scmp.eq.s32.totalorder %s43, 0
      %p434 = por %p432, %p433
      %p435 = scmp.ne.s32.totalorder %s424, %s427
      %p436 = scmp.eq.s32.totalorder %s48, 3
      %p437 = por %p435, %p436
      %p438 = scmp.ne.s32.totalorder %s427, %s428
      %p439 = scmp.eq.s32.totalorder %s48, 0
      %p440 = por %p438, %p439
      %p441 = scmp.ne.s32.totalorder %s427, %s428
      %p442 = scmp.eq.s32.totalorder %s49, 3
      %p443 = por %p441, %p442
      %p445 = scmp.ne.s32.totalorder %s428, %s444
      %p446 = scmp.eq.s32.totalorder %s49, 0
      %p447 = por %p445, %p446
      %s449 = sadd.s32 %s448, 1
      %p452 = scmp.eq.s32.totalorder %s43, 3
      %p453 = scmp.ne.s32.totalorder %s448, %s450
      %p454 = scmp.eq.s32.totalorder %s43, 0
      %p455 = por %p453, %p454
      %p456 = scmp.ne.s32.totalorder %s448, %s450
      %p457 = scmp.eq.s32.totalorder %s48, 3
      %p458 = por %p456, %p457
      %p459 = scmp.ne.s32.totalorder %s450, %s451
      %p460 = scmp.eq.s32.totalorder %s48, 0
      %p461 = por %p459, %p460
      %p462 = scmp.ne.s32.totalorder %s450, %s451
      %p463 = scmp.eq.s32.totalorder %s49, 3
      %p464 = por %p462, %p463
      %p466 = scmp.ne.s32.totalorder %s451, %s465
      %p467 = scmp.eq.s32.totalorder %s49, 0
      %p468 = por %p466, %p467
      %s470 = sadd.s32 %s469, 1
      %p473 = scmp.eq.s32.totalorder %s43, 3
      %p474 = scmp.ne.s32.totalorder %s469, %s471
      %p475 = scmp.eq.s32.totalorder %s43, 0
      %p476 = por %p474, %p475
      %p477 = scmp.ne.s32.totalorder %s469, %s471
      %p478 = scmp.eq.s32.totalorder %s48, 3
      %p479 = por %p477, %p478
      %p480 = scmp.ne.s32.totalorder %s471, %s472
      %p481 = scmp.eq.s32.totalorder %s48, 0
      %p482 = por %p480, %p481
      %p483 = scmp.ne.s32.totalorder %s471, %s472
      %p484 = scmp.eq.s32.totalorder %s49, 3
      %p485 = por %p483, %p484
      %p487 = scmp.ne.s32.totalorder %s472, %s486
      %p488 = scmp.eq.s32.totalorder %s49, 0
      %p489 = por %p487, %p488
      %s490 = ssub.s32 %s50, %s62
      %p491 = scmp.eq.s32.totalorder %s490, 0
      %s493 = sadd.s32 %s492, 1
      %s494 = scalar_select %p491, %s492, %s493
      %p497 = pneg %p491
      %p498 = scmp.eq.s32.totalorder %s43, 3
      %p499 = por %p497, %p498
      %p500 = scmp.ne.s32.totalorder %s492, %s495
      %p501 = scmp.eq.s32.totalorder %s43, 0
      %p502 = por %p500, %p501
      %p503 = scmp.ne.s32.totalorder %s492, %s495
      %p504 = scmp.eq.s32.totalorder %s48, 3
      %p505 = por %p503, %p504
      %p506 = scmp.ne.s32.totalorder %s495, %s496
      %p507 = scmp.eq.s32.totalorder %s48, 0
      %p508 = por %p506, %p507
      %p509 = scmp.ne.s32.totalorder %s495, %s496
      %p510 = scmp.eq.s32.totalorder %s49, 3
      %p511 = por %p509, %p510
      %p513 = scmp.ne.s32.totalorder %s496, %s512
      %p514 = scmp.eq.s32.totalorder %s49, 0
      %p515 = por %p513, %p514
      %s516 = ssub.s32 %s50, %s62
      %p517 = scmp.eq.s32.totalorder %s516, 0
      %s519 = sadd.s32 %s518, 1
      %s520 = scalar_select %p517, %s518, %s519
      %p523 = pneg %p517
      %p524 = scmp.eq.s32.totalorder %s43, 3
      %p525 = por %p523, %p524
      %p526 = scmp.ne.s32.totalorder %s518, %s521
      %p527 = scmp.eq.s32.totalorder %s43, 0
      %p528 = por %p526, %p527
      %p529 = scmp.ne.s32.totalorder %s518, %s521
      %p530 = scmp.eq.s32.totalorder %s48, 3
      %p531 = por %p529, %p530
      %p532 = scmp.ne.s32.totalorder %s521, %s522
      %p533 = scmp.eq.s32.totalorder %s48, 0
      %p534 = por %p532, %p533
      %p535 = scmp.ne.s32.totalorder %s521, %s522
      %p536 = scmp.eq.s32.totalorder %s49, 3
      %p537 = por %p535, %p536
      %p539 = scmp.ne.s32.totalorder %s522, %s538
      %p540 = scmp.eq.s32.totalorder %s49, 0
      %p541 = por %p539, %p540
      %p542 = scmp.le.s32.totalorder 1, %s43
      %p543 = scmp.lt.s32.totalorder %s43, 5
      %p544 = pnand %p542, %p543
      %p545 = pneg %p544
      // Predicated region
      $region9: #{phoneme_decoder_forward.1} parent=5 // pred_check
        _
      $region10: #{phoneme_decoder_forward.1} parent=5 // pred_check_branch
        %547 = sbr.rel (%p544) target = $region12
      $region11: #{phoneme_decoder_forward.1} parent=5 // pred_region
        %s548 = ssub.s32 %s43, 1
        // Predicated region
        $region13: #{phoneme_decoder_forward.1} parent=11 // pred_check
          %p549 = pneg %p128
        $region14: #{phoneme_decoder_forward.1} parent=11 // pred_check_branch
          %551 = sbr.rel (%p549) target = $region16
        $region15: #{phoneme_decoder_forward.1} parent=11 // pred_region
          _
        $region16: #{phoneme_decoder_forward.1} parent=11 // pred_fallthru
          _
        // Predicated region
        $region17: #{phoneme_decoder_forward.1} parent=11 // pred_check
          %p552 = pneg %p461
        $region18: #{phoneme_decoder_forward.1} parent=11 // pred_check_branch
          %554 = sbr.rel (%p552) target = $region20
        $region19: #{phoneme_decoder_forward.1} parent=11 // pred_region
          _
        $region20: #{phoneme_decoder_forward.1} parent=11 // pred_fallthru
          _
        // Predicated region
        $region21: #{phoneme_decoder_forward.1} parent=11 // pred_check
          %p555 = pneg %p482
        $region22: #{phoneme_decoder_forward.1} parent=11 // pred_check_branch
          %557 = sbr.rel (%p555) target = $region24
        $region23: #{phoneme_decoder_forward.1} parent=11 // pred_region
          %s559 = ssub.s32 16, 16
          %560 = vsyncadd [#allocation13], %s559
          %s562 = sshll.u32 [#allocation14], 4
          %s563 = int_to_ptr.vmem [resolvable:$true] %s562
          %565 = dma.hbm_to_vmem [thread:$0]  %s16, 16, %s563, [#allocation13]
        $region24: #{phoneme_decoder_forward.1} parent=11 // pred_fallthru
          _
      $region12: #{phoneme_decoder_forward.1} parent=5 // pred_fallthru
        _
      %p566 = scmp.lt.s32.totalorder %s43, 4
      // Predicated region
      $region25: #{phoneme_decoder_forward.1} parent=5 // pred_check
        %p567 = pneg %p566
      $region26: #{phoneme_decoder_forward.1} parent=5 // pred_check_branch
        %569 = sbr.rel (%p567) target = $region28
      $region27: #{phoneme_decoder_forward.1} parent=5 // pred_region
        // Predicated region
        $region29: #{phoneme_decoder_forward.1} parent=27 // pred_check
          %p570 = pneg %p75
        $region30: #{phoneme_decoder_forward.1} parent=27 // pred_check_branch
          %572 = sbr.rel (%p570) target = $region32
        $region31: #{phoneme_decoder_forward.1} parent=27 // pred_region
          %p573 = scmp.lt.s32.totalorder %s50, 1
          %s574 = scalar_select %p573, %s50, 1
          %s575 = smul.addr %s574, 8
          %s576 = scalar_lea.vmem %s0, %s575
        $region32: #{phoneme_decoder_forward.1} parent=27 // pred_fallthru
          _
        // Predicated region
        $region33: #{phoneme_decoder_forward.1} parent=27 // pred_check
          %p577 = pneg %p101
        $region34: #{phoneme_decoder_forward.1} parent=27 // pred_check_branch
          %579 = sbr.rel (%p577) target = $region36
        $region35: #{phoneme_decoder_forward.1} parent=27 // pred_region
          %p580 = scmp.lt.s32.totalorder %s50, 1
          %s581 = scalar_select %p580, %s50, 1
          %s582 = smul.addr %s581, 2
          %s583 = smul.addr %s582, 8
          %s584 = scalar_lea.vmem %s1, %s583
        $region36: #{phoneme_decoder_forward.1} parent=27 // pred_fallthru
          _
        // Predicated region
        $region37: #{phoneme_decoder_forward.1} parent=27 // pred_check
          %p585 = pneg %p148
        $region38: #{phoneme_decoder_forward.1} parent=27 // pred_check_branch
          %587 = sbr.rel (%p585) target = $region40
        $region39: #{phoneme_decoder_forward.1} parent=27 // pred_region
          %p588 = scmp.lt.s32.totalorder %s51, 1
          %s589 = scalar_select %p588, %s51, 1
          %s590 = smul.addr %s589, 16
          %s591 = smul.addr %s590, 8
          %s592 = scalar_lea.vmem %s3, %s591
        $region40: #{phoneme_decoder_forward.1} parent=27 // pred_fallthru
          _
        // Predicated region
        $region41: #{phoneme_decoder_forward.1} parent=27 // pred_check
          %p593 = pneg %p174
        $region42: #{phoneme_decoder_forward.1} parent=27 // pred_check_branch
          %595 = sbr.rel (%p593) target = $region44
        $region43: #{phoneme_decoder_forward.1} parent=27 // pred_region
          %s596 = sand.u32 %s164, 1
          %s597 = scalar_lea.sflag [#allocation4], %s596
          %s598 = sand.u32 %s164, 1
          %s599 = smul.addr %s598, 2
          %s600 = scalar_lea.vmem [#allocation3], %s599
          %s602 = ssub.s32 32, 32
          %603 = vsyncadd %s597, %s602
          %s604 = smul.addr %s51, 2
          %s605 = smul.addr %s604, 16
          %s606 = scalar_lea.hbm %s4, %s605
          %s608 = sshll.u32 %s600, 4
          %s609 = int_to_ptr.vmem [resolvable:$true] %s608
          %611 = dma.hbm_to_vmem [thread:$0]  %s606, 32, %s609, %s597
        $region44: #{phoneme_decoder_forward.1} parent=27 // pred_fallthru
          _
        // Predicated region
        $region45: #{phoneme_decoder_forward.1} parent=27 // pred_check
          %p612 = pneg %p200
        $region46: #{phoneme_decoder_forward.1} parent=27 // pred_check_branch
          %614 = sbr.rel (%p612) target = $region48
        $region47: #{phoneme_decoder_forward.1} parent=27 // pred_region
          %p615 = scmp.lt.s32.totalorder %s51, 1
          %s616 = scalar_select %p615, %s51, 1
          %s617 = smul.addr %s616, 8
          %s618 = smul.addr %s617, 8
          %s619 = scalar_lea.vmem %s5, %s618
        $region48: #{phoneme_decoder_forward.1} parent=27 // pred_fallthru
          _
        // Predicated region
        $region49: #{phoneme_decoder_forward.1} parent=27 // pred_check
          %p620 = pneg %p226
        $region50: #{phoneme_decoder_forward.1} parent=27 // pred_check_branch
          %622 = sbr.rel (%p620) target = $region52
        $region51: #{phoneme_decoder_forward.1} parent=27 // pred_region
          %p623 = scmp.lt.s32.totalorder %s51, 1
          %s624 = scalar_select %p623, %s51, 1
          %s625 = smul.addr %s624, 8
          %s626 = smul.addr %s625, 8
          %s627 = scalar_lea.vmem %s6, %s626
        $region52: #{phoneme_decoder_forward.1} parent=27 // pred_fallthru
          _
        // Predicated region
        $region53: #{phoneme_decoder_forward.1} parent=27 // pred_check
          %p628 = pneg %p252
        $region54: #{phoneme_decoder_forward.1} parent=27 // pred_check_branch
          %630 = sbr.rel (%p628) target = $region56
        $region55: #{phoneme_decoder_forward.1} parent=27 // pred_region
          %p631 = scmp.lt.s32.totalorder %s51, 1
          %s632 = scalar_select %p631, %s51, 1
          %s633 = scalar_lea.vmem %s7, %s632
        $region56: #{phoneme_decoder_forward.1} parent=27 // pred_fallthru
          _
        // Predicated region
        $region57: #{phoneme_decoder_forward.1} parent=27 // pred_check
          %p634 = pneg %p278
        $region58: #{phoneme_decoder_forward.1} parent=27 // pred_check_branch
          %636 = sbr.rel (%p634) target = $region60
        $region59: #{phoneme_decoder_forward.1} parent=27 // pred_region
          %s637 = sand.u32 %s43, 1
          %s638 = scalar_lea.sflag [#allocation7], %s637
          %s639 = sand.u32 %s268, 1
          %s640 = smul.addr %s639, 64
          %s641 = scalar_lea.vmem [#allocation6], %s640
          %s643 = ssub.s32 1024, 1024
          %644 = vsyncadd %s638, %s643
          %s645 = smul.addr %s51, 8
          %s646 = smul.addr %s645, 128
          %s647 = scalar_lea.hbm %s8, %s646
          %s648 = sshll.u32 %s641, 4
          %s649 = int_to_ptr.vmem [resolvable:$true] %s648
          %654 = dma.hbm_to_vmem [thread:$0]  %s647, 1024, %s649, %s638, 128, 128, 8
        $region60: #{phoneme_decoder_forward.1} parent=27 // pred_fallthru
          _
        // Predicated region
        $region61: #{phoneme_decoder_forward.1} parent=27 // pred_check
          %p655 = pneg %p304
        $region62: #{phoneme_decoder_forward.1} parent=27 // pred_check_branch
          %657 = sbr.rel (%p655) target = $region64
        $region63: #{phoneme_decoder_forward.1} parent=27 // pred_region
          %p658 = scmp.lt.s32.totalorder %s51, 1
          %s659 = scalar_select %p658, %s51, 1
          %s660 = scalar_lea.vmem %s9, %s659
        $region64: #{phoneme_decoder_forward.1} parent=27 // pred_fallthru
          _
        // Predicated region
        $region65: #{phoneme_decoder_forward.1} parent=27 // pred_check
          %p661 = pneg %p330
        $region66: #{phoneme_decoder_forward.1} parent=27 // pred_check_branch
          %663 = sbr.rel (%p661) target = $region68
        $region67: #{phoneme_decoder_forward.1} parent=27 // pred_region
          %s664 = sand.u32 %s43, 1
          %s665 = scalar_lea.sflag [#allocation7], %s664
          %s666 = sand.u32 %s320, 1
          %s667 = smul.addr %s666, 64
          %s668 = scalar_lea.vmem [#allocation8], %s667
          %s670 = ssub.s32 1024, 1024
          %671 = vsyncadd %s665, %s670
          %s672 = smul.addr %s51, 8
          %s673 = smul.addr %s672, 128
          %s674 = scalar_lea.hbm %s10, %s673
          %s675 = sshll.u32 %s668, 4
          %s676 = int_to_ptr.vmem [resolvable:$true] %s675
          %681 = dma.hbm_to_vmem [thread:$0]  %s674, 1024, %s676, %s665, 128, 128, 8
        $region68: #{phoneme_decoder_forward.1} parent=27 // pred_fallthru
          _
        // Predicated region
        $region69: #{phoneme_decoder_forward.1} parent=27 // pred_check
          %p682 = pneg %p356
        $region70: #{phoneme_decoder_forward.1} parent=27 // pred_check_branch
          %684 = sbr.rel (%p682) target = $region72
        $region71: #{phoneme_decoder_forward.1} parent=27 // pred_region
          %s685 = sand.u32 %s43, 1
          %s686 = scalar_lea.sflag [#allocation10], %s685
          %s687 = sand.u32 %s346, 1
          %s688 = smul.addr %s687, 64
          %s689 = scalar_lea.vmem [#allocation9], %s688
          %s691 = ssub.s32 1024, 1024
          %692 = vsyncadd %s686, %s691
          %s693 = smul.addr %s51, 8
          %s694 = smul.addr %s693, 128
          %s695 = scalar_lea.hbm %s11, %s694
          %s696 = sshll.u32 %s689, 4
          %s697 = int_to_ptr.vmem [resolvable:$true] %s696
          %702 = dma.hbm_to_vmem [thread:$0]  %s695, 1024, %s697, %s686, 128, 128, 8
        $region72: #{phoneme_decoder_forward.1} parent=27 // pred_fallthru
          _
        // Predicated region
        $region73: #{phoneme_decoder_forward.1} parent=27 // pred_check
          %p703 = pneg %p382
        $region74: #{phoneme_decoder_forward.1} parent=27 // pred_check_branch
          %705 = sbr.rel (%p703) target = $region76
        $region75: #{phoneme_decoder_forward.1} parent=27 // pred_region
          %s706 = sand.u32 %s43, 1
          %s707 = scalar_lea.sflag [#allocation10], %s706
          %s708 = sand.u32 %s372, 1
          %s709 = scalar_lea.vmem [#allocation11], %s708
          %s711 = ssub.s32 16, 16
          %712 = vsyncadd %s707, %s711
          %s713 = smul.addr %s51, 16
          %s714 = scalar_lea.hbm %s12, %s713
          %s716 = sshll.u32 %s709, 4
          %s717 = int_to_ptr.vmem [resolvable:$true] %s716
          %719 = dma.hbm_to_vmem [thread:$0]  %s714, 16, %s717, %s707
        $region76: #{phoneme_decoder_forward.1} parent=27 // pred_fallthru
          _
        // Predicated region
        $region77: #{phoneme_decoder_forward.1} parent=27 // pred_check
          %p720 = pneg %p408
        $region78: #{phoneme_decoder_forward.1} parent=27 // pred_check_branch
          %722 = sbr.rel (%p720) target = $region80
        $region79: #{phoneme_decoder_forward.1} parent=27 // pred_region
          %s723 = sand.u32 %s43, 1
          %s724 = scalar_lea.sflag [#allocation13], %s723
          %s725 = sand.u32 %s398, 1
          %s726 = smul.addr %s725, 64
          %s727 = scalar_lea.vmem [#allocation12], %s726
          %s729 = ssub.s32 1024, 1024
          %730 = vsyncadd %s724, %s729
          %s731 = smul.addr %s51, 8
          %s732 = smul.addr %s731, 128
          %s733 = scalar_lea.hbm %s13, %s732
          %s734 = sshll.u32 %s727, 4
          %s735 = int_to_ptr.vmem [resolvable:$true] %s734
          %740 = dma.hbm_to_vmem [thread:$0]  %s733, 1024, %s735, %s724, 128, 128, 8
        $region80: #{phoneme_decoder_forward.1} parent=27 // pred_fallthru
          _
        // Predicated region
        $region81: #{phoneme_decoder_forward.1} parent=27 // pred_check
          %p741 = pneg %p434
        $region82: #{phoneme_decoder_forward.1} parent=27 // pred_check_branch
          %743 = sbr.rel (%p741) target = $region84
        $region83: #{phoneme_decoder_forward.1} parent=27 // pred_region
          %p744 = scmp.lt.s32.totalorder %s51, 1
          %s745 = scalar_select %p744, %s51, 1
          %s746 = smul.addr %s745, 2
          %s747 = smul.addr %s746, 8
          %s748 = scalar_lea.vmem %s14, %s747
        $region84: #{phoneme_decoder_forward.1} parent=27 // pred_fallthru
          _
      $region28: #{phoneme_decoder_forward.1} parent=5 // pred_fallthru
        _
      %p749 = scmp.le.s32.totalorder 1, %s43
      %p750 = scmp.lt.s32.totalorder %s43, 5
      %p751 = pnand %p749, %p750
      %p752 = pneg %p751
      // Predicated region
      $region85: #{phoneme_decoder_forward.1} parent=5 // pred_check
        _
      $region86: #{phoneme_decoder_forward.1} parent=5 // pred_check_branch
        %754 = sbr.rel (%p751) target = $region88
      $region87: #{phoneme_decoder_forward.1} parent=5 // pred_region
        %s755 = ssub.s32 %s43, 1
        %s756 = sand.u32 %s167, 1
        %s757 = scalar_lea.sflag [#allocation4], %s756
        %s758 = sand.u32 %s167, 1
        %s759 = smul.addr %s758, 2
        %s760 = scalar_lea.vmem [#allocation3], %s759
        // Predicated region
        $region89: #{phoneme_decoder_forward.1} parent=87 // pred_check
          %p761 = pneg %p180
        $region90: #{phoneme_decoder_forward.1} parent=87 // pred_check_branch
          %763 = sbr.rel (%p761) target = $region92
        $region91: #{phoneme_decoder_forward.1} parent=87 // pred_region
          %764 = dma.done %s757, 32
        $region92: #{phoneme_decoder_forward.1} parent=87 // pred_fallthru
          _
        %s765 = sand.u32 %s48, 1
        %s766 = scalar_lea.sflag [#allocation7], %s765
        %s767 = sand.u32 %s271, 1
        %s768 = smul.addr %s767, 64
        %s769 = scalar_lea.vmem [#allocation6], %s768
        // Predicated region
        $region93: #{phoneme_decoder_forward.1} parent=87 // pred_check
          %p770 = pneg %p284
        $region94: #{phoneme_decoder_forward.1} parent=87 // pred_check_branch
          %772 = sbr.rel (%p770) target = $region96
        $region95: #{phoneme_decoder_forward.1} parent=87 // pred_region
          %773 = dma.done %s766, 1024
        $region96: #{phoneme_decoder_forward.1} parent=87 // pred_fallthru
          _
        %s774 = sand.u32 %s48, 1
        %s775 = scalar_lea.sflag [#allocation7], %s774
        %s776 = sand.u32 %s323, 1
        %s777 = smul.addr %s776, 64
        %s778 = scalar_lea.vmem [#allocation8], %s777
        // Predicated region
        $region97: #{phoneme_decoder_forward.1} parent=87 // pred_check
          %p779 = pneg %p336
        $region98: #{phoneme_decoder_forward.1} parent=87 // pred_check_branch
          %781 = sbr.rel (%p779) target = $region100
        $region99: #{phoneme_decoder_forward.1} parent=87 // pred_region
          %782 = dma.done %s775, 1024
        $region100: #{phoneme_decoder_forward.1} parent=87 // pred_fallthru
          _
        %s783 = sand.u32 %s48, 1
        %s784 = scalar_lea.sflag [#allocation10], %s783
        %s785 = sand.u32 %s349, 1
        %s786 = smul.addr %s785, 64
        %s787 = scalar_lea.vmem [#allocation9], %s786
        // Predicated region
        $region101: #{phoneme_decoder_forward.1} parent=87 // pred_check
          %p788 = pneg %p362
        $region102: #{phoneme_decoder_forward.1} parent=87 // pred_check_branch
          %790 = sbr.rel (%p788) target = $region104
        $region103: #{phoneme_decoder_forward.1} parent=87 // pred_region
          %791 = dma.done %s784, 1024
        $region104: #{phoneme_decoder_forward.1} parent=87 // pred_fallthru
          _
        %s792 = sand.u32 %s48, 1
        %s793 = scalar_lea.sflag [#allocation10], %s792
        %s794 = sand.u32 %s375, 1
        %s795 = scalar_lea.vmem [#allocation11], %s794
        // Predicated region
        $region105: #{phoneme_decoder_forward.1} parent=87 // pred_check
          %p796 = pneg %p388
        $region106: #{phoneme_decoder_forward.1} parent=87 // pred_check_branch
          %798 = sbr.rel (%p796) target = $region108
        $region107: #{phoneme_decoder_forward.1} parent=87 // pred_region
          %799 = dma.done %s793, 16
        $region108: #{phoneme_decoder_forward.1} parent=87 // pred_fallthru
          _
        %s800 = sand.u32 %s48, 1
        %s801 = scalar_lea.sflag [#allocation13], %s800
        %s802 = sand.u32 %s401, 1
        %s803 = smul.addr %s802, 64
        %s804 = scalar_lea.vmem [#allocation12], %s803
        // Predicated region
        $region109: #{phoneme_decoder_forward.1} parent=87 // pred_check
          %p805 = pneg %p414
        $region110: #{phoneme_decoder_forward.1} parent=87 // pred_check_branch
          %807 = sbr.rel (%p805) target = $region112
        $region111: #{phoneme_decoder_forward.1} parent=87 // pred_region
          %808 = dma.done %s801, 1024
        $region112: #{phoneme_decoder_forward.1} parent=87 // pred_fallthru
          _
        // Predicated region
        $region113: #{phoneme_decoder_forward.1} parent=87 // pred_check
          %p809 = pneg %p482
        $region114: #{phoneme_decoder_forward.1} parent=87 // pred_check_branch
          %811 = sbr.rel (%p809) target = $region116
        $region115: #{phoneme_decoder_forward.1} parent=87 // pred_region
          %812 = dma.done [#allocation13], 16
        $region116: #{phoneme_decoder_forward.1} parent=87 // pred_fallthru
          _
        %p813 = scmp.lt.s32.totalorder %s52, 1
        %s814 = scalar_select %p813, %s52, 1
        %s815 = smul.addr %s814, 8
        %s816 = scalar_lea.vmem %s0, %s815
        %p817 = pneg %p81
        %p818 = pneg %p78
        %p819 = scmp.lt.s32.totalorder %s52, 1
        %s820 = scalar_select %p819, %s52, 1
        %s821 = smul.addr %s820, 2
        %s822 = smul.addr %s821, 8
        %s823 = scalar_lea.vmem %s1, %s822
        %p824 = pneg %p107
        %p825 = pneg %p104
        %p826 = pneg %p128
        %p827 = pneg %p125
        %p828 = scmp.lt.s32.totalorder %s53, 1
        %s829 = scalar_select %p828, %s53, 1
        %s830 = smul.addr %s829, 16
        %s831 = smul.addr %s830, 8
        %s832 = scalar_lea.vmem %s3, %s831
        %p833 = pneg %p154
        %p834 = pneg %p151
        %s835 = sand.u32 %s167, 1
        %s836 = scalar_lea.sflag [#allocation4], %s835
        %s837 = sand.u32 %s167, 1
        %s838 = smul.addr %s837, 2
        %s839 = scalar_lea.vmem [#allocation3], %s838
        %p840 = pneg %p180
        %p841 = pneg %p177
        %p842 = scmp.lt.s32.totalorder %s53, 1
        %s843 = scalar_select %p842, %s53, 1
        %s844 = smul.addr %s843, 8
        %s845 = smul.addr %s844, 8
        %s846 = scalar_lea.vmem %s5, %s845
        %p847 = pneg %p206
        %p848 = pneg %p203
        %p849 = scmp.lt.s32.totalorder %s53, 1
        %s850 = scalar_select %p849, %s53, 1
        %s851 = smul.addr %s850, 8
        %s852 = smul.addr %s851, 8
        %s853 = scalar_lea.vmem %s6, %s852
        %p854 = pneg %p232
        %p855 = pneg %p229
        %p856 = scmp.lt.s32.totalorder %s53, 1
        %s857 = scalar_select %p856, %s53, 1
        %s858 = scalar_lea.vmem %s7, %s857
        %p859 = pneg %p258
        %p860 = pneg %p255
        %s861 = sand.u32 %s48, 1
        %s862 = scalar_lea.sflag [#allocation7], %s861
        %s863 = sand.u32 %s271, 1
        %s864 = smul.addr %s863, 64
        %s865 = scalar_lea.vmem [#allocation6], %s864
        %p866 = pneg %p284
        %p867 = pneg %p281
        %p868 = scmp.lt.s32.totalorder %s53, 1
        %s869 = scalar_select %p868, %s53, 1
        %s870 = scalar_lea.vmem %s9, %s869
        %p871 = pneg %p310
        %p872 = pneg %p307
        %s873 = sand.u32 %s48, 1
        %s874 = scalar_lea.sflag [#allocation7], %s873
        %s875 = sand.u32 %s323, 1
        %s876 = smul.addr %s875, 64
        %s877 = scalar_lea.vmem [#allocation8], %s876
        %p878 = pneg %p336
        %p879 = pneg %p333
        %s880 = sand.u32 %s48, 1
        %s881 = scalar_lea.sflag [#allocation10], %s880
        %s882 = sand.u32 %s349, 1
        %s883 = smul.addr %s882, 64
        %s884 = scalar_lea.vmem [#allocation9], %s883
        %p885 = pneg %p362
        %p886 = pneg %p359
        %s887 = sand.u32 %s48, 1
        %s888 = scalar_lea.sflag [#allocation10], %s887
        %s889 = sand.u32 %s375, 1
        %s890 = scalar_lea.vmem [#allocation11], %s889
        %p891 = pneg %p388
        %p892 = pneg %p385
        %s893 = sand.u32 %s48, 1
        %s894 = scalar_lea.sflag [#allocation13], %s893
        %s895 = sand.u32 %s401, 1
        %s896 = smul.addr %s895, 64
        %s897 = scalar_lea.vmem [#allocation12], %s896
        %p898 = pneg %p414
        %p899 = pneg %p411
        %p900 = scmp.lt.s32.totalorder %s53, 1
        %s901 = scalar_select %p900, %s53, 1
        %s902 = smul.addr %s901, 2
        %s903 = smul.addr %s902, 8
        %s904 = scalar_lea.vmem %s14, %s903
        %p905 = pneg %p440
        %p906 = pneg %p437
        %p907 = pneg %p461
        %p908 = pneg %p458
        %p909 = pneg %p482
        %p910 = pneg %p479
        %p911 = pneg %p508
        %p912 = pneg %p505
        %s913 = sand.u32 %s495, 1
        %s914 = scalar_lea.sflag [#allocation5], %s913
        %s915 = sand.u32 %s495, 1
        %s916 = smul.addr %s915, 8
        %s917 = scalar_lea.vmem [#allocation15], %s916
        %p918 = pneg %p534
        %p919 = pneg %p531
        %s920 = sand.u32 %s521, 1
        %s921 = scalar_lea.sflag [#allocation17], %s920
        %s922 = sand.u32 %s521, 1
        %s923 = smul.addr %s922, 8
        %s924 = scalar_lea.vmem [#allocation16], %s923
        %p925 = scmp.lt.s32.totalorder %s52, 1
        %s926 = scalar_select %p925, %s52, 1
        %s927 = smul.addr %s926, 8
        %s928 = scalar_lea.vmem %s0, %s927
        %p929 = scmp.lt.s32.totalorder %s52, 1
        %s930 = scalar_select %p929, %s52, 1
        %s931 = smul.addr %s930, 2
        %s932 = smul.addr %s931, 8
        %s933 = scalar_lea.vmem %s1, %s932
        %p934 = scmp.lt.s32.totalorder %s53, 1
        %s935 = scalar_select %p934, %s53, 1
        %s936 = smul.addr %s935, 16
        %s937 = smul.addr %s936, 8
        %s938 = scalar_lea.vmem %s3, %s937
        %p939 = scmp.lt.s32.totalorder %s53, 1
        %s940 = scalar_select %p939, %s53, 1
        %s941 = smul.addr %s940, 8
        %s942 = smul.addr %s941, 8
        %s943 = scalar_lea.vmem %s5, %s942
        %p944 = scmp.lt.s32.totalorder %s53, 1
        %s945 = scalar_select %p944, %s53, 1
        %s946 = smul.addr %s945, 8
        %s947 = smul.addr %s946, 8
        %s948 = scalar_lea.vmem %s6, %s947
        %p949 = scmp.lt.s32.totalorder %s53, 1
        %s950 = scalar_select %p949, %s53, 1
        %s951 = scalar_lea.vmem %s7, %s950
        %p952 = scmp.lt.s32.totalorder %s53, 1
        %s953 = scalar_select %p952, %s53, 1
        %s954 = scalar_lea.vmem %s9, %s953
        %p955 = scmp.lt.s32.totalorder %s53, 1
        %s956 = scalar_select %p955, %s53, 1
        %s957 = smul.addr %s956, 2
        %s958 = smul.addr %s957, 8
        %s959 = scalar_lea.vmem %s14, %s958
        %p960 = scmp.eq.s32.totalorder %s53, 0
        // Predicated region
        $region117: #{phoneme_decoder_forward.1} parent=87 // pred_check
          %p961 = pneg %p960
        $region118: #{phoneme_decoder_forward.1} parent=87 // pred_check_branch
          %963 = sbr.rel (%p961) target = $region120
        $region119: #{phoneme_decoder_forward.1} parent=87 // pred_region
          %v964 = vld [vmem:[%s928] sm:$0xff]
          %vm965 = vcmask 523264
          %966 = vst.msk [vmem:[#allocation2] sm:$0xff] %vm965, %v964
        $region120: #{phoneme_decoder_forward.1} parent=87 // pred_fallthru
          _
        %v967 = vld [vmem:[#allocation2] sm:$0xff]
        %v968 = vld [vmem:[%s933] sm:$0xff]
        %v969 = vld [vmem:[%s933 + $0x8] sm:$0xff]
        %v970 = vld [vmem:[%s959] sm:$0xff]
        %v971 = vld [vmem:[%s959 + $0x8] sm:$0x1]
        %v972 = vld [vmem:[%s938] sm:$0xff]
        %v973 = vld [vmem:[%s938 + $0x8] sm:$0xff]
        %v974 = vld [vmem:[%s938 + $0x10] sm:$0xff]
        %v975 = vld [vmem:[%s938 + $0x18] sm:$0xff]
        %v976 = vld [vmem:[%s938 + $0x20] sm:$0xff]
        %v977 = vld [vmem:[%s938 + $0x28] sm:$0xff]
        %v978 = vld [vmem:[%s938 + $0x30] sm:$0xff]
        %v979 = vld [vmem:[%s938 + $0x38] sm:$0xff]
        %v980 = vld [vmem:[%s938 + $0x40] sm:$0xff]
        %v981 = vld [vmem:[%s938 + $0x48] sm:$0xff]
        %v982 = vld [vmem:[%s938 + $0x50] sm:$0xff]
        %v983 = vld [vmem:[%s938 + $0x58] sm:$0xff]
        %v984 = vld [vmem:[%s938 + $0x60] sm:$0xff]
        %v985 = vld [vmem:[%s938 + $0x68] sm:$0xff]
        %v986 = vld [vmem:[%s938 + $0x70] sm:$0xff]
        %v987 = vld [vmem:[%s938 + $0x78] sm:$0xff]
        %v988 = vld [vmem:[%s760] sm:$0x3]
        %v990 = vlaneseq
        %v991 = vshrl.u32 %v990, 7
        %v992 = vsub.s32 0, %v991
        %v993 = vrot.slane %v988, %v992
        %v994 = vlaneseq
        %v995 = vshrl.u32 %v994, 7
        %v996 = vsub.s32 1, %v995
        %v997 = vrot.slane %v988, %v996
        %vm1000 = vcmask 523264
        %v1002 = vsel %vm1000, %v967, 0
        %1004 = vmatprep.subr.mxu0 0.0
        %1005 = vmatpush1.msra.mxu0 0.0
        %1006 = vmatprep.subr.mxu0 0.0
        %1007 = vmatpush1.msra.mxu0 0.0
        %1008 = vmatprep.subr.mxu0 0.0
        %1009 = vmatpush1.msra.mxu0 0.0
        %1010 = vmatprep.subr.mxu0 0.0
        %1011 = vmatpush1.msra.mxu0 0.0
        %1012 = vmatprep.subr.mxu0 0.0
        %1013 = vmatpush1.msra.mxu0 0.0
        %1014 = vmatprep.subr.mxu0 0.0
        %1015 = vmatpush1.msra.mxu0 0.0
        %1016 = vmatprep.subr.mxu0 0.0
        %1017 = vmatpush1.msra.mxu0 0.0
        %1018 = vmatprep.subr.mxu0 0.0
        %1019 = vmatpush1.msra.mxu0 0.0
        %1020 = vmatprep.subr.mxu0 %v987
        %1021 = vmatpush1.msra.mxu0 %v986
        %1022 = vmatprep.subr.mxu0 %v985
        %1023 = vmatpush1.msra.mxu0 %v984
        %1024 = vmatprep.subr.mxu0 %v983
        %1025 = vmatpush1.msra.mxu0 %v982
        %1026 = vmatprep.subr.mxu0 %v981
        %1027 = vmatpush1.msra.mxu0 %v980
        %1028 = vmatprep.subr.mxu0 %v979
        %1029 = vmatpush1.msra.mxu0 %v978
        %1030 = vmatprep.subr.mxu0 %v977
        %1031 = vmatpush1.msra.mxu0 %v976
        %1032 = vmatprep.subr.mxu0 %v975
        %1033 = vmatpush1.msra.mxu0 %v974
        %1034 = vmatprep.subr.mxu0 %v973
        %1035 = vmatpush1.msra.mxu0 %v972
        %1036 = vmatprep.subr.mxu0 0.0
        %1037 = vmatpush2.msra.mxu0 0.0
        %1038 = vmatprep.subr.mxu0 0.0
        %1039 = vmatpush2.msra.mxu0 0.0
        %1040 = vmatprep.subr.mxu0 0.0
        %1041 = vmatpush2.msra.mxu0 0.0
        %1042 = vmatprep.subr.mxu0 0.0
        %1043 = vmatpush2.msra.mxu0 0.0
        %1044 = vmatprep.subr.mxu0 0.0
        %1045 = vmatpush2.msra.mxu0 0.0
        %1046 = vmatprep.subr.mxu0 0.0
        %1047 = vmatpush2.msra.mxu0 0.0
        %1048 = vmatprep.subr.mxu0 0.0
        %1049 = vmatpush2.msra.mxu0 0.0
        %1050 = vmatprep.subr.mxu0 0.0
        %1051 = vmatpush2.msra.mxu0 0.0
        %1052 = vmatprep.subr.mxu0 0.0
        %1053 = vmatpush2.msra.mxu0 0.0
        %1054 = vmatprep.subr.mxu0 0.0
        %1055 = vmatpush2.msra.mxu0 0.0
        %1056 = vmatprep.subr.mxu0 0.0
        %1057 = vmatpush2.msra.mxu0 0.0
        %1058 = vmatprep.subr.mxu0 0.0
        %1059 = vmatpush2.msra.mxu0 0.0
        %1060 = vmatprep.subr.mxu0 0.0
        %1061 = vmatpush2.msra.mxu0 0.0
        %1062 = vmatprep.subr.mxu0 0.0
        %1063 = vmatpush2.msra.mxu0 0.0
        %1064 = vmatprep.subr.mxu0 0.0
        %1065 = vmatpush2.msra.mxu0 0.0
        %1066 = vmatprep.subr.mxu0 0.0
        %1067 = vmatpush2.msra.mxu0 0.0
        %1068 = vmatprep.mubr.f32.mxu0 0.0
        %1069 = vmatmul.mubr.f32.gmra.mxu0 %v1002
        %v1070 = vpop.f32.mrf.mxu0
        %v1071 = vadd.f32 %v993, %v1070
        %v1072 = vpop.f32.mrf.mxu0
        %v1073 = vadd.f32 %v997, %v1072
        %1074 = vdwg.mxu0
        %v1075 = vlaneseq
        %v1076 = vshrl.u32 %v1075, 7
        %v1077 = vlaneseq
        %v1078 = vand.u32 %v1077, 127
        %vm1079 = vcmp.gt.s32.totalorder %v1078, %v1076
        %v1080 = vsel %vm1079, -1e+09, 0.0
        %v1081 = vld [vmem:[%s943] sm:$0xff]
        %v1082 = vld [vmem:[%s943 + $0x8] sm:$0xff]
        %v1083 = vld [vmem:[%s943 + $0x10] sm:$0xff]
        %v1084 = vld [vmem:[%s943 + $0x18] sm:$0xff]
        %v1085 = vld [vmem:[%s943 + $0x20] sm:$0xff]
        %v1086 = vld [vmem:[%s943 + $0x28] sm:$0xff]
        %v1087 = vld [vmem:[%s943 + $0x30] sm:$0xff]
        %v1088 = vld [vmem:[%s943 + $0x38] sm:$0xff]
        %1090 = vrot.lane.b32.xlu0 %v1071, 64
        %v1091 = vpop.permute.xlu0 %1090
        %vm1092 = vcmask 130048
        %v1093 = vsel %vm1092, %v1071, 0
        %v1095 = vsel %vm1092, %v1091, 0
        %1097 = vmatprep.subr.mxu0 0.0
        %1098 = vmatpush1.xpose.msra.mxu0 0.0
        %1099 = vmatprep.subr.mxu0 0.0
        %1100 = vmatpush1.xpose.msra.mxu0 0.0
        %1101 = vmatprep.subr.mxu0 0.0
        %1102 = vmatpush1.xpose.msra.mxu0 0.0
        %1103 = vmatprep.subr.mxu0 0.0
        %1104 = vmatpush1.xpose.msra.mxu0 0.0
        %1105 = vmatprep.subr.mxu0 0.0
        %1106 = vmatpush1.xpose.msra.mxu0 0.0
        %1107 = vmatprep.subr.mxu0 0.0
        %1108 = vmatpush1.xpose.msra.mxu0 0.0
        %1109 = vmatprep.subr.mxu0 0.0
        %1110 = vmatpush1.xpose.msra.mxu0 0.0
        %1111 = vmatprep.subr.mxu0 0.0
        %1112 = vmatpush1.xpose.msra.mxu0 0.0
        %1113 = vmatprep.subr.mxu0 0.0
        %1114 = vmatpush1.xpose.msra.mxu0 0.0
        %1115 = vmatprep.subr.mxu0 0.0
        %1116 = vmatpush1.xpose.msra.mxu0 0.0
        %1117 = vmatprep.subr.mxu0 0.0
        %1118 = vmatpush1.xpose.msra.mxu0 0.0
        %1119 = vmatprep.subr.mxu0 0.0
        %1120 = vmatpush1.xpose.msra.mxu0 0.0
        %1121 = vmatprep.subr.mxu0 0.0
        %1122 = vmatpush1.xpose.msra.mxu0 0.0
        %1123 = vmatprep.subr.mxu0 0.0
        %1124 = vmatpush1.xpose.msra.mxu0 0.0
        %1125 = vmatprep.subr.mxu0 0.0
        %1126 = vmatpush1.xpose.msra.mxu0 0.0
        %1127 = vmatprep.subr.mxu0 0.0
        %1128 = vmatpush1.xpose.msra.mxu0 %v1095
        %1129 = vmatprep.subr.mxu0 0.0
        %1130 = vmatpush2.xpose.msra.mxu0 0.0
        %1131 = vmatprep.subr.mxu0 0.0
        %1132 = vmatpush2.xpose.msra.mxu0 0.0
        %1133 = vmatprep.subr.mxu0 0.0
        %1134 = vmatpush2.xpose.msra.mxu0 0.0
        %1135 = vmatprep.subr.mxu0 0.0
        %1136 = vmatpush2.xpose.msra.mxu0 0.0
        %1137 = vmatprep.subr.mxu0 0.0
        %1138 = vmatpush2.xpose.msra.mxu0 0.0
        %1139 = vmatprep.subr.mxu0 0.0
        %1140 = vmatpush2.xpose.msra.mxu0 0.0
        %1141 = vmatprep.subr.mxu0 0.0
        %1142 = vmatpush2.xpose.msra.mxu0 0.0
        %1143 = vmatprep.subr.mxu0 0.0
        %1144 = vmatpush2.xpose.msra.mxu0 0.0
        %1145 = vmatprep.subr.mxu0 0.0
        %1146 = vmatpush2.xpose.msra.mxu0 0.0
        %1147 = vmatprep.subr.mxu0 0.0
        %1148 = vmatpush2.xpose.msra.mxu0 0.0
        %1149 = vmatprep.subr.mxu0 0.0
        %1150 = vmatpush2.xpose.msra.mxu0 0.0
        %1151 = vmatprep.subr.mxu0 0.0
        %1152 = vmatpush2.xpose.msra.mxu0 0.0
        %1153 = vmatprep.subr.mxu0 0.0
        %1154 = vmatpush2.xpose.msra.mxu0 0.0
        %1155 = vmatprep.subr.mxu0 0.0
        %1156 = vmatpush2.xpose.msra.mxu0 0.0
        %1157 = vmatprep.subr.mxu0 0.0
        %1158 = vmatpush2.xpose.msra.mxu0 0.0
        %1159 = vmatprep.subr.mxu0 0.0
        %1160 = vmatpush2.xpose.msra.mxu0 0.0
        %1161 = vmatprep.mubr.f32.mxu0 0.0
        %1162 = vmatmul.mubr.f32.gmra.mxu0 %v1093
        %v1163 = vpop.f32.mrf.mxu0
        %v1164 = vadd.f32 0.0, %v1163
        %v1165 = vpop.f32.mrf.mxu0
        %1166 = vdwg.mxu0
        %v1167 = vmul.f32 %v1164, 0.25
        %v1168 = vadd.f32 %v1167, %v1080
        %vm1169 = vcmask 64512
        %v1170 = vsel %vm1169, %v1168, -inf
        %1171 = vmax.xlane.f32.xlu0 %v1170
        %v1172 = vpop.xlane.xlu0 %1171
        %v1173 = vsub.f32 %v1168, %v1172
        %v1174 = vmul.f32 %v1173, 1.442695
        %v1175 = vpow.pop %v1174
        %v1176 = vsel %vm1169, %v1175, 0.0
        %1177 = vadd.xlane.f32.xlu0 %v1176
        %v1178 = vpop.xlane.xlu0 %1177
        %v1179 = vrcp.pop %v1178
        %v1180 = vmul.f32 %v1175, %v1179
        %v1182 = vsel %vm1169, %v1180, 0
        %1184 = vmatprep.subr.mxu0 0.0
        %1185 = vmatpush1.msra.mxu0 0.0
        %1186 = vmatprep.subr.mxu0 0.0
        %1187 = vmatpush1.msra.mxu0 0.0
        %1188 = vmatprep.subr.mxu0 0.0
        %1189 = vmatpush1.msra.mxu0 0.0
        %1190 = vmatprep.subr.mxu0 0.0
        %1191 = vmatpush1.msra.mxu0 0.0
        %1192 = vmatprep.subr.mxu0 0.0
        %1193 = vmatpush1.msra.mxu0 0.0
        %1194 = vmatprep.subr.mxu0 0.0
        %1195 = vmatpush1.msra.mxu0 0.0
        %1196 = vmatprep.subr.mxu0 0.0
        %1197 = vmatpush1.msra.mxu0 0.0
        %1198 = vmatprep.subr.mxu0 0.0
        %1199 = vmatpush1.msra.mxu0 0.0
        %1200 = vmatprep.subr.mxu0 0.0
        %1201 = vmatpush1.msra.mxu0 0.0
        %1202 = vmatprep.subr.mxu0 0.0
        %1203 = vmatpush1.msra.mxu0 0.0
        %1204 = vmatprep.subr.mxu0 0.0
        %1205 = vmatpush1.msra.mxu0 0.0
        %1206 = vmatprep.subr.mxu0 0.0
        %1207 = vmatpush1.msra.mxu0 0.0
        %1208 = vmatprep.subr.mxu0 0.0
        %1209 = vmatpush1.msra.mxu0 0.0
        %1210 = vmatprep.subr.mxu0 0.0
        %1211 = vmatpush1.msra.mxu0 0.0
        %1212 = vmatprep.subr.mxu0 0.0
        %1213 = vmatpush1.msra.mxu0 0.0
        %1214 = vmatprep.subr.mxu0 0.0
        %1215 = vmatpush1.msra.mxu0 %v1073
        %1216 = vmatprep.subr.mxu0 0.0
        %1217 = vmatpush2.msra.mxu0 0.0
        %1218 = vmatprep.subr.mxu0 0.0
        %1219 = vmatpush2.msra.mxu0 0.0
        %1220 = vmatprep.subr.mxu0 0.0
        %1221 = vmatpush2.msra.mxu0 0.0
        %1222 = vmatprep.subr.mxu0 0.0
        %1223 = vmatpush2.msra.mxu0 0.0
        %1224 = vmatprep.subr.mxu0 0.0
        %1225 = vmatpush2.msra.mxu0 0.0
        %1226 = vmatprep.subr.mxu0 0.0
        %1227 = vmatpush2.msra.mxu0 0.0
        %1228 = vmatprep.subr.mxu0 0.0
        %1229 = vmatpush2.msra.mxu0 0.0
        %1230 = vmatprep.subr.mxu0 0.0
        %1231 = vmatpush2.msra.mxu0 0.0
        %1232 = vmatprep.subr.mxu0 0.0
        %1233 = vmatpush2.msra.mxu0 0.0
        %1234 = vmatprep.subr.mxu0 0.0
        %1235 = vmatpush2.msra.mxu0 0.0
        %1236 = vmatprep.subr.mxu0 0.0
        %1237 = vmatpush2.msra.mxu0 0.0
        %1238 = vmatprep.subr.mxu0 0.0
        %1239 = vmatpush2.msra.mxu0 0.0
        %1240 = vmatprep.subr.mxu0 0.0
        %1241 = vmatpush2.msra.mxu0 0.0
        %1242 = vmatprep.subr.mxu0 0.0
        %1243 = vmatpush2.msra.mxu0 0.0
        %1244 = vmatprep.subr.mxu0 0.0
        %1245 = vmatpush2.msra.mxu0 0.0
        %1246 = vmatprep.subr.mxu0 0.0
        %1247 = vmatpush2.msra.mxu0 0.0
        %1248 = vmatprep.mubr.f32.mxu0 0.0
        %1249 = vmatmul.mubr.f32.gmra.mxu0 %v1182
        %v1250 = vpop.f32.mrf.mxu0
        %v1251 = vadd.f32 0.0, %v1250
        %v1252 = vpop.f32.mrf.mxu0
        %1253 = vdwg.mxu0
        %1254 = vrot.lane.b32.xlu0 %v1071, 112
        %v1255 = vpop.permute.xlu0 %1254
        %1256 = vrot.lane.b32.xlu0 %v1071, 48
        %v1257 = vpop.permute.xlu0 %1256
        %v1258 = vsel %vm1092, %v1255, 0
        %v1260 = vsel %vm1092, %v1257, 0
        %1262 = vmatprep.subr.mxu0 0.0
        %1263 = vmatpush1.xpose.msra.mxu0 0.0
        %1264 = vmatprep.subr.mxu0 0.0
        %1265 = vmatpush1.xpose.msra.mxu0 0.0
        %1266 = vmatprep.subr.mxu0 0.0
        %1267 = vmatpush1.xpose.msra.mxu0 0.0
        %1268 = vmatprep.subr.mxu0 0.0
        %1269 = vmatpush1.xpose.msra.mxu0 0.0
        %1270 = vmatprep.subr.mxu0 0.0
        %1271 = vmatpush1.xpose.msra.mxu0 0.0
        %1272 = vmatprep.subr.mxu0 0.0
        %1273 = vmatpush1.xpose.msra.mxu0 0.0
        %1274 = vmatprep.subr.mxu0 0.0
        %1275 = vmatpush1.xpose.msra.mxu0 0.0
        %1276 = vmatprep.subr.mxu0 0.0
        %1277 = vmatpush1.xpose.msra.mxu0 0.0
        %1278 = vmatprep.subr.mxu0 0.0
        %1279 = vmatpush1.xpose.msra.mxu0 0.0
        %1280 = vmatprep.subr.mxu0 0.0
        %1281 = vmatpush1.xpose.msra.mxu0 0.0
        %1282 = vmatprep.subr.mxu0 0.0
        %1283 = vmatpush1.xpose.msra.mxu0 0.0
        %1284 = vmatprep.subr.mxu0 0.0
        %1285 = vmatpush1.xpose.msra.mxu0 0.0
        %1286 = vmatprep.subr.mxu0 0.0
        %1287 = vmatpush1.xpose.msra.mxu0 0.0
        %1288 = vmatprep.subr.mxu0 0.0
        %1289 = vmatpush1.xpose.msra.mxu0 0.0
        %1290 = vmatprep.subr.mxu0 0.0
        %1291 = vmatpush1.xpose.msra.mxu0 0.0
        %1292 = vmatprep.subr.mxu0 0.0
        %1293 = vmatpush1.xpose.msra.mxu0 %v1260
        %1294 = vmatprep.subr.mxu0 0.0
        %1295 = vmatpush2.xpose.msra.mxu0 0.0
        %1296 = vmatprep.subr.mxu0 0.0
        %1297 = vmatpush2.xpose.msra.mxu0 0.0
        %1298 = vmatprep.subr.mxu0 0.0
        %1299 = vmatpush2.xpose.msra.mxu0 0.0
        %1300 = vmatprep.subr.mxu0 0.0
        %1301 = vmatpush2.xpose.msra.mxu0 0.0
        %1302 = vmatprep.subr.mxu0 0.0
        %1303 = vmatpush2.xpose.msra.mxu0 0.0
        %1304 = vmatprep.subr.mxu0 0.0
        %1305 = vmatpush2.xpose.msra.mxu0 0.0
        %1306 = vmatprep.subr.mxu0 0.0
        %1307 = vmatpush2.xpose.msra.mxu0 0.0
        %1308 = vmatprep.subr.mxu0 0.0
        %1309 = vmatpush2.xpose.msra.mxu0 0.0
        %1310 = vmatprep.subr.mxu0 0.0
        %1311 = vmatpush2.xpose.msra.mxu0 0.0
        %1312 = vmatprep.subr.mxu0 0.0
        %1313 = vmatpush2.xpose.msra.mxu0 0.0
        %1314 = vmatprep.subr.mxu0 0.0
        %1315 = vmatpush2.xpose.msra.mxu0 0.0
        %1316 = vmatprep.subr.mxu0 0.0
        %1317 = vmatpush2.xpose.msra.mxu0 0.0
        %1318 = vmatprep.subr.mxu0 0.0
        %1319 = vmatpush2.xpose.msra.mxu0 0.0
        %1320 = vmatprep.subr.mxu0 0.0
        %1321 = vmatpush2.xpose.msra.mxu0 0.0
        %1322 = vmatprep.subr.mxu0 0.0
        %1323 = vmatpush2.xpose.msra.mxu0 0.0
        %1324 = vmatprep.subr.mxu0 0.0
        %1325 = vmatpush2.xpose.msra.mxu0 0.0
        %1326 = vmatprep.mubr.f32.mxu0 0.0
        %1327 = vmatmul.mubr.f32.gmra.mxu0 %v1258
        %v1328 = vpop.f32.mrf.mxu0
        %v1329 = vadd.f32 0.0, %v1328
        %v1330 = vpop.f32.mrf.mxu0
        %1331 = vdwg.mxu0
        %v1332 = vmul.f32 %v1329, 0.25
        %v1333 = vadd.f32 %v1332, %v1080
        %v1334 = vsel %vm1169, %v1333, -inf
        %1335 = vmax.xlane.f32.xlu0 %v1334
        %v1336 = vpop.xlane.xlu0 %1335
        %v1337 = vsub.f32 %v1333, %v1336
        %v1338 = vmul.f32 %v1337, 1.442695
        %v1339 = vpow.pop %v1338
        %v1340 = vsel %vm1169, %v1339, 0.0
        %1341 = vadd.xlane.f32.xlu0 %v1340
        %v1342 = vpop.xlane.xlu0 %1341
        %v1343 = vrcp.pop %v1342
        %v1344 = vmul.f32 %v1339, %v1343
        %1346 = vrot.lane.b32.xlu0 %v1073, 112
        %v1347 = vpop.permute.xlu0 %1346
        %v1350 = vsel %vm1169, %v1344, 0
        %1352 = vmatprep.subr.mxu0 0.0
        %1353 = vmatpush1.msra.mxu0 0.0
        %1354 = vmatprep.subr.mxu0 0.0
        %1355 = vmatpush1.msra.mxu0 0.0
        %1356 = vmatprep.subr.mxu0 0.0
        %1357 = vmatpush1.msra.mxu0 0.0
        %1358 = vmatprep.subr.mxu0 0.0
        %1359 = vmatpush1.msra.mxu0 0.0
        %1360 = vmatprep.subr.mxu0 0.0
        %1361 = vmatpush1.msra.mxu0 0.0
        %1362 = vmatprep.subr.mxu0 0.0
        %1363 = vmatpush1.msra.mxu0 0.0
        %1364 = vmatprep.subr.mxu0 0.0
        %1365 = vmatpush1.msra.mxu0 0.0
        %1366 = vmatprep.subr.mxu0 0.0
        %1367 = vmatpush1.msra.mxu0 0.0
        %1368 = vmatprep.subr.mxu0 0.0
        %1369 = vmatpush1.msra.mxu0 0.0
        %1370 = vmatprep.subr.mxu0 0.0
        %1371 = vmatpush1.msra.mxu0 0.0
        %1372 = vmatprep.subr.mxu0 0.0
        %1373 = vmatpush1.msra.mxu0 0.0
        %1374 = vmatprep.subr.mxu0 0.0
        %1375 = vmatpush1.msra.mxu0 0.0
        %1376 = vmatprep.subr.mxu0 0.0
        %1377 = vmatpush1.msra.mxu0 0.0
        %1378 = vmatprep.subr.mxu0 0.0
        %1379 = vmatpush1.msra.mxu0 0.0
        %1380 = vmatprep.subr.mxu0 0.0
        %1381 = vmatpush1.msra.mxu0 0.0
        %1382 = vmatprep.subr.mxu0 0.0
        %1383 = vmatpush1.msra.mxu0 %v1347
        %1384 = vmatprep.subr.mxu0 0.0
        %1385 = vmatpush2.msra.mxu0 0.0
        %1386 = vmatprep.subr.mxu0 0.0
        %1387 = vmatpush2.msra.mxu0 0.0
        %1388 = vmatprep.subr.mxu0 0.0
        %1389 = vmatpush2.msra.mxu0 0.0
        %1390 = vmatprep.subr.mxu0 0.0
        %1391 = vmatpush2.msra.mxu0 0.0
        %1392 = vmatprep.subr.mxu0 0.0
        %1393 = vmatpush2.msra.mxu0 0.0
        %1394 = vmatprep.subr.mxu0 0.0
        %1395 = vmatpush2.msra.mxu0 0.0
        %1396 = vmatprep.subr.mxu0 0.0
        %1397 = vmatpush2.msra.mxu0 0.0
        %1398 = vmatprep.subr.mxu0 0.0
        %1399 = vmatpush2.msra.mxu0 0.0
        %1400 = vmatprep.subr.mxu0 0.0
        %1401 = vmatpush2.msra.mxu0 0.0
        %1402 = vmatprep.subr.mxu0 0.0
        %1403 = vmatpush2.msra.mxu0 0.0
        %1404 = vmatprep.subr.mxu0 0.0
        %1405 = vmatpush2.msra.mxu0 0.0
        %1406 = vmatprep.subr.mxu0 0.0
        %1407 = vmatpush2.msra.mxu0 0.0
        %1408 = vmatprep.subr.mxu0 0.0
        %1409 = vmatpush2.msra.mxu0 0.0
        %1410 = vmatprep.subr.mxu0 0.0
        %1411 = vmatpush2.msra.mxu0 0.0
        %1412 = vmatprep.subr.mxu0 0.0
        %1413 = vmatpush2.msra.mxu0 0.0
        %1414 = vmatprep.subr.mxu0 0.0
        %1415 = vmatpush2.msra.mxu0 0.0
        %1416 = vmatprep.mubr.f32.mxu0 0.0
        %1417 = vmatmul.mubr.f32.gmra.mxu0 %v1350
        %v1418 = vpop.f32.mrf.mxu0
        %v1419 = vadd.f32 0.0, %v1418
        %v1420 = vpop.f32.mrf.mxu0
        %1421 = vdwg.mxu0
        %v1423 = vsel %vm1092, %v1419, 0
        %1425 = vmatprep.subr.mxu0 0.0
        %1426 = vmatpush1.msra.mxu0 0.0
        %1427 = vmatprep.subr.mxu0 0.0
        %1428 = vmatpush1.msra.mxu0 0.0
        %1429 = vmatprep.subr.mxu0 0.0
        %1430 = vmatpush1.msra.mxu0 0.0
        %1431 = vmatprep.subr.mxu0 0.0
        %1432 = vmatpush1.msra.mxu0 0.0
        %1433 = vmatprep.subr.mxu0 0.0
        %1434 = vmatpush1.msra.mxu0 0.0
        %1435 = vmatprep.subr.mxu0 0.0
        %1436 = vmatpush1.msra.mxu0 0.0
        %1437 = vmatprep.subr.mxu0 0.0
        %1438 = vmatpush1.msra.mxu0 0.0
        %1439 = vmatprep.subr.mxu0 0.0
        %1440 = vmatpush1.msra.mxu0 0.0
        %1441 = vmatprep.subr.mxu0 0.0
        %1442 = vmatpush1.msra.mxu0 0.0
        %1443 = vmatprep.subr.mxu0 0.0
        %1444 = vmatpush1.msra.mxu0 0.0
        %1445 = vmatprep.subr.mxu0 0.0
        %1446 = vmatpush1.msra.mxu0 0.0
        %1447 = vmatprep.subr.mxu0 0.0
        %1448 = vmatpush1.msra.mxu0 0.0
        %1449 = vmatprep.subr.mxu0 0.0
        %1450 = vmatpush1.msra.mxu0 0.0
        %1451 = vmatprep.subr.mxu0 0.0
        %1452 = vmatpush1.msra.mxu0 0.0
        %1453 = vmatprep.subr.mxu0 0.0
        %1454 = vmatpush1.msra.mxu0 %v1084
        %1455 = vmatprep.subr.mxu0 0.0
        %1456 = vmatpush1.msra.mxu0 %v1083
        %1457 = vmatprep.subr.mxu0 0.0
        %1458 = vmatpush2.msra.mxu0 0.0
        %1459 = vmatprep.subr.mxu0 0.0
        %1460 = vmatpush2.msra.mxu0 0.0
        %1461 = vmatprep.subr.mxu0 0.0
        %1462 = vmatpush2.msra.mxu0 0.0
        %1463 = vmatprep.subr.mxu0 0.0
        %1464 = vmatpush2.msra.mxu0 0.0
        %1465 = vmatprep.subr.mxu0 0.0
        %1466 = vmatpush2.msra.mxu0 0.0
        %1467 = vmatprep.subr.mxu0 0.0
        %1468 = vmatpush2.msra.mxu0 0.0
        %1469 = vmatprep.subr.mxu0 0.0
        %1470 = vmatpush2.msra.mxu0 0.0
        %1471 = vmatprep.subr.mxu0 0.0
        %1472 = vmatpush2.msra.mxu0 0.0
        %1473 = vmatprep.subr.mxu0 0.0
        %1474 = vmatpush2.msra.mxu0 0.0
        %1475 = vmatprep.subr.mxu0 0.0
        %1476 = vmatpush2.msra.mxu0 0.0
        %1477 = vmatprep.subr.mxu0 0.0
        %1478 = vmatpush2.msra.mxu0 0.0
        %1479 = vmatprep.subr.mxu0 0.0
        %1480 = vmatpush2.msra.mxu0 0.0
        %1481 = vmatprep.subr.mxu0 0.0
        %1482 = vmatpush2.msra.mxu0 0.0
        %1483 = vmatprep.subr.mxu0 0.0
        %1484 = vmatpush2.msra.mxu0 0.0
        %1485 = vmatprep.subr.mxu0 0.0
        %1486 = vmatpush2.msra.mxu0 0.0
        %1487 = vmatprep.subr.mxu0 0.0
        %1488 = vmatpush2.msra.mxu0 0.0
        %1489 = vmatprep.mubr.f32.mxu0 0.0
        %1490 = vmatmul.mubr.f32.gmra.mxu0 %v1423
        %v1491 = vpop.f32.mrf.mxu0
        %v1492 = vadd.f32 0.0, %v1491
        %v1493 = vpop.f32.mrf.mxu0
        %1494 = vdwg.mxu0
        %v1496 = vsel %vm1092, %v1251, 0
        %1498 = vmatprep.subr.mxu0 0.0
        %1499 = vmatpush1.msra.mxu0 0.0
        %1500 = vmatprep.subr.mxu0 0.0
        %1501 = vmatpush1.msra.mxu0 0.0
        %1502 = vmatprep.subr.mxu0 0.0
        %1503 = vmatpush1.msra.mxu0 0.0
        %1504 = vmatprep.subr.mxu0 0.0
        %1505 = vmatpush1.msra.mxu0 0.0
        %1506 = vmatprep.subr.mxu0 0.0
        %1507 = vmatpush1.msra.mxu0 0.0
        %1508 = vmatprep.subr.mxu0 0.0
        %1509 = vmatpush1.msra.mxu0 0.0
        %1510 = vmatprep.subr.mxu0 0.0
        %1511 = vmatpush1.msra.mxu0 0.0
        %1512 = vmatprep.subr.mxu0 0.0
        %1513 = vmatpush1.msra.mxu0 0.0
        %1514 = vmatprep.subr.mxu0 0.0
        %1515 = vmatpush1.msra.mxu0 0.0
        %1516 = vmatprep.subr.mxu0 0.0
        %1517 = vmatpush1.msra.mxu0 0.0
        %1518 = vmatprep.subr.mxu0 0.0
        %1519 = vmatpush1.msra.mxu0 0.0
        %1520 = vmatprep.subr.mxu0 0.0
        %1521 = vmatpush1.msra.mxu0 0.0
        %1522 = vmatprep.subr.mxu0 0.0
        %1523 = vmatpush1.msra.mxu0 0.0
        %1524 = vmatprep.subr.mxu0 0.0
        %1525 = vmatpush1.msra.mxu0 0.0
        %1526 = vmatprep.subr.mxu0 0.0
        %1527 = vmatpush1.msra.mxu0 %v1082
        %1528 = vmatprep.subr.mxu0 0.0
        %1529 = vmatpush1.msra.mxu0 %v1081
        %1530 = vmatprep.subr.mxu0 0.0
        %1531 = vmatpush2.msra.mxu0 0.0
        %1532 = vmatprep.subr.mxu0 0.0
        %1533 = vmatpush2.msra.mxu0 0.0
        %1534 = vmatprep.subr.mxu0 0.0
        %1535 = vmatpush2.msra.mxu0 0.0
        %1536 = vmatprep.subr.mxu0 0.0
        %1537 = vmatpush2.msra.mxu0 0.0
        %1538 = vmatprep.subr.mxu0 0.0
        %1539 = vmatpush2.msra.mxu0 0.0
        %1540 = vmatprep.subr.mxu0 0.0
        %1541 = vmatpush2.msra.mxu0 0.0
        %1542 = vmatprep.subr.mxu0 0.0
        %1543 = vmatpush2.msra.mxu0 0.0
        %1544 = vmatprep.subr.mxu0 0.0
        %1545 = vmatpush2.msra.mxu0 0.0
        %1546 = vmatprep.subr.mxu0 0.0
        %1547 = vmatpush2.msra.mxu0 0.0
        %1548 = vmatprep.subr.mxu0 0.0
        %1549 = vmatpush2.msra.mxu0 0.0
        %1550 = vmatprep.subr.mxu0 0.0
        %1551 = vmatpush2.msra.mxu0 0.0
        %1552 = vmatprep.subr.mxu0 0.0
        %1553 = vmatpush2.msra.mxu0 0.0
        %1554 = vmatprep.subr.mxu0 0.0
        %1555 = vmatpush2.msra.mxu0 0.0
        %1556 = vmatprep.subr.mxu0 0.0
        %1557 = vmatpush2.msra.mxu0 0.0
        %1558 = vmatprep.subr.mxu0 0.0
        %1559 = vmatpush2.msra.mxu0 0.0
        %1560 = vmatprep.subr.mxu0 0.0
        %1561 = vmatpush2.msra.mxu0 0.0
        %1562 = vmatprep.mubr.f32.mxu0 0.0
        %1563 = vmatmul.mubr.f32.gmra.mxu0 %v1496
        %v1564 = vpop.f32.mrf.mxu0
        %v1565 = vadd.f32 %v1492, %v1564
        %v1566 = vpop.f32.mrf.mxu0
        %1567 = vdwg.mxu0
        %1568 = vrot.lane.b32.xlu0 %v1071, 96
        %v1569 = vpop.permute.xlu0 %1568
        %1570 = vrot.lane.b32.xlu0 %v1071, 32
        %v1571 = vpop.permute.xlu0 %1570
        %v1572 = vsel %vm1092, %v1569, 0
        %v1574 = vsel %vm1092, %v1571, 0
        %1576 = vmatprep.subr.mxu0 0.0
        %1577 = vmatpush1.xpose.msra.mxu0 0.0
        %1578 = vmatprep.subr.mxu0 0.0
        %1579 = vmatpush1.xpose.msra.mxu0 0.0
        %1580 = vmatprep.subr.mxu0 0.0
        %1581 = vmatpush1.xpose.msra.mxu0 0.0
        %1582 = vmatprep.subr.mxu0 0.0
        %1583 = vmatpush1.xpose.msra.mxu0 0.0
        %1584 = vmatprep.subr.mxu0 0.0
        %1585 = vmatpush1.xpose.msra.mxu0 0.0
        %1586 = vmatprep.subr.mxu0 0.0
        %1587 = vmatpush1.xpose.msra.mxu0 0.0
        %1588 = vmatprep.subr.mxu0 0.0
        %1589 = vmatpush1.xpose.msra.mxu0 0.0
        %1590 = vmatprep.subr.mxu0 0.0
        %1591 = vmatpush1.xpose.msra.mxu0 0.0
        %1592 = vmatprep.subr.mxu0 0.0
        %1593 = vmatpush1.xpose.msra.mxu0 0.0
        %1594 = vmatprep.subr.mxu0 0.0
        %1595 = vmatpush1.xpose.msra.mxu0 0.0
        %1596 = vmatprep.subr.mxu0 0.0
        %1597 = vmatpush1.xpose.msra.mxu0 0.0
        %1598 = vmatprep.subr.mxu0 0.0
        %1599 = vmatpush1.xpose.msra.mxu0 0.0
        %1600 = vmatprep.subr.mxu0 0.0
        %1601 = vmatpush1.xpose.msra.mxu0 0.0
        %1602 = vmatprep.subr.mxu0 0.0
        %1603 = vmatpush1.xpose.msra.mxu0 0.0
        %1604 = vmatprep.subr.mxu0 0.0
        %1605 = vmatpush1.xpose.msra.mxu0 0.0
        %1606 = vmatprep.subr.mxu0 0.0
        %1607 = vmatpush1.xpose.msra.mxu0 %v1574
        %1608 = vmatprep.subr.mxu0 0.0
        %1609 = vmatpush2.xpose.msra.mxu0 0.0
        %1610 = vmatprep.subr.mxu0 0.0
        %1611 = vmatpush2.xpose.msra.mxu0 0.0
        %1612 = vmatprep.subr.mxu0 0.0
        %1613 = vmatpush2.xpose.msra.mxu0 0.0
        %1614 = vmatprep.subr.mxu0 0.0
        %1615 = vmatpush2.xpose.msra.mxu0 0.0
        %1616 = vmatprep.subr.mxu0 0.0
        %1617 = vmatpush2.xpose.msra.mxu0 0.0
        %1618 = vmatprep.subr.mxu0 0.0
        %1619 = vmatpush2.xpose.msra.mxu0 0.0
        %1620 = vmatprep.subr.mxu0 0.0
        %1621 = vmatpush2.xpose.msra.mxu0 0.0
        %1622 = vmatprep.subr.mxu0 0.0
        %1623 = vmatpush2.xpose.msra.mxu0 0.0
        %1624 = vmatprep.subr.mxu0 0.0
        %1625 = vmatpush2.xpose.msra.mxu0 0.0
        %1626 = vmatprep.subr.mxu0 0.0
        %1627 = vmatpush2.xpose.msra.mxu0 0.0
        %1628 = vmatprep.subr.mxu0 0.0
        %1629 = vmatpush2.xpose.msra.mxu0 0.0
        %1630 = vmatprep.subr.mxu0 0.0
        %1631 = vmatpush2.xpose.msra.mxu0 0.0
        %1632 = vmatprep.subr.mxu0 0.0
        %1633 = vmatpush2.xpose.msra.mxu0 0.0
        %1634 = vmatprep.subr.mxu0 0.0
        %1635 = vmatpush2.xpose.msra.mxu0 0.0
        %1636 = vmatprep.subr.mxu0 0.0
        %1637 = vmatpush2.xpose.msra.mxu0 0.0
        %1638 = vmatprep.subr.mxu0 0.0
        %1639 = vmatpush2.xpose.msra.mxu0 0.0
        %1640 = vmatprep.mubr.f32.mxu0 0.0
        %1641 = vmatmul.mubr.f32.gmra.mxu0 %v1572
        %v1642 = vpop.f32.mrf.mxu0
        %v1643 = vadd.f32 0.0, %v1642
        %v1644 = vpop.f32.mrf.mxu0
        %1645 = vdwg.mxu0
        %v1646 = vmul.f32 %v1643, 0.25
        %v1647 = vadd.f32 %v1646, %v1080
        %v1648 = vsel %vm1169, %v1647, -inf
        %1649 = vmax.xlane.f32.xlu0 %v1648
        %v1650 = vpop.xlane.xlu0 %1649
        %v1651 = vsub.f32 %v1647, %v1650
        %v1652 = vmul.f32 %v1651, 1.442695
        %v1653 = vpow.pop %v1652
        %v1654 = vsel %vm1169, %v1653, 0.0
        %1655 = vadd.xlane.f32.xlu0 %v1654
        %v1656 = vpop.xlane.xlu0 %1655
        %v1657 = vrcp.pop %v1656
        %v1658 = vmul.f32 %v1653, %v1657
        %1659 = vrot.lane.b32.xlu0 %v1073, 96
        %v1660 = vpop.permute.xlu0 %1659
        %v1663 = vsel %vm1169, %v1658, 0
        %1665 = vmatprep.subr.mxu0 0.0
        %1666 = vmatpush1.msra.mxu0 0.0
        %1667 = vmatprep.subr.mxu0 0.0
        %1668 = vmatpush1.msra.mxu0 0.0
        %1669 = vmatprep.subr.mxu0 0.0
        %1670 = vmatpush1.msra.mxu0 0.0
        %1671 = vmatprep.subr.mxu0 0.0
        %1672 = vmatpush1.msra.mxu0 0.0
        %1673 = vmatprep.subr.mxu0 0.0
        %1674 = vmatpush1.msra.mxu0 0.0
        %1675 = vmatprep.subr.mxu0 0.0
        %1676 = vmatpush1.msra.mxu0 0.0
        %1677 = vmatprep.subr.mxu0 0.0
        %1678 = vmatpush1.msra.mxu0 0.0
        %1679 = vmatprep.subr.mxu0 0.0
        %1680 = vmatpush1.msra.mxu0 0.0
        %1681 = vmatprep.subr.mxu0 0.0
        %1682 = vmatpush1.msra.mxu0 0.0
        %1683 = vmatprep.subr.mxu0 0.0
        %1684 = vmatpush1.msra.mxu0 0.0
        %1685 = vmatprep.subr.mxu0 0.0
        %1686 = vmatpush1.msra.mxu0 0.0
        %1687 = vmatprep.subr.mxu0 0.0
        %1688 = vmatpush1.msra.mxu0 0.0
        %1689 = vmatprep.subr.mxu0 0.0
        %1690 = vmatpush1.msra.mxu0 0.0
        %1691 = vmatprep.subr.mxu0 0.0
        %1692 = vmatpush1.msra.mxu0 0.0
        %1693 = vmatprep.subr.mxu0 0.0
        %1694 = vmatpush1.msra.mxu0 0.0
        %1695 = vmatprep.subr.mxu0 0.0
        %1696 = vmatpush1.msra.mxu0 %v1660
        %1697 = vmatprep.subr.mxu0 0.0
        %1698 = vmatpush2.msra.mxu0 0.0
        %1699 = vmatprep.subr.mxu0 0.0
        %1700 = vmatpush2.msra.mxu0 0.0
        %1701 = vmatprep.subr.mxu0 0.0
        %1702 = vmatpush2.msra.mxu0 0.0
        %1703 = vmatprep.subr.mxu0 0.0
        %1704 = vmatpush2.msra.mxu0 0.0
        %1705 = vmatprep.subr.mxu0 0.0
        %1706 = vmatpush2.msra.mxu0 0.0
        %1707 = vmatprep.subr.mxu0 0.0
        %1708 = vmatpush2.msra.mxu0 0.0
        %1709 = vmatprep.subr.mxu0 0.0
        %1710 = vmatpush2.msra.mxu0 0.0
        %1711 = vmatprep.subr.mxu0 0.0
        %1712 = vmatpush2.msra.mxu0 0.0
        %1713 = vmatprep.subr.mxu0 0.0
        %1714 = vmatpush2.msra.mxu0 0.0
        %1715 = vmatprep.subr.mxu0 0.0
        %1716 = vmatpush2.msra.mxu0 0.0
        %1717 = vmatprep.subr.mxu0 0.0
        %1718 = vmatpush2.msra.mxu0 0.0
        %1719 = vmatprep.subr.mxu0 0.0
        %1720 = vmatpush2.msra.mxu0 0.0
        %1721 = vmatprep.subr.mxu0 0.0
        %1722 = vmatpush2.msra.mxu0 0.0
        %1723 = vmatprep.subr.mxu0 0.0
        %1724 = vmatpush2.msra.mxu0 0.0
        %1725 = vmatprep.subr.mxu0 0.0
        %1726 = vmatpush2.msra.mxu0 0.0
        %1727 = vmatprep.subr.mxu0 0.0
        %1728 = vmatpush2.msra.mxu0 0.0
        %1729 = vmatprep.mubr.f32.mxu0 0.0
        %1730 = vmatmul.mubr.f32.gmra.mxu0 %v1663
        %v1731 = vpop.f32.mrf.mxu0
        %v1732 = vadd.f32 0.0, %v1731
        %v1733 = vpop.f32.mrf.mxu0
        %1734 = vdwg.mxu0
        %v1736 = vsel %vm1092, %v1732, 0
        %1738 = vmatprep.subr.mxu0 0.0
        %1739 = vmatpush1.msra.mxu0 0.0
        %1740 = vmatprep.subr.mxu0 0.0
        %1741 = vmatpush1.msra.mxu0 0.0
        %1742 = vmatprep.subr.mxu0 0.0
        %1743 = vmatpush1.msra.mxu0 0.0
        %1744 = vmatprep.subr.mxu0 0.0
        %1745 = vmatpush1.msra.mxu0 0.0
        %1746 = vmatprep.subr.mxu0 0.0
        %1747 = vmatpush1.msra.mxu0 0.0
        %1748 = vmatprep.subr.mxu0 0.0
        %1749 = vmatpush1.msra.mxu0 0.0
        %1750 = vmatprep.subr.mxu0 0.0
        %1751 = vmatpush1.msra.mxu0 0.0
        %1752 = vmatprep.subr.mxu0 0.0
        %1753 = vmatpush1.msra.mxu0 0.0
        %1754 = vmatprep.subr.mxu0 0.0
        %1755 = vmatpush1.msra.mxu0 0.0
        %1756 = vmatprep.subr.mxu0 0.0
        %1757 = vmatpush1.msra.mxu0 0.0
        %1758 = vmatprep.subr.mxu0 0.0
        %1759 = vmatpush1.msra.mxu0 0.0
        %1760 = vmatprep.subr.mxu0 0.0
        %1761 = vmatpush1.msra.mxu0 0.0
        %1762 = vmatprep.subr.mxu0 0.0
        %1763 = vmatpush1.msra.mxu0 0.0
        %1764 = vmatprep.subr.mxu0 0.0
        %1765 = vmatpush1.msra.mxu0 0.0
        %1766 = vmatprep.subr.mxu0 0.0
        %1767 = vmatpush1.msra.mxu0 %v1086
        %1768 = vmatprep.subr.mxu0 0.0
        %1769 = vmatpush1.msra.mxu0 %v1085
        %1770 = vmatprep.subr.mxu0 0.0
        %1771 = vmatpush2.msra.mxu0 0.0
        %1772 = vmatprep.subr.mxu0 0.0
        %1773 = vmatpush2.msra.mxu0 0.0
        %1774 = vmatprep.subr.mxu0 0.0
        %1775 = vmatpush2.msra.mxu0 0.0
        %1776 = vmatprep.subr.mxu0 0.0
        %1777 = vmatpush2.msra.mxu0 0.0
        %1778 = vmatprep.subr.mxu0 0.0
        %1779 = vmatpush2.msra.mxu0 0.0
        %1780 = vmatprep.subr.mxu0 0.0
        %1781 = vmatpush2.msra.mxu0 0.0
        %1782 = vmatprep.subr.mxu0 0.0
        %1783 = vmatpush2.msra.mxu0 0.0
        %1784 = vmatprep.subr.mxu0 0.0
        %1785 = vmatpush2.msra.mxu0 0.0
        %1786 = vmatprep.subr.mxu0 0.0
        %1787 = vmatpush2.msra.mxu0 0.0
        %1788 = vmatprep.subr.mxu0 0.0
        %1789 = vmatpush2.msra.mxu0 0.0
        %1790 = vmatprep.subr.mxu0 0.0
        %1791 = vmatpush2.msra.mxu0 0.0
        %1792 = vmatprep.subr.mxu0 0.0
        %1793 = vmatpush2.msra.mxu0 0.0
        %1794 = vmatprep.subr.mxu0 0.0
        %1795 = vmatpush2.msra.mxu0 0.0
        %1796 = vmatprep.subr.mxu0 0.0
        %1797 = vmatpush2.msra.mxu0 0.0
        %1798 = vmatprep.subr.mxu0 0.0
        %1799 = vmatpush2.msra.mxu0 0.0
        %1800 = vmatprep.subr.mxu0 0.0
        %1801 = vmatpush2.msra.mxu0 0.0
        %1802 = vmatprep.mubr.f32.mxu0 0.0
        %1803 = vmatmul.mubr.f32.gmra.mxu0 %v1736
        %v1804 = vpop.f32.mrf.mxu0
        %v1805 = vadd.f32 0.0, %v1804
        %v1806 = vpop.f32.mrf.mxu0
        %1807 = vdwg.mxu0
        %v1808 = vadd.f32 %v1565, %v1805
        %1809 = vrot.lane.b32.xlu0 %v1071, 80
        %v1810 = vpop.permute.xlu0 %1809
        %1811 = vrot.lane.b32.xlu0 %v1071, 16
        %v1812 = vpop.permute.xlu0 %1811
        %v1813 = vsel %vm1092, %v1810, 0
        %v1815 = vsel %vm1092, %v1812, 0
        %1817 = vmatprep.subr.mxu0 0.0
        %1818 = vmatpush1.xpose.msra.mxu0 0.0
        %1819 = vmatprep.subr.mxu0 0.0
        %1820 = vmatpush1.xpose.msra.mxu0 0.0
        %1821 = vmatprep.subr.mxu0 0.0
        %1822 = vmatpush1.xpose.msra.mxu0 0.0
        %1823 = vmatprep.subr.mxu0 0.0
        %1824 = vmatpush1.xpose.msra.mxu0 0.0
        %1825 = vmatprep.subr.mxu0 0.0
        %1826 = vmatpush1.xpose.msra.mxu0 0.0
        %1827 = vmatprep.subr.mxu0 0.0
        %1828 = vmatpush1.xpose.msra.mxu0 0.0
        %1829 = vmatprep.subr.mxu0 0.0
        %1830 = vmatpush1.xpose.msra.mxu0 0.0
        %1831 = vmatprep.subr.mxu0 0.0
        %1832 = vmatpush1.xpose.msra.mxu0 0.0
        %1833 = vmatprep.subr.mxu0 0.0
        %1834 = vmatpush1.xpose.msra.mxu0 0.0
        %1835 = vmatprep.subr.mxu0 0.0
        %1836 = vmatpush1.xpose.msra.mxu0 0.0
        %1837 = vmatprep.subr.mxu0 0.0
        %1838 = vmatpush1.xpose.msra.mxu0 0.0
        %1839 = vmatprep.subr.mxu0 0.0
        %1840 = vmatpush1.xpose.msra.mxu0 0.0
        %1841 = vmatprep.subr.mxu0 0.0
        %1842 = vmatpush1.xpose.msra.mxu0 0.0
        %1843 = vmatprep.subr.mxu0 0.0
        %1844 = vmatpush1.xpose.msra.mxu0 0.0
        %1845 = vmatprep.subr.mxu0 0.0
        %1846 = vmatpush1.xpose.msra.mxu0 0.0
        %1847 = vmatprep.subr.mxu0 0.0
        %1848 = vmatpush1.xpose.msra.mxu0 %v1815
        %1849 = vmatprep.subr.mxu0 0.0
        %1850 = vmatpush2.xpose.msra.mxu0 0.0
        %1851 = vmatprep.subr.mxu0 0.0
        %1852 = vmatpush2.xpose.msra.mxu0 0.0
        %1853 = vmatprep.subr.mxu0 0.0
        %1854 = vmatpush2.xpose.msra.mxu0 0.0
        %1855 = vmatprep.subr.mxu0 0.0
        %1856 = vmatpush2.xpose.msra.mxu0 0.0
        %1857 = vmatprep.subr.mxu0 0.0
        %1858 = vmatpush2.xpose.msra.mxu0 0.0
        %1859 = vmatprep.subr.mxu0 0.0
        %1860 = vmatpush2.xpose.msra.mxu0 0.0
        %1861 = vmatprep.subr.mxu0 0.0
        %1862 = vmatpush2.xpose.msra.mxu0 0.0
        %1863 = vmatprep.subr.mxu0 0.0
        %1864 = vmatpush2.xpose.msra.mxu0 0.0
        %1865 = vmatprep.subr.mxu0 0.0
        %1866 = vmatpush2.xpose.msra.mxu0 0.0
        %1867 = vmatprep.subr.mxu0 0.0
        %1868 = vmatpush2.xpose.msra.mxu0 0.0
        %1869 = vmatprep.subr.mxu0 0.0
        %1870 = vmatpush2.xpose.msra.mxu0 0.0
        %1871 = vmatprep.subr.mxu0 0.0
        %1872 = vmatpush2.xpose.msra.mxu0 0.0
        %1873 = vmatprep.subr.mxu0 0.0
        %1874 = vmatpush2.xpose.msra.mxu0 0.0
        %1875 = vmatprep.subr.mxu0 0.0
        %1876 = vmatpush2.xpose.msra.mxu0 0.0
        %1877 = vmatprep.subr.mxu0 0.0
        %1878 = vmatpush2.xpose.msra.mxu0 0.0
        %1879 = vmatprep.subr.mxu0 0.0
        %1880 = vmatpush2.xpose.msra.mxu0 0.0
        %1881 = vmatprep.mubr.f32.mxu0 0.0
        %1882 = vmatmul.mubr.f32.gmra.mxu0 %v1813
        %v1883 = vpop.f32.mrf.mxu0
        %v1884 = vadd.f32 0.0, %v1883
        %v1885 = vpop.f32.mrf.mxu0
        %1886 = vdwg.mxu0
        %v1887 = vmul.f32 %v1884, 0.25
        %v1888 = vadd.f32 %v1887, %v1080
        %v1889 = vsel %vm1169, %v1888, -inf
        %1890 = vmax.xlane.f32.xlu0 %v1889
        %v1891 = vpop.xlane.xlu0 %1890
        %v1892 = vsub.f32 %v1888, %v1891
        %v1893 = vmul.f32 %v1892, 1.442695
        %v1894 = vpow.pop %v1893
        %v1895 = vsel %vm1169, %v1894, 0.0
        %1896 = vadd.xlane.f32.xlu0 %v1895
        %v1897 = vpop.xlane.xlu0 %1896
        %v1898 = vrcp.pop %v1897
        %v1899 = vmul.f32 %v1894, %v1898
        %1900 = vrot.lane.b32.xlu0 %v1073, 80
        %v1901 = vpop.permute.xlu0 %1900
        %v1904 = vsel %vm1169, %v1899, 0
        %1906 = vmatprep.subr.mxu0 0.0
        %1907 = vmatpush1.msra.mxu0 0.0
        %1908 = vmatprep.subr.mxu0 0.0
        %1909 = vmatpush1.msra.mxu0 0.0
        %1910 = vmatprep.subr.mxu0 0.0
        %1911 = vmatpush1.msra.mxu0 0.0
        %1912 = vmatprep.subr.mxu0 0.0
        %1913 = vmatpush1.msra.mxu0 0.0
        %1914 = vmatprep.subr.mxu0 0.0
        %1915 = vmatpush1.msra.mxu0 0.0
        %1916 = vmatprep.subr.mxu0 0.0
        %1917 = vmatpush1.msra.mxu0 0.0
        %1918 = vmatprep.subr.mxu0 0.0
        %1919 = vmatpush1.msra.mxu0 0.0
        %1920 = vmatprep.subr.mxu0 0.0
        %1921 = vmatpush1.msra.mxu0 0.0
        %1922 = vmatprep.subr.mxu0 0.0
        %1923 = vmatpush1.msra.mxu0 0.0
        %1924 = vmatprep.subr.mxu0 0.0
        %1925 = vmatpush1.msra.mxu0 0.0
        %1926 = vmatprep.subr.mxu0 0.0
        %1927 = vmatpush1.msra.mxu0 0.0
        %1928 = vmatprep.subr.mxu0 0.0
        %1929 = vmatpush1.msra.mxu0 0.0
        %1930 = vmatprep.subr.mxu0 0.0
        %1931 = vmatpush1.msra.mxu0 0.0
        %1932 = vmatprep.subr.mxu0 0.0
        %1933 = vmatpush1.msra.mxu0 0.0
        %1934 = vmatprep.subr.mxu0 0.0
        %1935 = vmatpush1.msra.mxu0 0.0
        %1936 = vmatprep.subr.mxu0 0.0
        %1937 = vmatpush1.msra.mxu0 %v1901
        %1938 = vmatprep.subr.mxu0 0.0
        %1939 = vmatpush2.msra.mxu0 0.0
        %1940 = vmatprep.subr.mxu0 0.0
        %1941 = vmatpush2.msra.mxu0 0.0
        %1942 = vmatprep.subr.mxu0 0.0
        %1943 = vmatpush2.msra.mxu0 0.0
        %1944 = vmatprep.subr.mxu0 0.0
        %1945 = vmatpush2.msra.mxu0 0.0
        %1946 = vmatprep.subr.mxu0 0.0
        %1947 = vmatpush2.msra.mxu0 0.0
        %1948 = vmatprep.subr.mxu0 0.0
        %1949 = vmatpush2.msra.mxu0 0.0
        %1950 = vmatprep.subr.mxu0 0.0
        %1951 = vmatpush2.msra.mxu0 0.0
        %1952 = vmatprep.subr.mxu0 0.0
        %1953 = vmatpush2.msra.mxu0 0.0
        %1954 = vmatprep.subr.mxu0 0.0
        %1955 = vmatpush2.msra.mxu0 0.0
        %1956 = vmatprep.subr.mxu0 0.0
        %1957 = vmatpush2.msra.mxu0 0.0
        %1958 = vmatprep.subr.mxu0 0.0
        %1959 = vmatpush2.msra.mxu0 0.0
        %1960 = vmatprep.subr.mxu0 0.0
        %1961 = vmatpush2.msra.mxu0 0.0
        %1962 = vmatprep.subr.mxu0 0.0
        %1963 = vmatpush2.msra.mxu0 0.0
        %1964 = vmatprep.subr.mxu0 0.0
        %1965 = vmatpush2.msra.mxu0 0.0
        %1966 = vmatprep.subr.mxu0 0.0
        %1967 = vmatpush2.msra.mxu0 0.0
        %1968 = vmatprep.subr.mxu0 0.0
        %1969 = vmatpush2.msra.mxu0 0.0
        %1970 = vmatprep.mubr.f32.mxu0 0.0
        %1971 = vmatmul.mubr.f32.gmra.mxu0 %v1904
        %v1972 = vpop.f32.mrf.mxu0
        %v1973 = vadd.f32 0.0, %v1972
        %v1974 = vpop.f32.mrf.mxu0
        %1975 = vdwg.mxu0
        %v1977 = vsel %vm1092, %v1973, 0
        %1979 = vmatprep.subr.mxu0 0.0
        %1980 = vmatpush1.msra.mxu0 0.0
        %1981 = vmatprep.subr.mxu0 0.0
        %1982 = vmatpush1.msra.mxu0 0.0
        %1983 = vmatprep.subr.mxu0 0.0
        %1984 = vmatpush1.msra.mxu0 0.0
        %1985 = vmatprep.subr.mxu0 0.0
        %1986 = vmatpush1.msra.mxu0 0.0
        %1987 = vmatprep.subr.mxu0 0.0
        %1988 = vmatpush1.msra.mxu0 0.0
        %1989 = vmatprep.subr.mxu0 0.0
        %1990 = vmatpush1.msra.mxu0 0.0
        %1991 = vmatprep.subr.mxu0 0.0
        %1992 = vmatpush1.msra.mxu0 0.0
        %1993 = vmatprep.subr.mxu0 0.0
        %1994 = vmatpush1.msra.mxu0 0.0
        %1995 = vmatprep.subr.mxu0 0.0
        %1996 = vmatpush1.msra.mxu0 0.0
        %1997 = vmatprep.subr.mxu0 0.0
        %1998 = vmatpush1.msra.mxu0 0.0
        %1999 = vmatprep.subr.mxu0 0.0
        %2000 = vmatpush1.msra.mxu0 0.0
        %2001 = vmatprep.subr.mxu0 0.0
        %2002 = vmatpush1.msra.mxu0 0.0
        %2003 = vmatprep.subr.mxu0 0.0
        %2004 = vmatpush1.msra.mxu0 0.0
        %2005 = vmatprep.subr.mxu0 0.0
        %2006 = vmatpush1.msra.mxu0 0.0
        %2007 = vmatprep.subr.mxu0 0.0
        %2008 = vmatpush1.msra.mxu0 %v1088
        %2009 = vmatprep.subr.mxu0 0.0
        %2010 = vmatpush1.msra.mxu0 %v1087
        %2011 = vmatprep.subr.mxu0 0.0
        %2012 = vmatpush2.msra.mxu0 0.0
        %2013 = vmatprep.subr.mxu0 0.0
        %2014 = vmatpush2.msra.mxu0 0.0
        %2015 = vmatprep.subr.mxu0 0.0
        %2016 = vmatpush2.msra.mxu0 0.0
        %2017 = vmatprep.subr.mxu0 0.0
        %2018 = vmatpush2.msra.mxu0 0.0
        %2019 = vmatprep.subr.mxu0 0.0
        %2020 = vmatpush2.msra.mxu0 0.0
        %2021 = vmatprep.subr.mxu0 0.0
        %2022 = vmatpush2.msra.mxu0 0.0
        %2023 = vmatprep.subr.mxu0 0.0
        %2024 = vmatpush2.msra.mxu0 0.0
        %2025 = vmatprep.subr.mxu0 0.0
        %2026 = vmatpush2.msra.mxu0 0.0
        %2027 = vmatprep.subr.mxu0 0.0
        %2028 = vmatpush2.msra.mxu0 0.0
        %2029 = vmatprep.subr.mxu0 0.0
        %2030 = vmatpush2.msra.mxu0 0.0
        %2031 = vmatprep.subr.mxu0 0.0
        %2032 = vmatpush2.msra.mxu0 0.0
        %2033 = vmatprep.subr.mxu0 0.0
        %2034 = vmatpush2.msra.mxu0 0.0
        %2035 = vmatprep.subr.mxu0 0.0
        %2036 = vmatpush2.msra.mxu0 0.0
        %2037 = vmatprep.subr.mxu0 0.0
        %2038 = vmatpush2.msra.mxu0 0.0
        %2039 = vmatprep.subr.mxu0 0.0
        %2040 = vmatpush2.msra.mxu0 0.0
        %2041 = vmatprep.subr.mxu0 0.0
        %2042 = vmatpush2.msra.mxu0 0.0
        %2043 = vmatprep.mubr.f32.mxu0 0.0
        %2044 = vmatmul.mubr.f32.gmra.mxu0 %v1977
        %v2045 = vpop.f32.mrf.mxu0
        %v2046 = vadd.f32 0.0, %v2045
        %v2047 = vpop.f32.mrf.mxu0
        %2048 = vdwg.mxu0
        %v2049 = vadd.f32 %v1808, %v2046
        %v2050 = vadd.f32 %v967, %v2049
        %v2051 = vlaneseq
        %v2052 = vshrl.u32 %v2051, 7
        %v2053 = vsub.s32 0, %v2052
        %v2054 = vrot.slane %v970, %v2053
        %v2055 = vadd.f32 %v2050, %v2054
        %v2056 = vsel %vm1000, %v2055, 0.0
        %2057 = vadd.xlane.f32.xlu0 %v2056
        %v2058 = vpop.xlane.xlu0 %2057
        %v2059 = vrcp.pop 64.0
        %v2060 = vmul.f32 %v2058, %v2059
        %v2061 = vsub.f32 %v2055, %v2060
        %v2062 = vmul.f32 %v2061, %v2061
        %v2063 = vsel %vm1000, %v2062, 0.0
        %2064 = vadd.xlane.f32.xlu0 %v2063
        %v2065 = vpop.xlane.xlu0 %2064
        %v2066 = vmul.f32 %v2065, %v2059
        %v2067 = vadd.f32 %v2066, 1e-05
        %v2068 = vrsqrt.pop %v2067
        %v2069 = vmul.f32 %v2061, %v2068
        %v2070 = vlaneseq
        %v2071 = vshrl.u32 %v2070, 7
        %v2072 = vsub.s32 3, %v2071
        %v2073 = vrot.slane %v970, %v2072
        %v2074 = vmul.f32 %v2069, %v2073
        %v2075 = vlaneseq
        %v2076 = vshrl.u32 %v2075, 7
        %v2077 = vsub.s32 4, %v2076
        %v2078 = vrot.slane %v970, %v2077
        %v2079 = vadd.f32 %v2074, %v2078
        %v2080 = vld [vmem:[%s948] sm:$0xff]
        %v2081 = vld [vmem:[%s948 + $0x8] sm:$0xff]
        %v2082 = vld [vmem:[%s948 + $0x10] sm:$0xff]
        %v2083 = vld [vmem:[%s948 + $0x18] sm:$0xff]
        %v2084 = vld [vmem:[%s948 + $0x20] sm:$0xff]
        %v2085 = vld [vmem:[%s948 + $0x28] sm:$0xff]
        %v2086 = vld [vmem:[%s948 + $0x30] sm:$0xff]
        %v2087 = vld [vmem:[%s948 + $0x38] sm:$0xff]
        %v2088 = vld [vmem:[%s951] sm:$0x1]
        %v2090 = vlaneseq
        %v2091 = vshrl.u32 %v2090, 7
        %v2092 = vsub.s32 0, %v2091
        %v2093 = vrot.slane %v2088, %v2092
        %v2096 = vsel %vm1000, %v2079, 0
        %2098 = vmatprep.subr.mxu0 0.0
        %2099 = vmatpush1.msra.mxu0 0.0
        %2100 = vmatprep.subr.mxu0 0.0
        %2101 = vmatpush1.msra.mxu0 0.0
        %2102 = vmatprep.subr.mxu0 0.0
        %2103 = vmatpush1.msra.mxu0 0.0
        %2104 = vmatprep.subr.mxu0 0.0
        %2105 = vmatpush1.msra.mxu0 0.0
        %2106 = vmatprep.subr.mxu0 0.0
        %2107 = vmatpush1.msra.mxu0 0.0
        %2108 = vmatprep.subr.mxu0 0.0
        %2109 = vmatpush1.msra.mxu0 0.0
        %2110 = vmatprep.subr.mxu0 0.0
        %2111 = vmatpush1.msra.mxu0 0.0
        %2112 = vmatprep.subr.mxu0 0.0
        %2113 = vmatpush1.msra.mxu0 0.0
        %2114 = vmatprep.subr.mxu0 0.0
        %2115 = vmatpush1.msra.mxu0 %v2087
        %2116 = vmatprep.subr.mxu0 0.0
        %2117 = vmatpush1.msra.mxu0 %v2086
        %2118 = vmatprep.subr.mxu0 0.0
        %2119 = vmatpush1.msra.mxu0 %v2085
        %2120 = vmatprep.subr.mxu0 0.0
        %2121 = vmatpush1.msra.mxu0 %v2084
        %2122 = vmatprep.subr.mxu0 0.0
        %2123 = vmatpush1.msra.mxu0 %v2083
        %2124 = vmatprep.subr.mxu0 0.0
        %2125 = vmatpush1.msra.mxu0 %v2082
        %2126 = vmatprep.subr.mxu0 0.0
        %2127 = vmatpush1.msra.mxu0 %v2081
        %2128 = vmatprep.subr.mxu0 0.0
        %2129 = vmatpush1.msra.mxu0 %v2080
        %2130 = vmatprep.subr.mxu0 0.0
        %2131 = vmatpush2.msra.mxu0 0.0
        %2132 = vmatprep.subr.mxu0 0.0
        %2133 = vmatpush2.msra.mxu0 0.0
        %2134 = vmatprep.subr.mxu0 0.0
        %2135 = vmatpush2.msra.mxu0 0.0
        %2136 = vmatprep.subr.mxu0 0.0
        %2137 = vmatpush2.msra.mxu0 0.0
        %2138 = vmatprep.subr.mxu0 0.0
        %2139 = vmatpush2.msra.mxu0 0.0
        %2140 = vmatprep.subr.mxu0 0.0
        %2141 = vmatpush2.msra.mxu0 0.0
        %2142 = vmatprep.subr.mxu0 0.0
        %2143 = vmatpush2.msra.mxu0 0.0
        %2144 = vmatprep.subr.mxu0 0.0
        %2145 = vmatpush2.msra.mxu0 0.0
        %2146 = vmatprep.subr.mxu0 0.0
        %2147 = vmatpush2.msra.mxu0 0.0
        %2148 = vmatprep.subr.mxu0 0.0
        %2149 = vmatpush2.msra.mxu0 0.0
        %2150 = vmatprep.subr.mxu0 0.0
        %2151 = vmatpush2.msra.mxu0 0.0
        %2152 = vmatprep.subr.mxu0 0.0
        %2153 = vmatpush2.msra.mxu0 0.0
        %2154 = vmatprep.subr.mxu0 0.0
        %2155 = vmatpush2.msra.mxu0 0.0
        %2156 = vmatprep.subr.mxu0 0.0
        %2157 = vmatpush2.msra.mxu0 0.0
        %2158 = vmatprep.subr.mxu0 0.0
        %2159 = vmatpush2.msra.mxu0 0.0
        %2160 = vmatprep.subr.mxu0 0.0
        %2161 = vmatpush2.msra.mxu0 0.0
        %2162 = vmatprep.mubr.f32.mxu0 0.0
        %2163 = vmatmul.mubr.f32.gmra.mxu0 %v2096
        %v2164 = vpop.f32.mrf.mxu0
        %v2165 = vadd.f32 %v2093, %v2164
        %v2166 = vpop.f32.mrf.mxu0
        %2167 = vdwg.mxu0
        %v2168 = vld [vmem:[%s769] sm:$0xff]
        %v2169 = vld [vmem:[%s769 + $0x8] sm:$0xff]
        %v2170 = vld [vmem:[%s769 + $0x10] sm:$0xff]
        %v2171 = vld [vmem:[%s769 + $0x18] sm:$0xff]
        %v2172 = vld [vmem:[%s769 + $0x20] sm:$0xff]
        %v2173 = vld [vmem:[%s769 + $0x28] sm:$0xff]
        %v2174 = vld [vmem:[%s769 + $0x30] sm:$0xff]
        %v2175 = vld [vmem:[%s769 + $0x38] sm:$0xff]
        %v2176 = vld [vmem:[%s954] sm:$0x1]
        %v2178 = vlaneseq
        %v2179 = vshrl.u32 %v2178, 7
        %v2180 = vsub.s32 0, %v2179
        %v2181 = vrot.slane %v2176, %v2180
        %v2184 = vsel %vm1000, %v968, 0
        %v2187 = vsel %vm1000, %v969, 0
        %2189 = vmatprep.subr.mxu0 0.0
        %2190 = vmatpush1.msra.mxu0 0.0
        %2191 = vmatprep.subr.mxu0 0.0
        %2192 = vmatpush1.msra.mxu0 0.0
        %2193 = vmatprep.subr.mxu0 0.0
        %2194 = vmatpush1.msra.mxu0 0.0
        %2195 = vmatprep.subr.mxu0 0.0
        %2196 = vmatpush1.msra.mxu0 0.0
        %2197 = vmatprep.subr.mxu0 0.0
        %2198 = vmatpush1.msra.mxu0 0.0
        %2199 = vmatprep.subr.mxu0 0.0
        %2200 = vmatpush1.msra.mxu0 0.0
        %2201 = vmatprep.subr.mxu0 0.0
        %2202 = vmatpush1.msra.mxu0 0.0
        %2203 = vmatprep.subr.mxu0 0.0
        %2204 = vmatpush1.msra.mxu0 0.0
        %2205 = vmatprep.subr.mxu0 0.0
        %2206 = vmatpush1.msra.mxu0 %v2175
        %2207 = vmatprep.subr.mxu0 0.0
        %2208 = vmatpush1.msra.mxu0 %v2174
        %2209 = vmatprep.subr.mxu0 0.0
        %2210 = vmatpush1.msra.mxu0 %v2173
        %2211 = vmatprep.subr.mxu0 0.0
        %2212 = vmatpush1.msra.mxu0 %v2172
        %2213 = vmatprep.subr.mxu0 0.0
        %2214 = vmatpush1.msra.mxu0 %v2171
        %2215 = vmatprep.subr.mxu0 0.0
        %2216 = vmatpush1.msra.mxu0 %v2170
        %2217 = vmatprep.subr.mxu0 0.0
        %2218 = vmatpush1.msra.mxu0 %v2169
        %2219 = vmatprep.subr.mxu0 0.0
        %2220 = vmatpush1.msra.mxu0 %v2168
        %2221 = vmatprep.subr.mxu0 0.0
        %2222 = vmatpush2.msra.mxu0 0.0
        %2223 = vmatprep.subr.mxu0 0.0
        %2224 = vmatpush2.msra.mxu0 0.0
        %2225 = vmatprep.subr.mxu0 0.0
        %2226 = vmatpush2.msra.mxu0 0.0
        %2227 = vmatprep.subr.mxu0 0.0
        %2228 = vmatpush2.msra.mxu0 0.0
        %2229 = vmatprep.subr.mxu0 0.0
        %2230 = vmatpush2.msra.mxu0 0.0
        %2231 = vmatprep.subr.mxu0 0.0
        %2232 = vmatpush2.msra.mxu0 0.0
        %2233 = vmatprep.subr.mxu0 0.0
        %2234 = vmatpush2.msra.mxu0 0.0
        %2235 = vmatprep.subr.mxu0 0.0
        %2236 = vmatpush2.msra.mxu0 0.0
        %2237 = vmatprep.subr.mxu0 0.0
        %2238 = vmatpush2.msra.mxu0 0.0
        %2239 = vmatprep.subr.mxu0 0.0
        %2240 = vmatpush2.msra.mxu0 0.0
        %2241 = vmatprep.subr.mxu0 0.0
        %2242 = vmatpush2.msra.mxu0 0.0
        %2243 = vmatprep.subr.mxu0 0.0
        %2244 = vmatpush2.msra.mxu0 0.0
        %2245 = vmatprep.subr.mxu0 0.0
        %2246 = vmatpush2.msra.mxu0 0.0
        %2247 = vmatprep.subr.mxu0 0.0
        %2248 = vmatpush2.msra.mxu0 0.0
        %2249 = vmatprep.subr.mxu0 0.0
        %2250 = vmatpush2.msra.mxu0 0.0
        %2251 = vmatprep.subr.mxu0 0.0
        %2252 = vmatpush2.msra.mxu0 0.0
        %2253 = vmatprep.mubr.f32.mxu0 0.0
        %2254 = vmatmul.mubr.f32.gmra.mxu0 %v2184
        %v2255 = vpop.f32.mrf.mxu0
        %v2256 = vadd.f32 %v2181, %v2255
        %v2257 = vpop.f32.mrf.mxu0
        %2258 = vmatprep.mubr.f32.mxu0 0.0
        %2259 = vmatmul.mubr.f32.gmra.mxu0 %v2187
        %v2260 = vpop.f32.mrf.mxu0
        %v2261 = vadd.f32 %v2181, %v2260
        %v2262 = vpop.f32.mrf.mxu0
        %2263 = vdwg.mxu0
        %v2264 = vld [vmem:[%s778] sm:$0xff]
        %v2265 = vld [vmem:[%s778 + $0x8] sm:$0xff]
        %v2266 = vld [vmem:[%s778 + $0x10] sm:$0xff]
        %v2267 = vld [vmem:[%s778 + $0x18] sm:$0xff]
        %v2268 = vld [vmem:[%s778 + $0x20] sm:$0xff]
        %v2269 = vld [vmem:[%s778 + $0x28] sm:$0xff]
        %v2270 = vld [vmem:[%s778 + $0x30] sm:$0xff]
        %v2271 = vld [vmem:[%s778 + $0x38] sm:$0xff]
        %v2273 = vsel %vm1092, %v2165, 0
        %v2276 = vsel %vm1092, %v2256, 0
        %v2279 = vsel %vm1092, %v2261, 0
        %2281 = vmatprep.subr.mxu0 0.0
        %2282 = vmatpush1.xpose.msra.mxu0 0.0
        %2283 = vmatprep.subr.mxu0 0.0
        %2284 = vmatpush1.xpose.msra.mxu0 0.0
        %2285 = vmatprep.subr.mxu0 0.0
        %2286 = vmatpush1.xpose.msra.mxu0 0.0
        %2287 = vmatprep.subr.mxu0 0.0
        %2288 = vmatpush1.xpose.msra.mxu0 0.0
        %2289 = vmatprep.subr.mxu0 0.0
        %2290 = vmatpush1.xpose.msra.mxu0 0.0
        %2291 = vmatprep.subr.mxu0 0.0
        %2292 = vmatpush1.xpose.msra.mxu0 0.0
        %2293 = vmatprep.subr.mxu0 0.0
        %2294 = vmatpush1.xpose.msra.mxu0 0.0
        %2295 = vmatprep.subr.mxu0 0.0
        %2296 = vmatpush1.xpose.msra.mxu0 0.0
        %2297 = vmatprep.subr.mxu0 0.0
        %2298 = vmatpush1.xpose.msra.mxu0 0.0
        %2299 = vmatprep.subr.mxu0 0.0
        %2300 = vmatpush1.xpose.msra.mxu0 0.0
        %2301 = vmatprep.subr.mxu0 0.0
        %2302 = vmatpush1.xpose.msra.mxu0 0.0
        %2303 = vmatprep.subr.mxu0 0.0
        %2304 = vmatpush1.xpose.msra.mxu0 0.0
        %2305 = vmatprep.subr.mxu0 0.0
        %2306 = vmatpush1.xpose.msra.mxu0 0.0
        %2307 = vmatprep.subr.mxu0 0.0
        %2308 = vmatpush1.xpose.msra.mxu0 0.0
        %2309 = vmatprep.subr.mxu0 0.0
        %2310 = vmatpush1.xpose.msra.mxu0 %v2279
        %2311 = vmatprep.subr.mxu0 0.0
        %2312 = vmatpush1.xpose.msra.mxu0 %v2276
        %2313 = vmatprep.subr.mxu0 0.0
        %2314 = vmatpush2.xpose.msra.mxu0 0.0
        %2315 = vmatprep.subr.mxu0 0.0
        %2316 = vmatpush2.xpose.msra.mxu0 0.0
        %2317 = vmatprep.subr.mxu0 0.0
        %2318 = vmatpush2.xpose.msra.mxu0 0.0
        %2319 = vmatprep.subr.mxu0 0.0
        %2320 = vmatpush2.xpose.msra.mxu0 0.0
        %2321 = vmatprep.subr.mxu0 0.0
        %2322 = vmatpush2.xpose.msra.mxu0 0.0
        %2323 = vmatprep.subr.mxu0 0.0
        %2324 = vmatpush2.xpose.msra.mxu0 0.0
        %2325 = vmatprep.subr.mxu0 0.0
        %2326 = vmatpush2.xpose.msra.mxu0 0.0
        %2327 = vmatprep.subr.mxu0 0.0
        %2328 = vmatpush2.xpose.msra.mxu0 0.0
        %2329 = vmatprep.subr.mxu0 0.0
        %2330 = vmatpush2.xpose.msra.mxu0 0.0
        %2331 = vmatprep.subr.mxu0 0.0
        %2332 = vmatpush2.xpose.msra.mxu0 0.0
        %2333 = vmatprep.subr.mxu0 0.0
        %2334 = vmatpush2.xpose.msra.mxu0 0.0
        %2335 = vmatprep.subr.mxu0 0.0
        %2336 = vmatpush2.xpose.msra.mxu0 0.0
        %2337 = vmatprep.subr.mxu0 0.0
        %2338 = vmatpush2.xpose.msra.mxu0 0.0
        %2339 = vmatprep.subr.mxu0 0.0
        %2340 = vmatpush2.xpose.msra.mxu0 0.0
        %2341 = vmatprep.subr.mxu0 0.0
        %2342 = vmatpush2.xpose.msra.mxu0 0.0
        %2343 = vmatprep.subr.mxu0 0.0
        %2344 = vmatpush2.xpose.msra.mxu0 0.0
        %2345 = vmatprep.mubr.f32.mxu0 0.0
        %2346 = vmatmul.mubr.f32.gmra.mxu0 %v2273
        %v2347 = vpop.f32.mrf.mxu0
        %v2348 = vadd.f32 0.0, %v2347
        %v2349 = vpop.f32.mrf.mxu0
        %2350 = vdwg.mxu0
        %v2351 = vmul.f32 %v2348, 0.25
        %v2352 = vsel %vm1092, %v2351, -inf
        %2353 = vmax.xlane.f32.xlu0 %v2352
        %v2354 = vpop.xlane.xlu0 %2353
        %v2355 = vsub.f32 %v2351, %v2354
        %v2356 = vmul.f32 %v2355, 1.442695
        %v2357 = vpow.pop %v2356
        %v2358 = vsel %vm1092, %v2357, 0.0
        %2359 = vadd.xlane.f32.xlu0 %v2358
        %v2360 = vpop.xlane.xlu0 %2359
        %v2361 = vrcp.pop %v2360
        %v2362 = vmul.f32 %v2357, %v2361
        %2363 = vrot.lane.b32.xlu0 %v2256, 64
        %v2364 = vpop.permute.xlu0 %2363
        %2365 = vrot.lane.b32.xlu0 %v2261, 64
        %v2366 = vpop.permute.xlu0 %2365
        %v2370 = vsel %vm1092, %v2362, 0
        %2372 = vmatprep.subr.mxu0 0.0
        %2373 = vmatpush1.msra.mxu0 0.0
        %2374 = vmatprep.subr.mxu0 0.0
        %2375 = vmatpush1.msra.mxu0 0.0
        %2376 = vmatprep.subr.mxu0 0.0
        %2377 = vmatpush1.msra.mxu0 0.0
        %2378 = vmatprep.subr.mxu0 0.0
        %2379 = vmatpush1.msra.mxu0 0.0
        %2380 = vmatprep.subr.mxu0 0.0
        %2381 = vmatpush1.msra.mxu0 0.0
        %2382 = vmatprep.subr.mxu0 0.0
        %2383 = vmatpush1.msra.mxu0 0.0
        %2384 = vmatprep.subr.mxu0 0.0
        %2385 = vmatpush1.msra.mxu0 0.0
        %2386 = vmatprep.subr.mxu0 0.0
        %2387 = vmatpush1.msra.mxu0 0.0
        %2388 = vmatprep.subr.mxu0 0.0
        %2389 = vmatpush1.msra.mxu0 0.0
        %2390 = vmatprep.subr.mxu0 0.0
        %2391 = vmatpush1.msra.mxu0 0.0
        %2392 = vmatprep.subr.mxu0 0.0
        %2393 = vmatpush1.msra.mxu0 0.0
        %2394 = vmatprep.subr.mxu0 0.0
        %2395 = vmatpush1.msra.mxu0 0.0
        %2396 = vmatprep.subr.mxu0 0.0
        %2397 = vmatpush1.msra.mxu0 0.0
        %2398 = vmatprep.subr.mxu0 0.0
        %2399 = vmatpush1.msra.mxu0 0.0
        %2400 = vmatprep.subr.mxu0 0.0
        %2401 = vmatpush1.msra.mxu0 %v2366
        %2402 = vmatprep.subr.mxu0 0.0
        %2403 = vmatpush1.msra.mxu0 %v2364
        %2404 = vmatprep.subr.mxu0 0.0
        %2405 = vmatpush2.msra.mxu0 0.0
        %2406 = vmatprep.subr.mxu0 0.0
        %2407 = vmatpush2.msra.mxu0 0.0
        %2408 = vmatprep.subr.mxu0 0.0
        %2409 = vmatpush2.msra.mxu0 0.0
        %2410 = vmatprep.subr.mxu0 0.0
        %2411 = vmatpush2.msra.mxu0 0.0
        %2412 = vmatprep.subr.mxu0 0.0
        %2413 = vmatpush2.msra.mxu0 0.0
        %2414 = vmatprep.subr.mxu0 0.0
        %2415 = vmatpush2.msra.mxu0 0.0
        %2416 = vmatprep.subr.mxu0 0.0
        %2417 = vmatpush2.msra.mxu0 0.0
        %2418 = vmatprep.subr.mxu0 0.0
        %2419 = vmatpush2.msra.mxu0 0.0
        %2420 = vmatprep.subr.mxu0 0.0
        %2421 = vmatpush2.msra.mxu0 0.0
        %2422 = vmatprep.subr.mxu0 0.0
        %2423 = vmatpush2.msra.mxu0 0.0
        %2424 = vmatprep.subr.mxu0 0.0
        %2425 = vmatpush2.msra.mxu0 0.0
        %2426 = vmatprep.subr.mxu0 0.0
        %2427 = vmatpush2.msra.mxu0 0.0
        %2428 = vmatprep.subr.mxu0 0.0
        %2429 = vmatpush2.msra.mxu0 0.0
        %2430 = vmatprep.subr.mxu0 0.0
        %2431 = vmatpush2.msra.mxu0 0.0
        %2432 = vmatprep.subr.mxu0 0.0
        %2433 = vmatpush2.msra.mxu0 0.0
        %2434 = vmatprep.subr.mxu0 0.0
        %2435 = vmatpush2.msra.mxu0 0.0
        %2436 = vmatprep.mubr.f32.mxu0 0.0
        %2437 = vmatmul.mubr.f32.gmra.mxu0 %v2370
        %v2438 = vpop.f32.mrf.mxu0
        %v2439 = vadd.f32 0.0, %v2438
        %v2440 = vpop.f32.mrf.mxu0
        %2441 = vdwg.mxu0
        %2442 = vrot.lane.b32.xlu0 %v2165, 112
        %v2443 = vpop.permute.xlu0 %2442
        %2444 = vrot.lane.b32.xlu0 %v2256, 112
        %v2445 = vpop.permute.xlu0 %2444
        %2446 = vrot.lane.b32.xlu0 %v2261, 112
        %v2447 = vpop.permute.xlu0 %2446
        %v2448 = vsel %vm1092, %v2443, 0
        %v2450 = vsel %vm1092, %v2445, 0
        %v2452 = vsel %vm1092, %v2447, 0
        %2454 = vmatprep.subr.mxu0 0.0
        %2455 = vmatpush1.xpose.msra.mxu0 0.0
        %2456 = vmatprep.subr.mxu0 0.0
        %2457 = vmatpush1.xpose.msra.mxu0 0.0
        %2458 = vmatprep.subr.mxu0 0.0
        %2459 = vmatpush1.xpose.msra.mxu0 0.0
        %2460 = vmatprep.subr.mxu0 0.0
        %2461 = vmatpush1.xpose.msra.mxu0 0.0
        %2462 = vmatprep.subr.mxu0 0.0
        %2463 = vmatpush1.xpose.msra.mxu0 0.0
        %2464 = vmatprep.subr.mxu0 0.0
        %2465 = vmatpush1.xpose.msra.mxu0 0.0
        %2466 = vmatprep.subr.mxu0 0.0
        %2467 = vmatpush1.xpose.msra.mxu0 0.0
        %2468 = vmatprep.subr.mxu0 0.0
        %2469 = vmatpush1.xpose.msra.mxu0 0.0
        %2470 = vmatprep.subr.mxu0 0.0
        %2471 = vmatpush1.xpose.msra.mxu0 0.0
        %2472 = vmatprep.subr.mxu0 0.0
        %2473 = vmatpush1.xpose.msra.mxu0 0.0
        %2474 = vmatprep.subr.mxu0 0.0
        %2475 = vmatpush1.xpose.msra.mxu0 0.0
        %2476 = vmatprep.subr.mxu0 0.0
        %2477 = vmatpush1.xpose.msra.mxu0 0.0
        %2478 = vmatprep.subr.mxu0 0.0
        %2479 = vmatpush1.xpose.msra.mxu0 0.0
        %2480 = vmatprep.subr.mxu0 0.0
        %2481 = vmatpush1.xpose.msra.mxu0 0.0
        %2482 = vmatprep.subr.mxu0 0.0
        %2483 = vmatpush1.xpose.msra.mxu0 %v2452
        %2484 = vmatprep.subr.mxu0 0.0
        %2485 = vmatpush1.xpose.msra.mxu0 %v2450
        %2486 = vmatprep.subr.mxu0 0.0
        %2487 = vmatpush2.xpose.msra.mxu0 0.0
        %2488 = vmatprep.subr.mxu0 0.0
        %2489 = vmatpush2.xpose.msra.mxu0 0.0
        %2490 = vmatprep.subr.mxu0 0.0
        %2491 = vmatpush2.xpose.msra.mxu0 0.0
        %2492 = vmatprep.subr.mxu0 0.0
        %2493 = vmatpush2.xpose.msra.mxu0 0.0
        %2494 = vmatprep.subr.mxu0 0.0
        %2495 = vmatpush2.xpose.msra.mxu0 0.0
        %2496 = vmatprep.subr.mxu0 0.0
        %2497 = vmatpush2.xpose.msra.mxu0 0.0
        %2498 = vmatprep.subr.mxu0 0.0
        %2499 = vmatpush2.xpose.msra.mxu0 0.0
        %2500 = vmatprep.subr.mxu0 0.0
        %2501 = vmatpush2.xpose.msra.mxu0 0.0
        %2502 = vmatprep.subr.mxu0 0.0
        %2503 = vmatpush2.xpose.msra.mxu0 0.0
        %2504 = vmatprep.subr.mxu0 0.0
        %2505 = vmatpush2.xpose.msra.mxu0 0.0
        %2506 = vmatprep.subr.mxu0 0.0
        %2507 = vmatpush2.xpose.msra.mxu0 0.0
        %2508 = vmatprep.subr.mxu0 0.0
        %2509 = vmatpush2.xpose.msra.mxu0 0.0
        %2510 = vmatprep.subr.mxu0 0.0
        %2511 = vmatpush2.xpose.msra.mxu0 0.0
        %2512 = vmatprep.subr.mxu0 0.0
        %2513 = vmatpush2.xpose.msra.mxu0 0.0
        %2514 = vmatprep.subr.mxu0 0.0
        %2515 = vmatpush2.xpose.msra.mxu0 0.0
        %2516 = vmatprep.subr.mxu0 0.0
        %2517 = vmatpush2.xpose.msra.mxu0 0.0
        %2518 = vmatprep.mubr.f32.mxu0 0.0
        %2519 = vmatmul.mubr.f32.gmra.mxu0 %v2448
        %v2520 = vpop.f32.mrf.mxu0
        %v2521 = vadd.f32 0.0, %v2520
        %v2522 = vpop.f32.mrf.mxu0
        %2523 = vdwg.mxu0
        %v2524 = vmul.f32 %v2521, 0.25
        %v2525 = vsel %vm1092, %v2524, -inf
        %2526 = vmax.xlane.f32.xlu0 %v2525
        %v2527 = vpop.xlane.xlu0 %2526
        %v2528 = vsub.f32 %v2524, %v2527
        %v2529 = vmul.f32 %v2528, 1.442695
        %v2530 = vpow.pop %v2529
        %v2531 = vsel %vm1092, %v2530, 0.0
        %2532 = vadd.xlane.f32.xlu0 %v2531
        %v2533 = vpop.xlane.xlu0 %2532
        %v2534 = vrcp.pop %v2533
        %v2535 = vmul.f32 %v2530, %v2534
        %2536 = vrot.lane.b32.xlu0 %v2256, 48
        %v2537 = vpop.permute.xlu0 %2536
        %2538 = vrot.lane.b32.xlu0 %v2261, 48
        %v2539 = vpop.permute.xlu0 %2538
        %v2543 = vsel %vm1092, %v2535, 0
        %2545 = vmatprep.subr.mxu0 0.0
        %2546 = vmatpush1.msra.mxu0 0.0
        %2547 = vmatprep.subr.mxu0 0.0
        %2548 = vmatpush1.msra.mxu0 0.0
        %2549 = vmatprep.subr.mxu0 0.0
        %2550 = vmatpush1.msra.mxu0 0.0
        %2551 = vmatprep.subr.mxu0 0.0
        %2552 = vmatpush1.msra.mxu0 0.0
        %2553 = vmatprep.subr.mxu0 0.0
        %2554 = vmatpush1.msra.mxu0 0.0
        %2555 = vmatprep.subr.mxu0 0.0
        %2556 = vmatpush1.msra.mxu0 0.0
        %2557 = vmatprep.subr.mxu0 0.0
        %2558 = vmatpush1.msra.mxu0 0.0
        %2559 = vmatprep.subr.mxu0 0.0
        %2560 = vmatpush1.msra.mxu0 0.0
        %2561 = vmatprep.subr.mxu0 0.0
        %2562 = vmatpush1.msra.mxu0 0.0
        %2563 = vmatprep.subr.mxu0 0.0
        %2564 = vmatpush1.msra.mxu0 0.0
        %2565 = vmatprep.subr.mxu0 0.0
        %2566 = vmatpush1.msra.mxu0 0.0
        %2567 = vmatprep.subr.mxu0 0.0
        %2568 = vmatpush1.msra.mxu0 0.0
        %2569 = vmatprep.subr.mxu0 0.0
        %2570 = vmatpush1.msra.mxu0 0.0
        %2571 = vmatprep.subr.mxu0 0.0
        %2572 = vmatpush1.msra.mxu0 0.0
        %2573 = vmatprep.subr.mxu0 0.0
        %2574 = vmatpush1.msra.mxu0 %v2539
        %2575 = vmatprep.subr.mxu0 0.0
        %2576 = vmatpush1.msra.mxu0 %v2537
        %2577 = vmatprep.subr.mxu0 0.0
        %2578 = vmatpush2.msra.mxu0 0.0
        %2579 = vmatprep.subr.mxu0 0.0
        %2580 = vmatpush2.msra.mxu0 0.0
        %2581 = vmatprep.subr.mxu0 0.0
        %2582 = vmatpush2.msra.mxu0 0.0
        %2583 = vmatprep.subr.mxu0 0.0
        %2584 = vmatpush2.msra.mxu0 0.0
        %2585 = vmatprep.subr.mxu0 0.0
        %2586 = vmatpush2.msra.mxu0 0.0
        %2587 = vmatprep.subr.mxu0 0.0
        %2588 = vmatpush2.msra.mxu0 0.0
        %2589 = vmatprep.subr.mxu0 0.0
        %2590 = vmatpush2.msra.mxu0 0.0
        %2591 = vmatprep.subr.mxu0 0.0
        %2592 = vmatpush2.msra.mxu0 0.0
        %2593 = vmatprep.subr.mxu0 0.0
        %2594 = vmatpush2.msra.mxu0 0.0
        %2595 = vmatprep.subr.mxu0 0.0
        %2596 = vmatpush2.msra.mxu0 0.0
        %2597 = vmatprep.subr.mxu0 0.0
        %2598 = vmatpush2.msra.mxu0 0.0
        %2599 = vmatprep.subr.mxu0 0.0
        %2600 = vmatpush2.msra.mxu0 0.0
        %2601 = vmatprep.subr.mxu0 0.0
        %2602 = vmatpush2.msra.mxu0 0.0
        %2603 = vmatprep.subr.mxu0 0.0
        %2604 = vmatpush2.msra.mxu0 0.0
        %2605 = vmatprep.subr.mxu0 0.0
        %2606 = vmatpush2.msra.mxu0 0.0
        %2607 = vmatprep.subr.mxu0 0.0
        %2608 = vmatpush2.msra.mxu0 0.0
        %2609 = vmatprep.mubr.f32.mxu0 0.0
        %2610 = vmatmul.mubr.f32.gmra.mxu0 %v2543
        %v2611 = vpop.f32.mrf.mxu0
        %v2612 = vadd.f32 0.0, %v2611
        %v2613 = vpop.f32.mrf.mxu0
        %2614 = vdwg.mxu0
        %v2616 = vsel %vm1092, %v2612, 0
        %2618 = vmatprep.subr.mxu0 0.0
        %2619 = vmatpush1.msra.mxu0 0.0
        %2620 = vmatprep.subr.mxu0 0.0
        %2621 = vmatpush1.msra.mxu0 0.0
        %2622 = vmatprep.subr.mxu0 0.0
        %2623 = vmatpush1.msra.mxu0 0.0
        %2624 = vmatprep.subr.mxu0 0.0
        %2625 = vmatpush1.msra.mxu0 0.0
        %2626 = vmatprep.subr.mxu0 0.0
        %2627 = vmatpush1.msra.mxu0 0.0
        %2628 = vmatprep.subr.mxu0 0.0
        %2629 = vmatpush1.msra.mxu0 0.0
        %2630 = vmatprep.subr.mxu0 0.0
        %2631 = vmatpush1.msra.mxu0 0.0
        %2632 = vmatprep.subr.mxu0 0.0
        %2633 = vmatpush1.msra.mxu0 0.0
        %2634 = vmatprep.subr.mxu0 0.0
        %2635 = vmatpush1.msra.mxu0 0.0
        %2636 = vmatprep.subr.mxu0 0.0
        %2637 = vmatpush1.msra.mxu0 0.0
        %2638 = vmatprep.subr.mxu0 0.0
        %2639 = vmatpush1.msra.mxu0 0.0
        %2640 = vmatprep.subr.mxu0 0.0
        %2641 = vmatpush1.msra.mxu0 0.0
        %2642 = vmatprep.subr.mxu0 0.0
        %2643 = vmatpush1.msra.mxu0 0.0
        %2644 = vmatprep.subr.mxu0 0.0
        %2645 = vmatpush1.msra.mxu0 0.0
        %2646 = vmatprep.subr.mxu0 0.0
        %2647 = vmatpush1.msra.mxu0 %v2267
        %2648 = vmatprep.subr.mxu0 0.0
        %2649 = vmatpush1.msra.mxu0 %v2266
        %2650 = vmatprep.subr.mxu0 0.0
        %2651 = vmatpush2.msra.mxu0 0.0
        %2652 = vmatprep.subr.mxu0 0.0
        %2653 = vmatpush2.msra.mxu0 0.0
        %2654 = vmatprep.subr.mxu0 0.0
        %2655 = vmatpush2.msra.mxu0 0.0
        %2656 = vmatprep.subr.mxu0 0.0
        %2657 = vmatpush2.msra.mxu0 0.0
        %2658 = vmatprep.subr.mxu0 0.0
        %2659 = vmatpush2.msra.mxu0 0.0
        %2660 = vmatprep.subr.mxu0 0.0
        %2661 = vmatpush2.msra.mxu0 0.0
        %2662 = vmatprep.subr.mxu0 0.0
        %2663 = vmatpush2.msra.mxu0 0.0
        %2664 = vmatprep.subr.mxu0 0.0
        %2665 = vmatpush2.msra.mxu0 0.0
        %2666 = vmatprep.subr.mxu0 0.0
        %2667 = vmatpush2.msra.mxu0 0.0
        %2668 = vmatprep.subr.mxu0 0.0
        %2669 = vmatpush2.msra.mxu0 0.0
        %2670 = vmatprep.subr.mxu0 0.0
        %2671 = vmatpush2.msra.mxu0 0.0
        %2672 = vmatprep.subr.mxu0 0.0
        %2673 = vmatpush2.msra.mxu0 0.0
        %2674 = vmatprep.subr.mxu0 0.0
        %2675 = vmatpush2.msra.mxu0 0.0
        %2676 = vmatprep.subr.mxu0 0.0
        %2677 = vmatpush2.msra.mxu0 0.0
        %2678 = vmatprep.subr.mxu0 0.0
        %2679 = vmatpush2.msra.mxu0 0.0
        %2680 = vmatprep.subr.mxu0 0.0
        %2681 = vmatpush2.msra.mxu0 0.0
        %2682 = vmatprep.mubr.f32.mxu0 0.0
        %2683 = vmatmul.mubr.f32.gmra.mxu0 %v2616
        %v2684 = vpop.f32.mrf.mxu0
        %v2685 = vadd.f32 0.0, %v2684
        %v2686 = vpop.f32.mrf.mxu0
        %2687 = vdwg.mxu0
        %v2689 = vsel %vm1092, %v2439, 0
        %2691 = vmatprep.subr.mxu0 0.0
        %2692 = vmatpush1.msra.mxu0 0.0
        %2693 = vmatprep.subr.mxu0 0.0
        %2694 = vmatpush1.msra.mxu0 0.0
        %2695 = vmatprep.subr.mxu0 0.0
        %2696 = vmatpush1.msra.mxu0 0.0
        %2697 = vmatprep.subr.mxu0 0.0
        %2698 = vmatpush1.msra.mxu0 0.0
        %2699 = vmatprep.subr.mxu0 0.0
        %2700 = vmatpush1.msra.mxu0 0.0
        %2701 = vmatprep.subr.mxu0 0.0
        %2702 = vmatpush1.msra.mxu0 0.0
        %2703 = vmatprep.subr.mxu0 0.0
        %2704 = vmatpush1.msra.mxu0 0.0
        %2705 = vmatprep.subr.mxu0 0.0
        %2706 = vmatpush1.msra.mxu0 0.0
        %2707 = vmatprep.subr.mxu0 0.0
        %2708 = vmatpush1.msra.mxu0 0.0
        %2709 = vmatprep.subr.mxu0 0.0
        %2710 = vmatpush1.msra.mxu0 0.0
        %2711 = vmatprep.subr.mxu0 0.0
        %2712 = vmatpush1.msra.mxu0 0.0
        %2713 = vmatprep.subr.mxu0 0.0
        %2714 = vmatpush1.msra.mxu0 0.0
        %2715 = vmatprep.subr.mxu0 0.0
        %2716 = vmatpush1.msra.mxu0 0.0
        %2717 = vmatprep.subr.mxu0 0.0
        %2718 = vmatpush1.msra.mxu0 0.0
        %2719 = vmatprep.subr.mxu0 0.0
        %2720 = vmatpush1.msra.mxu0 %v2265
        %2721 = vmatprep.subr.mxu0 0.0
        %2722 = vmatpush1.msra.mxu0 %v2264
        %2723 = vmatprep.subr.mxu0 0.0
        %2724 = vmatpush2.msra.mxu0 0.0
        %2725 = vmatprep.subr.mxu0 0.0
        %2726 = vmatpush2.msra.mxu0 0.0
        %2727 = vmatprep.subr.mxu0 0.0
        %2728 = vmatpush2.msra.mxu0 0.0
        %2729 = vmatprep.subr.mxu0 0.0
        %2730 = vmatpush2.msra.mxu0 0.0
        %2731 = vmatprep.subr.mxu0 0.0
        %2732 = vmatpush2.msra.mxu0 0.0
        %2733 = vmatprep.subr.mxu0 0.0
        %2734 = vmatpush2.msra.mxu0 0.0
        %2735 = vmatprep.subr.mxu0 0.0
        %2736 = vmatpush2.msra.mxu0 0.0
        %2737 = vmatprep.subr.mxu0 0.0
        %2738 = vmatpush2.msra.mxu0 0.0
        %2739 = vmatprep.subr.mxu0 0.0
        %2740 = vmatpush2.msra.mxu0 0.0
        %2741 = vmatprep.subr.mxu0 0.0
        %2742 = vmatpush2.msra.mxu0 0.0
        %2743 = vmatprep.subr.mxu0 0.0
        %2744 = vmatpush2.msra.mxu0 0.0
        %2745 = vmatprep.subr.mxu0 0.0
        %2746 = vmatpush2.msra.mxu0 0.0
        %2747 = vmatprep.subr.mxu0 0.0
        %2748 = vmatpush2.msra.mxu0 0.0
        %2749 = vmatprep.subr.mxu0 0.0
        %2750 = vmatpush2.msra.mxu0 0.0
        %2751 = vmatprep.subr.mxu0 0.0
        %2752 = vmatpush2.msra.mxu0 0.0
        %2753 = vmatprep.subr.mxu0 0.0
        %2754 = vmatpush2.msra.mxu0 0.0
        %2755 = vmatprep.mubr.f32.mxu0 0.0
        %2756 = vmatmul.mubr.f32.gmra.mxu0 %v2689
        %v2757 = vpop.f32.mrf.mxu0
        %v2758 = vadd.f32 %v2685, %v2757
        %v2759 = vpop.f32.mrf.mxu0
        %2760 = vdwg.mxu0
        %2761 = vrot.lane.b32.xlu0 %v2165, 96
        %v2762 = vpop.permute.xlu0 %2761
        %2763 = vrot.lane.b32.xlu0 %v2256, 96
        %v2764 = vpop.permute.xlu0 %2763
        %2765 = vrot.lane.b32.xlu0 %v2261, 96
        %v2766 = vpop.permute.xlu0 %2765
        %v2767 = vsel %vm1092, %v2762, 0
        %v2769 = vsel %vm1092, %v2764, 0
        %v2771 = vsel %vm1092, %v2766, 0
        %2773 = vmatprep.subr.mxu0 0.0
        %2774 = vmatpush1.xpose.msra.mxu0 0.0
        %2775 = vmatprep.subr.mxu0 0.0
        %2776 = vmatpush1.xpose.msra.mxu0 0.0
        %2777 = vmatprep.subr.mxu0 0.0
        %2778 = vmatpush1.xpose.msra.mxu0 0.0
        %2779 = vmatprep.subr.mxu0 0.0
        %2780 = vmatpush1.xpose.msra.mxu0 0.0
        %2781 = vmatprep.subr.mxu0 0.0
        %2782 = vmatpush1.xpose.msra.mxu0 0.0
        %2783 = vmatprep.subr.mxu0 0.0
        %2784 = vmatpush1.xpose.msra.mxu0 0.0
        %2785 = vmatprep.subr.mxu0 0.0
        %2786 = vmatpush1.xpose.msra.mxu0 0.0
        %2787 = vmatprep.subr.mxu0 0.0
        %2788 = vmatpush1.xpose.msra.mxu0 0.0
        %2789 = vmatprep.subr.mxu0 0.0
        %2790 = vmatpush1.xpose.msra.mxu0 0.0
        %2791 = vmatprep.subr.mxu0 0.0
        %2792 = vmatpush1.xpose.msra.mxu0 0.0
        %2793 = vmatprep.subr.mxu0 0.0
        %2794 = vmatpush1.xpose.msra.mxu0 0.0
        %2795 = vmatprep.subr.mxu0 0.0
        %2796 = vmatpush1.xpose.msra.mxu0 0.0
        %2797 = vmatprep.subr.mxu0 0.0
        %2798 = vmatpush1.xpose.msra.mxu0 0.0
        %2799 = vmatprep.subr.mxu0 0.0
        %2800 = vmatpush1.xpose.msra.mxu0 0.0
        %2801 = vmatprep.subr.mxu0 0.0
        %2802 = vmatpush1.xpose.msra.mxu0 %v2771
        %2803 = vmatprep.subr.mxu0 0.0
        %2804 = vmatpush1.xpose.msra.mxu0 %v2769
        %2805 = vmatprep.subr.mxu0 0.0
        %2806 = vmatpush2.xpose.msra.mxu0 0.0
        %2807 = vmatprep.subr.mxu0 0.0
        %2808 = vmatpush2.xpose.msra.mxu0 0.0
        %2809 = vmatprep.subr.mxu0 0.0
        %2810 = vmatpush2.xpose.msra.mxu0 0.0
        %2811 = vmatprep.subr.mxu0 0.0
        %2812 = vmatpush2.xpose.msra.mxu0 0.0
        %2813 = vmatprep.subr.mxu0 0.0
        %2814 = vmatpush2.xpose.msra.mxu0 0.0
        %2815 = vmatprep.subr.mxu0 0.0
        %2816 = vmatpush2.xpose.msra.mxu0 0.0
        %2817 = vmatprep.subr.mxu0 0.0
        %2818 = vmatpush2.xpose.msra.mxu0 0.0
        %2819 = vmatprep.subr.mxu0 0.0
        %2820 = vmatpush2.xpose.msra.mxu0 0.0
        %2821 = vmatprep.subr.mxu0 0.0
        %2822 = vmatpush2.xpose.msra.mxu0 0.0
        %2823 = vmatprep.subr.mxu0 0.0
        %2824 = vmatpush2.xpose.msra.mxu0 0.0
        %2825 = vmatprep.subr.mxu0 0.0
        %2826 = vmatpush2.xpose.msra.mxu0 0.0
        %2827 = vmatprep.subr.mxu0 0.0
        %2828 = vmatpush2.xpose.msra.mxu0 0.0
        %2829 = vmatprep.subr.mxu0 0.0
        %2830 = vmatpush2.xpose.msra.mxu0 0.0
        %2831 = vmatprep.subr.mxu0 0.0
        %2832 = vmatpush2.xpose.msra.mxu0 0.0
        %2833 = vmatprep.subr.mxu0 0.0
        %2834 = vmatpush2.xpose.msra.mxu0 0.0
        %2835 = vmatprep.subr.mxu0 0.0
        %2836 = vmatpush2.xpose.msra.mxu0 0.0
        %2837 = vmatprep.mubr.f32.mxu0 0.0
        %2838 = vmatmul.mubr.f32.gmra.mxu0 %v2767
        %v2839 = vpop.f32.mrf.mxu0
        %v2840 = vadd.f32 0.0, %v2839
        %v2841 = vpop.f32.mrf.mxu0
        %2842 = vdwg.mxu0
        %v2843 = vmul.f32 %v2840, 0.25
        %v2844 = vsel %vm1092, %v2843, -inf
        %2845 = vmax.xlane.f32.xlu0 %v2844
        %v2846 = vpop.xlane.xlu0 %2845
        %v2847 = vsub.f32 %v2843, %v2846
        %v2848 = vmul.f32 %v2847, 1.442695
        %v2849 = vpow.pop %v2848
        %v2850 = vsel %vm1092, %v2849, 0.0
        %2851 = vadd.xlane.f32.xlu0 %v2850
        %v2852 = vpop.xlane.xlu0 %2851
        %v2853 = vrcp.pop %v2852
        %v2854 = vmul.f32 %v2849, %v2853
        %2855 = vrot.lane.b32.xlu0 %v2256, 32
        %v2856 = vpop.permute.xlu0 %2855
        %2857 = vrot.lane.b32.xlu0 %v2261, 32
        %v2858 = vpop.permute.xlu0 %2857
        %v2862 = vsel %vm1092, %v2854, 0
        %2864 = vmatprep.subr.mxu0 0.0
        %2865 = vmatpush1.msra.mxu0 0.0
        %2866 = vmatprep.subr.mxu0 0.0
        %2867 = vmatpush1.msra.mxu0 0.0
        %2868 = vmatprep.subr.mxu0 0.0
        %2869 = vmatpush1.msra.mxu0 0.0
        %2870 = vmatprep.subr.mxu0 0.0
        %2871 = vmatpush1.msra.mxu0 0.0
        %2872 = vmatprep.subr.mxu0 0.0
        %2873 = vmatpush1.msra.mxu0 0.0
        %2874 = vmatprep.subr.mxu0 0.0
        %2875 = vmatpush1.msra.mxu0 0.0
        %2876 = vmatprep.subr.mxu0 0.0
        %2877 = vmatpush1.msra.mxu0 0.0
        %2878 = vmatprep.subr.mxu0 0.0
        %2879 = vmatpush1.msra.mxu0 0.0
        %2880 = vmatprep.subr.mxu0 0.0
        %2881 = vmatpush1.msra.mxu0 0.0
        %2882 = vmatprep.subr.mxu0 0.0
        %2883 = vmatpush1.msra.mxu0 0.0
        %2884 = vmatprep.subr.mxu0 0.0
        %2885 = vmatpush1.msra.mxu0 0.0
        %2886 = vmatprep.subr.mxu0 0.0
        %2887 = vmatpush1.msra.mxu0 0.0
        %2888 = vmatprep.subr.mxu0 0.0
        %2889 = vmatpush1.msra.mxu0 0.0
        %2890 = vmatprep.subr.mxu0 0.0
        %2891 = vmatpush1.msra.mxu0 0.0
        %2892 = vmatprep.subr.mxu0 0.0
        %2893 = vmatpush1.msra.mxu0 %v2858
        %2894 = vmatprep.subr.mxu0 0.0
        %2895 = vmatpush1.msra.mxu0 %v2856
        %2896 = vmatprep.subr.mxu0 0.0
        %2897 = vmatpush2.msra.mxu0 0.0
        %2898 = vmatprep.subr.mxu0 0.0
        %2899 = vmatpush2.msra.mxu0 0.0
        %2900 = vmatprep.subr.mxu0 0.0
        %2901 = vmatpush2.msra.mxu0 0.0
        %2902 = vmatprep.subr.mxu0 0.0
        %2903 = vmatpush2.msra.mxu0 0.0
        %2904 = vmatprep.subr.mxu0 0.0
        %2905 = vmatpush2.msra.mxu0 0.0
        %2906 = vmatprep.subr.mxu0 0.0
        %2907 = vmatpush2.msra.mxu0 0.0
        %2908 = vmatprep.subr.mxu0 0.0
        %2909 = vmatpush2.msra.mxu0 0.0
        %2910 = vmatprep.subr.mxu0 0.0
        %2911 = vmatpush2.msra.mxu0 0.0
        %2912 = vmatprep.subr.mxu0 0.0
        %2913 = vmatpush2.msra.mxu0 0.0
        %2914 = vmatprep.subr.mxu0 0.0
        %2915 = vmatpush2.msra.mxu0 0.0
        %2916 = vmatprep.subr.mxu0 0.0
        %2917 = vmatpush2.msra.mxu0 0.0
        %2918 = vmatprep.subr.mxu0 0.0
        %2919 = vmatpush2.msra.mxu0 0.0
        %2920 = vmatprep.subr.mxu0 0.0
        %2921 = vmatpush2.msra.mxu0 0.0
        %2922 = vmatprep.subr.mxu0 0.0
        %2923 = vmatpush2.msra.mxu0 0.0
        %2924 = vmatprep.subr.mxu0 0.0
        %2925 = vmatpush2.msra.mxu0 0.0
        %2926 = vmatprep.subr.mxu0 0.0
        %2927 = vmatpush2.msra.mxu0 0.0
        %2928 = vmatprep.mubr.f32.mxu0 0.0
        %2929 = vmatmul.mubr.f32.gmra.mxu0 %v2862
        %v2930 = vpop.f32.mrf.mxu0
        %v2931 = vadd.f32 0.0, %v2930
        %v2932 = vpop.f32.mrf.mxu0
        %2933 = vdwg.mxu0
        %v2935 = vsel %vm1092, %v2931, 0
        %2937 = vmatprep.subr.mxu0 0.0
        %2938 = vmatpush1.msra.mxu0 0.0
        %2939 = vmatprep.subr.mxu0 0.0
        %2940 = vmatpush1.msra.mxu0 0.0
        %2941 = vmatprep.subr.mxu0 0.0
        %2942 = vmatpush1.msra.mxu0 0.0
        %2943 = vmatprep.subr.mxu0 0.0
        %2944 = vmatpush1.msra.mxu0 0.0
        %2945 = vmatprep.subr.mxu0 0.0
        %2946 = vmatpush1.msra.mxu0 0.0
        %2947 = vmatprep.subr.mxu0 0.0
        %2948 = vmatpush1.msra.mxu0 0.0
        %2949 = vmatprep.subr.mxu0 0.0
        %2950 = vmatpush1.msra.mxu0 0.0
        %2951 = vmatprep.subr.mxu0 0.0
        %2952 = vmatpush1.msra.mxu0 0.0
        %2953 = vmatprep.subr.mxu0 0.0
        %2954 = vmatpush1.msra.mxu0 0.0
        %2955 = vmatprep.subr.mxu0 0.0
        %2956 = vmatpush1.msra.mxu0 0.0
        %2957 = vmatprep.subr.mxu0 0.0
        %2958 = vmatpush1.msra.mxu0 0.0
        %2959 = vmatprep.subr.mxu0 0.0
        %2960 = vmatpush1.msra.mxu0 0.0
        %2961 = vmatprep.subr.mxu0 0.0
        %2962 = vmatpush1.msra.mxu0 0.0
        %2963 = vmatprep.subr.mxu0 0.0
        %2964 = vmatpush1.msra.mxu0 0.0
        %2965 = vmatprep.subr.mxu0 0.0
        %2966 = vmatpush1.msra.mxu0 %v2269
        %2967 = vmatprep.subr.mxu0 0.0
        %2968 = vmatpush1.msra.mxu0 %v2268
        %2969 = vmatprep.subr.mxu0 0.0
        %2970 = vmatpush2.msra.mxu0 0.0
        %2971 = vmatprep.subr.mxu0 0.0
        %2972 = vmatpush2.msra.mxu0 0.0
        %2973 = vmatprep.subr.mxu0 0.0
        %2974 = vmatpush2.msra.mxu0 0.0
        %2975 = vmatprep.subr.mxu0 0.0
        %2976 = vmatpush2.msra.mxu0 0.0
        %2977 = vmatprep.subr.mxu0 0.0
        %2978 = vmatpush2.msra.mxu0 0.0
        %2979 = vmatprep.subr.mxu0 0.0
        %2980 = vmatpush2.msra.mxu0 0.0
        %2981 = vmatprep.subr.mxu0 0.0
        %2982 = vmatpush2.msra.mxu0 0.0
        %2983 = vmatprep.subr.mxu0 0.0
        %2984 = vmatpush2.msra.mxu0 0.0
        %2985 = vmatprep.subr.mxu0 0.0
        %2986 = vmatpush2.msra.mxu0 0.0
        %2987 = vmatprep.subr.mxu0 0.0
        %2988 = vmatpush2.msra.mxu0 0.0
        %2989 = vmatprep.subr.mxu0 0.0
        %2990 = vmatpush2.msra.mxu0 0.0
        %2991 = vmatprep.subr.mxu0 0.0
        %2992 = vmatpush2.msra.mxu0 0.0
        %2993 = vmatprep.subr.mxu0 0.0
        %2994 = vmatpush2.msra.mxu0 0.0
        %2995 = vmatprep.subr.mxu0 0.0
        %2996 = vmatpush2.msra.mxu0 0.0
        %2997 = vmatprep.subr.mxu0 0.0
        %2998 = vmatpush2.msra.mxu0 0.0
        %2999 = vmatprep.subr.mxu0 0.0
        %3000 = vmatpush2.msra.mxu0 0.0
        %3001 = vmatprep.mubr.f32.mxu0 0.0
        %3002 = vmatmul.mubr.f32.gmra.mxu0 %v2935
        %v3003 = vpop.f32.mrf.mxu0
        %v3004 = vadd.f32 0.0, %v3003
        %v3005 = vpop.f32.mrf.mxu0
        %3006 = vdwg.mxu0
        %v3007 = vadd.f32 %v2758, %v3004
        %3008 = vrot.lane.b32.xlu0 %v2165, 80
        %v3009 = vpop.permute.xlu0 %3008
        %3010 = vrot.lane.b32.xlu0 %v2256, 80
        %v3011 = vpop.permute.xlu0 %3010
        %3012 = vrot.lane.b32.xlu0 %v2261, 80
        %v3013 = vpop.permute.xlu0 %3012
        %v3014 = vsel %vm1092, %v3009, 0
        %v3016 = vsel %vm1092, %v3011, 0
        %v3018 = vsel %vm1092, %v3013, 0
        %3020 = vmatprep.subr.mxu0 0.0
        %3021 = vmatpush1.xpose.msra.mxu0 0.0
        %3022 = vmatprep.subr.mxu0 0.0
        %3023 = vmatpush1.xpose.msra.mxu0 0.0
        %3024 = vmatprep.subr.mxu0 0.0
        %3025 = vmatpush1.xpose.msra.mxu0 0.0
        %3026 = vmatprep.subr.mxu0 0.0
        %3027 = vmatpush1.xpose.msra.mxu0 0.0
        %3028 = vmatprep.subr.mxu0 0.0
        %3029 = vmatpush1.xpose.msra.mxu0 0.0
        %3030 = vmatprep.subr.mxu0 0.0
        %3031 = vmatpush1.xpose.msra.mxu0 0.0
        %3032 = vmatprep.subr.mxu0 0.0
        %3033 = vmatpush1.xpose.msra.mxu0 0.0
        %3034 = vmatprep.subr.mxu0 0.0
        %3035 = vmatpush1.xpose.msra.mxu0 0.0
        %3036 = vmatprep.subr.mxu0 0.0
        %3037 = vmatpush1.xpose.msra.mxu0 0.0
        %3038 = vmatprep.subr.mxu0 0.0
        %3039 = vmatpush1.xpose.msra.mxu0 0.0
        %3040 = vmatprep.subr.mxu0 0.0
        %3041 = vmatpush1.xpose.msra.mxu0 0.0
        %3042 = vmatprep.subr.mxu0 0.0
        %3043 = vmatpush1.xpose.msra.mxu0 0.0
        %3044 = vmatprep.subr.mxu0 0.0
        %3045 = vmatpush1.xpose.msra.mxu0 0.0
        %3046 = vmatprep.subr.mxu0 0.0
        %3047 = vmatpush1.xpose.msra.mxu0 0.0
        %3048 = vmatprep.subr.mxu0 0.0
        %3049 = vmatpush1.xpose.msra.mxu0 %v3018
        %3050 = vmatprep.subr.mxu0 0.0
        %3051 = vmatpush1.xpose.msra.mxu0 %v3016
        %3052 = vmatprep.subr.mxu0 0.0
        %3053 = vmatpush2.xpose.msra.mxu0 0.0
        %3054 = vmatprep.subr.mxu0 0.0
        %3055 = vmatpush2.xpose.msra.mxu0 0.0
        %3056 = vmatprep.subr.mxu0 0.0
        %3057 = vmatpush2.xpose.msra.mxu0 0.0
        %3058 = vmatprep.subr.mxu0 0.0
        %3059 = vmatpush2.xpose.msra.mxu0 0.0
        %3060 = vmatprep.subr.mxu0 0.0
        %3061 = vmatpush2.xpose.msra.mxu0 0.0
        %3062 = vmatprep.subr.mxu0 0.0
        %3063 = vmatpush2.xpose.msra.mxu0 0.0
        %3064 = vmatprep.subr.mxu0 0.0
        %3065 = vmatpush2.xpose.msra.mxu0 0.0
        %3066 = vmatprep.subr.mxu0 0.0
        %3067 = vmatpush2.xpose.msra.mxu0 0.0
        %3068 = vmatprep.subr.mxu0 0.0
        %3069 = vmatpush2.xpose.msra.mxu0 0.0
        %3070 = vmatprep.subr.mxu0 0.0
        %3071 = vmatpush2.xpose.msra.mxu0 0.0
        %3072 = vmatprep.subr.mxu0 0.0
        %3073 = vmatpush2.xpose.msra.mxu0 0.0
        %3074 = vmatprep.subr.mxu0 0.0
        %3075 = vmatpush2.xpose.msra.mxu0 0.0
        %3076 = vmatprep.subr.mxu0 0.0
        %3077 = vmatpush2.xpose.msra.mxu0 0.0
        %3078 = vmatprep.subr.mxu0 0.0
        %3079 = vmatpush2.xpose.msra.mxu0 0.0
        %3080 = vmatprep.subr.mxu0 0.0
        %3081 = vmatpush2.xpose.msra.mxu0 0.0
        %3082 = vmatprep.subr.mxu0 0.0
        %3083 = vmatpush2.xpose.msra.mxu0 0.0
        %3084 = vmatprep.mubr.f32.mxu0 0.0
        %3085 = vmatmul.mubr.f32.gmra.mxu0 %v3014
        %v3086 = vpop.f32.mrf.mxu0
        %v3087 = vadd.f32 0.0, %v3086
        %v3088 = vpop.f32.mrf.mxu0
        %3089 = vdwg.mxu0
        %v3090 = vmul.f32 %v3087, 0.25
        %v3091 = vsel %vm1092, %v3090, -inf
        %3092 = vmax.xlane.f32.xlu0 %v3091
        %v3093 = vpop.xlane.xlu0 %3092
        %v3094 = vsub.f32 %v3090, %v3093
        %v3095 = vmul.f32 %v3094, 1.442695
        %v3096 = vpow.pop %v3095
        %v3097 = vsel %vm1092, %v3096, 0.0
        %3098 = vadd.xlane.f32.xlu0 %v3097
        %v3099 = vpop.xlane.xlu0 %3098
        %v3100 = vrcp.pop %v3099
        %v3101 = vmul.f32 %v3096, %v3100
        %3102 = vrot.lane.b32.xlu0 %v2256, 16
        %v3103 = vpop.permute.xlu0 %3102
        %3104 = vrot.lane.b32.xlu0 %v2261, 16
        %v3105 = vpop.permute.xlu0 %3104
        %v3109 = vsel %vm1092, %v3101, 0
        %3111 = vmatprep.subr.mxu0 0.0
        %3112 = vmatpush1.msra.mxu0 0.0
        %3113 = vmatprep.subr.mxu0 0.0
        %3114 = vmatpush1.msra.mxu0 0.0
        %3115 = vmatprep.subr.mxu0 0.0
        %3116 = vmatpush1.msra.mxu0 0.0
        %3117 = vmatprep.subr.mxu0 0.0
        %3118 = vmatpush1.msra.mxu0 0.0
        %3119 = vmatprep.subr.mxu0 0.0
        %3120 = vmatpush1.msra.mxu0 0.0
        %3121 = vmatprep.subr.mxu0 0.0
        %3122 = vmatpush1.msra.mxu0 0.0
        %3123 = vmatprep.subr.mxu0 0.0
        %3124 = vmatpush1.msra.mxu0 0.0
        %3125 = vmatprep.subr.mxu0 0.0
        %3126 = vmatpush1.msra.mxu0 0.0
        %3127 = vmatprep.subr.mxu0 0.0
        %3128 = vmatpush1.msra.mxu0 0.0
        %3129 = vmatprep.subr.mxu0 0.0
        %3130 = vmatpush1.msra.mxu0 0.0
        %3131 = vmatprep.subr.mxu0 0.0
        %3132 = vmatpush1.msra.mxu0 0.0
        %3133 = vmatprep.subr.mxu0 0.0
        %3134 = vmatpush1.msra.mxu0 0.0
        %3135 = vmatprep.subr.mxu0 0.0
        %3136 = vmatpush1.msra.mxu0 0.0
        %3137 = vmatprep.subr.mxu0 0.0
        %3138 = vmatpush1.msra.mxu0 0.0
        %3139 = vmatprep.subr.mxu0 0.0
        %3140 = vmatpush1.msra.mxu0 %v3105
        %3141 = vmatprep.subr.mxu0 0.0
        %3142 = vmatpush1.msra.mxu0 %v3103
        %3143 = vmatprep.subr.mxu0 0.0
        %3144 = vmatpush2.msra.mxu0 0.0
        %3145 = vmatprep.subr.mxu0 0.0
        %3146 = vmatpush2.msra.mxu0 0.0
        %3147 = vmatprep.subr.mxu0 0.0
        %3148 = vmatpush2.msra.mxu0 0.0
        %3149 = vmatprep.subr.mxu0 0.0
        %3150 = vmatpush2.msra.mxu0 0.0
        %3151 = vmatprep.subr.mxu0 0.0
        %3152 = vmatpush2.msra.mxu0 0.0
        %3153 = vmatprep.subr.mxu0 0.0
        %3154 = vmatpush2.msra.mxu0 0.0
        %3155 = vmatprep.subr.mxu0 0.0
        %3156 = vmatpush2.msra.mxu0 0.0
        %3157 = vmatprep.subr.mxu0 0.0
        %3158 = vmatpush2.msra.mxu0 0.0
        %3159 = vmatprep.subr.mxu0 0.0
        %3160 = vmatpush2.msra.mxu0 0.0
        %3161 = vmatprep.subr.mxu0 0.0
        %3162 = vmatpush2.msra.mxu0 0.0
        %3163 = vmatprep.subr.mxu0 0.0
        %3164 = vmatpush2.msra.mxu0 0.0
        %3165 = vmatprep.subr.mxu0 0.0
        %3166 = vmatpush2.msra.mxu0 0.0
        %3167 = vmatprep.subr.mxu0 0.0
        %3168 = vmatpush2.msra.mxu0 0.0
        %3169 = vmatprep.subr.mxu0 0.0
        %3170 = vmatpush2.msra.mxu0 0.0
        %3171 = vmatprep.subr.mxu0 0.0
        %3172 = vmatpush2.msra.mxu0 0.0
        %3173 = vmatprep.subr.mxu0 0.0
        %3174 = vmatpush2.msra.mxu0 0.0
        %3175 = vmatprep.mubr.f32.mxu0 0.0
        %3176 = vmatmul.mubr.f32.gmra.mxu0 %v3109
        %v3177 = vpop.f32.mrf.mxu0
        %v3178 = vadd.f32 0.0, %v3177
        %v3179 = vpop.f32.mrf.mxu0
        %3180 = vdwg.mxu0
        %v3182 = vsel %vm1092, %v3178, 0
        %3184 = vmatprep.subr.mxu0 0.0
        %3185 = vmatpush1.msra.mxu0 0.0
        %3186 = vmatprep.subr.mxu0 0.0
        %3187 = vmatpush1.msra.mxu0 0.0
        %3188 = vmatprep.subr.mxu0 0.0
        %3189 = vmatpush1.msra.mxu0 0.0
        %3190 = vmatprep.subr.mxu0 0.0
        %3191 = vmatpush1.msra.mxu0 0.0
        %3192 = vmatprep.subr.mxu0 0.0
        %3193 = vmatpush1.msra.mxu0 0.0
        %3194 = vmatprep.subr.mxu0 0.0
        %3195 = vmatpush1.msra.mxu0 0.0
        %3196 = vmatprep.subr.mxu0 0.0
        %3197 = vmatpush1.msra.mxu0 0.0
        %3198 = vmatprep.subr.mxu0 0.0
        %3199 = vmatpush1.msra.mxu0 0.0
        %3200 = vmatprep.subr.mxu0 0.0
        %3201 = vmatpush1.msra.mxu0 0.0
        %3202 = vmatprep.subr.mxu0 0.0
        %3203 = vmatpush1.msra.mxu0 0.0
        %3204 = vmatprep.subr.mxu0 0.0
        %3205 = vmatpush1.msra.mxu0 0.0
        %3206 = vmatprep.subr.mxu0 0.0
        %3207 = vmatpush1.msra.mxu0 0.0
        %3208 = vmatprep.subr.mxu0 0.0
        %3209 = vmatpush1.msra.mxu0 0.0
        %3210 = vmatprep.subr.mxu0 0.0
        %3211 = vmatpush1.msra.mxu0 0.0
        %3212 = vmatprep.subr.mxu0 0.0
        %3213 = vmatpush1.msra.mxu0 %v2271
        %3214 = vmatprep.subr.mxu0 0.0
        %3215 = vmatpush1.msra.mxu0 %v2270
        %3216 = vmatprep.subr.mxu0 0.0
        %3217 = vmatpush2.msra.mxu0 0.0
        %3218 = vmatprep.subr.mxu0 0.0
        %3219 = vmatpush2.msra.mxu0 0.0
        %3220 = vmatprep.subr.mxu0 0.0
        %3221 = vmatpush2.msra.mxu0 0.0
        %3222 = vmatprep.subr.mxu0 0.0
        %3223 = vmatpush2.msra.mxu0 0.0
        %3224 = vmatprep.subr.mxu0 0.0
        %3225 = vmatpush2.msra.mxu0 0.0
        %3226 = vmatprep.subr.mxu0 0.0
        %3227 = vmatpush2.msra.mxu0 0.0
        %3228 = vmatprep.subr.mxu0 0.0
        %3229 = vmatpush2.msra.mxu0 0.0
        %3230 = vmatprep.subr.mxu0 0.0
        %3231 = vmatpush2.msra.mxu0 0.0
        %3232 = vmatprep.subr.mxu0 0.0
        %3233 = vmatpush2.msra.mxu0 0.0
        %3234 = vmatprep.subr.mxu0 0.0
        %3235 = vmatpush2.msra.mxu0 0.0
        %3236 = vmatprep.subr.mxu0 0.0
        %3237 = vmatpush2.msra.mxu0 0.0
        %3238 = vmatprep.subr.mxu0 0.0
        %3239 = vmatpush2.msra.mxu0 0.0
        %3240 = vmatprep.subr.mxu0 0.0
        %3241 = vmatpush2.msra.mxu0 0.0
        %3242 = vmatprep.subr.mxu0 0.0
        %3243 = vmatpush2.msra.mxu0 0.0
        %3244 = vmatprep.subr.mxu0 0.0
        %3245 = vmatpush2.msra.mxu0 0.0
        %3246 = vmatprep.subr.mxu0 0.0
        %3247 = vmatpush2.msra.mxu0 0.0
        %3248 = vmatprep.mubr.f32.mxu0 0.0
        %3249 = vmatmul.mubr.f32.gmra.mxu0 %v3182
        %v3250 = vpop.f32.mrf.mxu0
        %v3251 = vadd.f32 0.0, %v3250
        %v3252 = vpop.f32.mrf.mxu0
        %3253 = vdwg.mxu0
        %v3254 = vadd.f32 %v3007, %v3251
        %v3255 = vadd.f32 %v2079, %v3254
        %v3256 = vlaneseq
        %v3257 = vshrl.u32 %v3256, 7
        %v3258 = vsub.s32 1, %v3257
        %v3259 = vrot.slane %v970, %v3258
        %v3260 = vadd.f32 %v3255, %v3259
        %v3261 = vsel %vm1000, %v3260, 0.0
        %3262 = vadd.xlane.f32.xlu0 %v3261
        %v3263 = vpop.xlane.xlu0 %3262
        %v3264 = vmul.f32 %v3263, %v2059
        %v3265 = vsub.f32 %v3260, %v3264
        %v3266 = vmul.f32 %v3265, %v3265
        %v3267 = vsel %vm1000, %v3266, 0.0
        %3268 = vadd.xlane.f32.xlu0 %v3267
        %v3269 = vpop.xlane.xlu0 %3268
        %v3270 = vmul.f32 %v3269, %v2059
        %v3271 = vadd.f32 %v3270, 1e-05
        %v3272 = vrsqrt.pop %v3271
        %v3273 = vmul.f32 %v3265, %v3272
        %v3274 = vlaneseq
        %v3275 = vshrl.u32 %v3274, 7
        %v3276 = vsub.s32 5, %v3275
        %v3277 = vrot.slane %v970, %v3276
        %v3278 = vmul.f32 %v3273, %v3277
        %v3279 = vlaneseq
        %v3280 = vshrl.u32 %v3279, 7
        %v3281 = vsub.s32 6, %v3280
        %v3282 = vrot.slane %v970, %v3281
        %v3283 = vadd.f32 %v3278, %v3282
        %v3284 = vld [vmem:[%s787] sm:$0xff]
        %v3285 = vld [vmem:[%s787 + $0x8] sm:$0xff]
        %v3286 = vld [vmem:[%s787 + $0x10] sm:$0xff]
        %v3287 = vld [vmem:[%s787 + $0x18] sm:$0xff]
        %v3288 = vld [vmem:[%s787 + $0x20] sm:$0xff]
        %v3289 = vld [vmem:[%s787 + $0x28] sm:$0xff]
        %v3290 = vld [vmem:[%s787 + $0x30] sm:$0xff]
        %v3291 = vld [vmem:[%s787 + $0x38] sm:$0xff]
        %v3292 = vld [vmem:[%s795] sm:$0x1]
        %v3294 = vlaneseq
        %v3295 = vshrl.u32 %v3294, 7
        %v3296 = vsub.s32 0, %v3295
        %v3297 = vrot.slane %v3292, %v3296
        %v3300 = vsel %vm1000, %v3283, 0
        %3302 = vmatprep.subr.mxu0 0.0
        %3303 = vmatpush1.msra.mxu0 0.0
        %3304 = vmatprep.subr.mxu0 0.0
        %3305 = vmatpush1.msra.mxu0 0.0
        %3306 = vmatprep.subr.mxu0 0.0
        %3307 = vmatpush1.msra.mxu0 0.0
        %3308 = vmatprep.subr.mxu0 0.0
        %3309 = vmatpush1.msra.mxu0 0.0
        %3310 = vmatprep.subr.mxu0 0.0
        %3311 = vmatpush1.msra.mxu0 0.0
        %3312 = vmatprep.subr.mxu0 0.0
        %3313 = vmatpush1.msra.mxu0 0.0
        %3314 = vmatprep.subr.mxu0 0.0
        %3315 = vmatpush1.msra.mxu0 0.0
        %3316 = vmatprep.subr.mxu0 0.0
        %3317 = vmatpush1.msra.mxu0 0.0
        %3318 = vmatprep.subr.mxu0 0.0
        %3319 = vmatpush1.msra.mxu0 %v3291
        %3320 = vmatprep.subr.mxu0 0.0
        %3321 = vmatpush1.msra.mxu0 %v3290
        %3322 = vmatprep.subr.mxu0 0.0
        %3323 = vmatpush1.msra.mxu0 %v3289
        %3324 = vmatprep.subr.mxu0 0.0
        %3325 = vmatpush1.msra.mxu0 %v3288
        %3326 = vmatprep.subr.mxu0 0.0
        %3327 = vmatpush1.msra.mxu0 %v3287
        %3328 = vmatprep.subr.mxu0 0.0
        %3329 = vmatpush1.msra.mxu0 %v3286
        %3330 = vmatprep.subr.mxu0 0.0
        %3331 = vmatpush1.msra.mxu0 %v3285
        %3332 = vmatprep.subr.mxu0 0.0
        %3333 = vmatpush1.msra.mxu0 %v3284
        %3334 = vmatprep.subr.mxu0 0.0
        %3335 = vmatpush2.msra.mxu0 0.0
        %3336 = vmatprep.subr.mxu0 0.0
        %3337 = vmatpush2.msra.mxu0 0.0
        %3338 = vmatprep.subr.mxu0 0.0
        %3339 = vmatpush2.msra.mxu0 0.0
        %3340 = vmatprep.subr.mxu0 0.0
        %3341 = vmatpush2.msra.mxu0 0.0
        %3342 = vmatprep.subr.mxu0 0.0
        %3343 = vmatpush2.msra.mxu0 0.0
        %3344 = vmatprep.subr.mxu0 0.0
        %3345 = vmatpush2.msra.mxu0 0.0
        %3346 = vmatprep.subr.mxu0 0.0
        %3347 = vmatpush2.msra.mxu0 0.0
        %3348 = vmatprep.subr.mxu0 0.0
        %3349 = vmatpush2.msra.mxu0 0.0
        %3350 = vmatprep.subr.mxu0 0.0
        %3351 = vmatpush2.msra.mxu0 0.0
        %3352 = vmatprep.subr.mxu0 0.0
        %3353 = vmatpush2.msra.mxu0 0.0
        %3354 = vmatprep.subr.mxu0 0.0
        %3355 = vmatpush2.msra.mxu0 0.0
        %3356 = vmatprep.subr.mxu0 0.0
        %3357 = vmatpush2.msra.mxu0 0.0
        %3358 = vmatprep.subr.mxu0 0.0
        %3359 = vmatpush2.msra.mxu0 0.0
        %3360 = vmatprep.subr.mxu0 0.0
        %3361 = vmatpush2.msra.mxu0 0.0
        %3362 = vmatprep.subr.mxu0 0.0
        %3363 = vmatpush2.msra.mxu0 0.0
        %3364 = vmatprep.subr.mxu0 0.0
        %3365 = vmatpush2.msra.mxu0 0.0
        %3366 = vmatprep.mubr.f32.mxu0 0.0
        %3367 = vmatmul.mubr.f32.gmra.mxu0 %v3300
        %v3368 = vpop.f32.mrf.mxu0
        %v3369 = vadd.f32 %v3297, %v3368
        %v3370 = vpop.f32.mrf.mxu0
        %3371 = vdwg.mxu0
        %v3372 = vmax.f32 %v3369, 0.0
        %v3373 = vld [vmem:[%s804] sm:$0xff]
        %v3374 = vld [vmem:[%s804 + $0x8] sm:$0xff]
        %v3375 = vld [vmem:[%s804 + $0x10] sm:$0xff]
        %v3376 = vld [vmem:[%s804 + $0x18] sm:$0xff]
        %v3377 = vld [vmem:[%s804 + $0x20] sm:$0xff]
        %v3378 = vld [vmem:[%s804 + $0x28] sm:$0xff]
        %v3379 = vld [vmem:[%s804 + $0x30] sm:$0xff]
        %v3380 = vld [vmem:[%s804 + $0x38] sm:$0xff]
        %v3382 = vsel %vm1000, %v3372, 0
        %3384 = vmatprep.subr.mxu0 0.0
        %3385 = vmatpush1.msra.mxu0 0.0
        %3386 = vmatprep.subr.mxu0 0.0
        %3387 = vmatpush1.msra.mxu0 0.0
        %3388 = vmatprep.subr.mxu0 0.0
        %3389 = vmatpush1.msra.mxu0 0.0
        %3390 = vmatprep.subr.mxu0 0.0
        %3391 = vmatpush1.msra.mxu0 0.0
        %3392 = vmatprep.subr.mxu0 0.0
        %3393 = vmatpush1.msra.mxu0 0.0
        %3394 = vmatprep.subr.mxu0 0.0
        %3395 = vmatpush1.msra.mxu0 0.0
        %3396 = vmatprep.subr.mxu0 0.0
        %3397 = vmatpush1.msra.mxu0 0.0
        %3398 = vmatprep.subr.mxu0 0.0
        %3399 = vmatpush1.msra.mxu0 0.0
        %3400 = vmatprep.subr.mxu0 0.0
        %3401 = vmatpush1.msra.mxu0 %v3380
        %3402 = vmatprep.subr.mxu0 0.0
        %3403 = vmatpush1.msra.mxu0 %v3379
        %3404 = vmatprep.subr.mxu0 0.0
        %3405 = vmatpush1.msra.mxu0 %v3378
        %3406 = vmatprep.subr.mxu0 0.0
        %3407 = vmatpush1.msra.mxu0 %v3377
        %3408 = vmatprep.subr.mxu0 0.0
        %3409 = vmatpush1.msra.mxu0 %v3376
        %3410 = vmatprep.subr.mxu0 0.0
        %3411 = vmatpush1.msra.mxu0 %v3375
        %3412 = vmatprep.subr.mxu0 0.0
        %3413 = vmatpush1.msra.mxu0 %v3374
        %3414 = vmatprep.subr.mxu0 0.0
        %3415 = vmatpush1.msra.mxu0 %v3373
        %3416 = vmatprep.subr.mxu0 0.0
        %3417 = vmatpush2.msra.mxu0 0.0
        %3418 = vmatprep.subr.mxu0 0.0
        %3419 = vmatpush2.msra.mxu0 0.0
        %3420 = vmatprep.subr.mxu0 0.0
        %3421 = vmatpush2.msra.mxu0 0.0
        %3422 = vmatprep.subr.mxu0 0.0
        %3423 = vmatpush2.msra.mxu0 0.0
        %3424 = vmatprep.subr.mxu0 0.0
        %3425 = vmatpush2.msra.mxu0 0.0
        %3426 = vmatprep.subr.mxu0 0.0
        %3427 = vmatpush2.msra.mxu0 0.0
        %3428 = vmatprep.subr.mxu0 0.0
        %3429 = vmatpush2.msra.mxu0 0.0
        %3430 = vmatprep.subr.mxu0 0.0
        %3431 = vmatpush2.msra.mxu0 0.0
        %3432 = vmatprep.subr.mxu0 0.0
        %3433 = vmatpush2.msra.mxu0 0.0
        %3434 = vmatprep.subr.mxu0 0.0
        %3435 = vmatpush2.msra.mxu0 0.0
        %3436 = vmatprep.subr.mxu0 0.0
        %3437 = vmatpush2.msra.mxu0 0.0
        %3438 = vmatprep.subr.mxu0 0.0
        %3439 = vmatpush2.msra.mxu0 0.0
        %3440 = vmatprep.subr.mxu0 0.0
        %3441 = vmatpush2.msra.mxu0 0.0
        %3442 = vmatprep.subr.mxu0 0.0
        %3443 = vmatpush2.msra.mxu0 0.0
        %3444 = vmatprep.subr.mxu0 0.0
        %3445 = vmatpush2.msra.mxu0 0.0
        %3446 = vmatprep.subr.mxu0 0.0
        %3447 = vmatpush2.msra.mxu0 0.0
        %3448 = vmatprep.mubr.f32.mxu0 0.0
        %3449 = vmatmul.mubr.f32.gmra.mxu0 %v3382
        %v3450 = vpop.f32.mrf.mxu0
        %v3451 = vadd.f32 0.0, %v3450
        %v3452 = vpop.f32.mrf.mxu0
        %3453 = vdwg.mxu0
        %v3454 = vadd.f32 %v3283, %v3451
        %v3455 = vlaneseq
        %v3456 = vshrl.u32 %v3455, 7
        %v3457 = vsub.s32 2, %v3456
        %v3458 = vrot.slane %v970, %v3457
        %v3459 = vadd.f32 %v3454, %v3458
        %v3460 = vsel %vm1000, %v3459, 0.0
        %3461 = vadd.xlane.f32.xlu0 %v3460
        %v3462 = vpop.xlane.xlu0 %3461
        %v3463 = vmul.f32 %v3462, %v2059
        %v3464 = vsub.f32 %v3459, %v3463
        %v3465 = vmul.f32 %v3464, %v3464
        %v3466 = vsel %vm1000, %v3465, 0.0
        %3467 = vadd.xlane.f32.xlu0 %v3466
        %v3468 = vpop.xlane.xlu0 %3467
        %v3469 = vmul.f32 %v3468, %v2059
        %v3470 = vadd.f32 %v3469, 1e-05
        %v3471 = vrsqrt.pop %v3470
        %v3472 = vmul.f32 %v3464, %v3471
        %v3473 = vlaneseq
        %v3474 = vshrl.u32 %v3473, 7
        %v3475 = vsub.s32 7, %v3474
        %v3476 = vrot.slane %v970, %v3475
        %v3477 = vmul.f32 %v3472, %v3476
        %v3478 = vlaneseq
        %v3479 = vshrl.u32 %v3478, 7
        %v3480 = vsub.s32 0, %v3479
        %v3481 = vrot.slane %v971, %v3480
        %v3482 = vadd.f32 %v3477, %v3481
        %3483 = vst.msk [vmem:[#allocation2] sm:$0xff] %vm1000, %v3482
        %p3484 = scmp.eq.s32.totalorder %s53, 1
        // Predicated region
        $region121: #{phoneme_decoder_forward.1} parent=87 // pred_check
          %p3485 = pneg %p3484
        $region122: #{phoneme_decoder_forward.1} parent=87 // pred_check_branch
          %3487 = sbr.rel (%p3485) target = $region124
        $region123: #{phoneme_decoder_forward.1} parent=87 // pred_region
          %3488 = vst.msk [vmem:[%s917] sm:$0xff] %vm1000, %v3482
          %v3489 = vld [vmem:[%s15] sm:$0xff]
          %v3490 = vld [vmem:[%s15 + $0x8] sm:$0xff]
          %v3491 = vld [vmem:[%s15 + $0x10] sm:$0xff]
          %v3492 = vld [vmem:[%s15 + $0x18] sm:$0xff]
          %v3493 = vld [vmem:[%s15 + $0x20] sm:$0xff]
          %v3494 = vld [vmem:[%s15 + $0x28] sm:$0xff]
          %v3495 = vld [vmem:[%s15 + $0x30] sm:$0xff]
          %v3496 = vld [vmem:[%s15 + $0x38] sm:$0xff]
          %v3497 = vld [vmem:[#allocation14] sm:$0x1]
          %v3499 = vlaneseq
          %v3500 = vshrl.u32 %v3499, 7
          %v3501 = vsub.s32 0, %v3500
          %v3502 = vrot.slane %v3497, %v3501
          %v3505 = vsel %vm1000, %v3482, 0
          %3507 = vmatprep.subr.mxu0 0.0
          %3508 = vmatpush1.msra.mxu0 0.0
          %3509 = vmatprep.subr.mxu0 0.0
          %3510 = vmatpush1.msra.mxu0 0.0
          %3511 = vmatprep.subr.mxu0 0.0
          %3512 = vmatpush1.msra.mxu0 0.0
          %3513 = vmatprep.subr.mxu0 0.0
          %3514 = vmatpush1.msra.mxu0 0.0
          %3515 = vmatprep.subr.mxu0 0.0
          %3516 = vmatpush1.msra.mxu0 0.0
          %3517 = vmatprep.subr.mxu0 0.0
          %3518 = vmatpush1.msra.mxu0 0.0
          %3519 = vmatprep.subr.mxu0 0.0
          %3520 = vmatpush1.msra.mxu0 0.0
          %3521 = vmatprep.subr.mxu0 0.0
          %3522 = vmatpush1.msra.mxu0 0.0
          %3523 = vmatprep.subr.mxu0 0.0
          %3524 = vmatpush1.msra.mxu0 %v3496
          %3525 = vmatprep.subr.mxu0 0.0
          %3526 = vmatpush1.msra.mxu0 %v3495
          %3527 = vmatprep.subr.mxu0 0.0
          %3528 = vmatpush1.msra.mxu0 %v3494
          %3529 = vmatprep.subr.mxu0 0.0
          %3530 = vmatpush1.msra.mxu0 %v3493
          %3531 = vmatprep.subr.mxu0 0.0
          %3532 = vmatpush1.msra.mxu0 %v3492
          %3533 = vmatprep.subr.mxu0 0.0
          %3534 = vmatpush1.msra.mxu0 %v3491
          %3535 = vmatprep.subr.mxu0 0.0
          %3536 = vmatpush1.msra.mxu0 %v3490
          %3537 = vmatprep.subr.mxu0 0.0
          %3538 = vmatpush1.msra.mxu0 %v3489
          %3539 = vmatprep.subr.mxu0 0.0
          %3540 = vmatpush2.msra.mxu0 0.0
          %3541 = vmatprep.subr.mxu0 0.0
          %3542 = vmatpush2.msra.mxu0 0.0
          %3543 = vmatprep.subr.mxu0 0.0
          %3544 = vmatpush2.msra.mxu0 0.0
          %3545 = vmatprep.subr.mxu0 0.0
          %3546 = vmatpush2.msra.mxu0 0.0
          %3547 = vmatprep.subr.mxu0 0.0
          %3548 = vmatpush2.msra.mxu0 0.0
          %3549 = vmatprep.subr.mxu0 0.0
          %3550 = vmatpush2.msra.mxu0 0.0
          %3551 = vmatprep.subr.mxu0 0.0
          %3552 = vmatpush2.msra.mxu0 0.0
          %3553 = vmatprep.subr.mxu0 0.0
          %3554 = vmatpush2.msra.mxu0 0.0
          %3555 = vmatprep.subr.mxu0 0.0
          %3556 = vmatpush2.msra.mxu0 0.0
          %3557 = vmatprep.subr.mxu0 0.0
          %3558 = vmatpush2.msra.mxu0 0.0
          %3559 = vmatprep.subr.mxu0 0.0
          %3560 = vmatpush2.msra.mxu0 0.0
          %3561 = vmatprep.subr.mxu0 0.0
          %3562 = vmatpush2.msra.mxu0 0.0
          %3563 = vmatprep.subr.mxu0 0.0
          %3564 = vmatpush2.msra.mxu0 0.0
          %3565 = vmatprep.subr.mxu0 0.0
          %3566 = vmatpush2.msra.mxu0 0.0
          %3567 = vmatprep.subr.mxu0 0.0
          %3568 = vmatpush2.msra.mxu0 0.0
          %3569 = vmatprep.subr.mxu0 0.0
          %3570 = vmatpush2.msra.mxu0 0.0
          %3571 = vmatprep.mubr.f32.mxu0 0.0
          %3572 = vmatmul.mubr.f32.gmra.mxu0 %v3505
          %v3573 = vpop.f32.mrf.mxu0
          %v3574 = vadd.f32 %v3502, %v3573
          %v3575 = vpop.f32.mrf.mxu0
          %3576 = vdwg.mxu0
          %3577 = vst [vmem:[%s924] sm:$0xff] %v3574
        $region124: #{phoneme_decoder_forward.1} parent=87 // pred_fallthru
          _
        %s3578 = sand.u32 %s495, 1
        %s3579 = scalar_lea.sflag [#allocation5], %s3578
        %s3580 = sand.u32 %s495, 1
        %s3581 = smul.addr %s3580, 8
        %s3582 = scalar_lea.vmem [#allocation15], %s3581
        %s3583 = sand.u32 %s521, 1
        %s3584 = scalar_lea.sflag [#allocation17], %s3583
        %s3585 = sand.u32 %s521, 1
        %s3586 = smul.addr %s3585, 8
        %s3587 = scalar_lea.vmem [#allocation16], %s3586
        // Predicated region
        $region125: #{phoneme_decoder_forward.1} parent=87 // pred_check
          %p3588 = pneg %p505
        $region126: #{phoneme_decoder_forward.1} parent=87 // pred_check_branch
          %3590 = sbr.rel (%p3588) target = $region128
        $region127: #{phoneme_decoder_forward.1} parent=87 // pred_region
          %s3592 = ssub.s32 128, 128
          %3593 = vsyncadd %s3579, %s3592
          %s3594 = smul.addr %s52, 128
          %s3595 = scalar_lea.hbm %s17, %s3594
          %s3597 = sshll.u32 %s3582, 4
          %s3598 = int_to_ptr.vmem [resolvable:$true] %s3597
          %3600 = dma.vmem_to_hbm [thread:$0]  %s3598, 128, %s3595, %s3579
        $region128: #{phoneme_decoder_forward.1} parent=87 // pred_fallthru
          _
        // Predicated region
        $region129: #{phoneme_decoder_forward.1} parent=87 // pred_check
          %p3601 = pneg %p531
        $region130: #{phoneme_decoder_forward.1} parent=87 // pred_check_branch
          %3603 = sbr.rel (%p3601) target = $region132
        $region131: #{phoneme_decoder_forward.1} parent=87 // pred_region
          %s3605 = ssub.s32 128, 128
          %3606 = vsyncadd %s3584, %s3605
          %s3607 = smul.addr %s52, 128
          %s3608 = scalar_lea.hbm %s18, %s3607
          %s3610 = sshll.u32 %s3587, 4
          %s3611 = int_to_ptr.vmem [resolvable:$true] %s3610
          %3613 = dma.vmem_to_hbm [thread:$0]  %s3611, 128, %s3608, %s3584
        $region132: #{phoneme_decoder_forward.1} parent=87 // pred_fallthru
          _
      $region88: #{phoneme_decoder_forward.1} parent=5 // pred_fallthru
        _
      %p3614 = scmp.le.s32.totalorder 2, %s43
      // Predicated region
      $region133: #{phoneme_decoder_forward.1} parent=5 // pred_check
        %p3615 = pneg %p3614
      $region134: #{phoneme_decoder_forward.1} parent=5 // pred_check_branch
        %3617 = sbr.rel (%p3615) target = $region136
      $region135: #{phoneme_decoder_forward.1} parent=5 // pred_region
        %s3618 = ssub.s32 %s43, 2
        // Predicated region
        $region137: #{phoneme_decoder_forward.1} parent=135 // pred_check
          %p3619 = pneg %p511
        $region138: #{phoneme_decoder_forward.1} parent=135 // pred_check_branch
          %3621 = sbr.rel (%p3619) target = $region140
        $region139: #{phoneme_decoder_forward.1} parent=135 // pred_region
          %s3622 = sand.u32 %s496, 1
          %s3623 = scalar_lea.sflag [#allocation5], %s3622
          %s3624 = sand.u32 %s496, 1
          %s3625 = smul.addr %s3624, 8
          %s3626 = scalar_lea.vmem [#allocation15], %s3625
          %3627 = dma.done %s3623, 128
        $region140: #{phoneme_decoder_forward.1} parent=135 // pred_fallthru
          _
        // Predicated region
        $region141: #{phoneme_decoder_forward.1} parent=135 // pred_check
          %p3628 = pneg %p537
        $region142: #{phoneme_decoder_forward.1} parent=135 // pred_check_branch
          %3630 = sbr.rel (%p3628) target = $region144
        $region143: #{phoneme_decoder_forward.1} parent=135 // pred_region
          %s3631 = sand.u32 %s522, 1
          %s3632 = scalar_lea.sflag [#allocation17], %s3631
          %s3633 = sand.u32 %s522, 1
          %s3634 = smul.addr %s3633, 8
          %s3635 = scalar_lea.vmem [#allocation16], %s3634
          %3636 = dma.done %s3632, 128
        $region144: #{phoneme_decoder_forward.1} parent=135 // pred_fallthru
          _
      $region136: #{phoneme_decoder_forward.1} parent=5 // pred_fallthru
        _
    $region6: #{phoneme_decoder_forward.1} parent=1 // loop_footer
      %s47 = sadd.s32 1, %s43
    $region7: #{phoneme_decoder_forward.1} parent=1 // loop_footer_branch
      %42 = sbr.rel target = $region3
    $region8: #{phoneme_decoder_forward.1} parent=1 // loop_exit
      _
    %3637 = vsyncpa [#allocation4], 1
    %s3638 = scalar_lea.sflag [#allocation4], 1
    %3639 = vsyncpa %s3638, 1
    %3640 = vsyncpa [#allocation7], 1
    %s3641 = scalar_lea.sflag [#allocation7], 1
    %3642 = vsyncpa %s3641, 1
    %3643 = vsyncpa [#allocation10], 1
    %s3644 = scalar_lea.sflag [#allocation10], 1
    %3645 = vsyncpa %s3644, 1
    %3646 = vsyncpa [#allocation13], 1
    %s3647 = scalar_lea.sflag [#allocation13], 1
    %3648 = vsyncpa %s3647, 1
    %3649 = vsyncpa [#allocation5], 1
    %s3650 = scalar_lea.sflag [#allocation5], 1
    %3651 = vsyncpa %s3650, 1
    %3652 = vsyncpa [#allocation17], 1
    %s3653 = scalar_lea.sflag [#allocation17], 1
    %3654 = vsyncpa %s3653, 1

</llo_original>
